<compile_context>
chip_gen: v5e
topology: v5e:2x2
jax: 0.10.0
libtpu: 0.0.40
codegen_flags: <defaults>
</compile_context>

<pallas_src>
import functools

import numpy as np
import jax
import jax.numpy as jnp
from jax.experimental import pallas as pl
from jax.experimental.pallas import tpu as pltpu

_VMEM = pl.BlockSpec(memory_space=pltpu.MemorySpace.VMEM)


# --------------------------- static conv planning ----------------------------
def _kept_taps(ksize, padding, dilation, H, W):
    """Taps (i, j) whose receptive window overlaps real (non-padding) data."""
    taps = []
    for i in range(ksize):
        for j in range(ksize):
            if (i * dilation < padding + H and i * dilation + H > padding and
                    j * dilation < padding + W and j * dilation + W > padding):
                taps.append((i, j))
    return taps


class _ConvPlan:
    """Trace-time description of one conv inside the fused tail kernel."""

    def __init__(self, N, H, W, cins, cout, ksize, padding, dilation):
        self.N, self.H, self.W = N, H, W
        self.cins = tuple(cins)
        self.cin = sum(cins)
        self.cout = cout
        self.ksize, self.padding, self.dilation = ksize, padding, dilation
        self.taps = _kept_taps(ksize, padding, dilation, H, W)
        # Collapses to a plain (M, Cin) @ (Cin, Cout) matmul when a single kept
        # tap reads exactly the un-padded input (true 1x1 convs, and the dilated
        # 3x3 branches once their all-zero taps are skipped).
        self.direct = (len(self.taps) == 1 and len(self.cins) == 1 and
                       self.taps[0][0] * dilation == padding and
                       self.taps[0][1] * dilation == padding)

    def scratch(self):
        if self.direct:
            return []
        return [
            pltpu.VMEM((self.N, self.H + 2 * self.padding,
                        self.W + 2 * self.padding, self.cin), jnp.float32),
            pltpu.VMEM((self.N * self.H * self.W,
                        len(self.taps) * self.cin), jnp.float32),
        ]

    def pack_w(self, w_full, scale):
        # w_full: (ksize*ksize, Cin, Cout); keep overlapping taps only and fold
        # the BatchNorm scale into the weights.
        idx = np.array([i * self.ksize + j for (i, j) in self.taps])
        w = w_full[idx] * scale[None, None, :]
        return w.reshape(len(self.taps) * self.cin, self.cout)


# ------------------- kernel 1: conv + BN + ReLU + maxpool --------------------
def _conv_pool_kernel(pT_ref, wT_ref, b_ref, o_ref, *, n_sub):
    """relu(maxpool2x2(conv(x))), im2col done by the caller.

    pT_ref : (n_sub, K, Mo) transposed im2col matrix per pooling sub-grid
    wT_ref : (Cout, K)      tap-concatenated, BN-folded weights (transposed)
    b_ref  : (Cout, 1)
    o_ref  : (Cout, Mo)     pooled output; positions live on the lane axis
    """
    acc = jnp.dot(wT_ref[...], pT_ref[0], preferred_element_type=jnp.float32)
    for k in range(1, n_sub):
        acc = jnp.maximum(
            acc,
            jnp.dot(wT_ref[...], pT_ref[k], preferred_element_type=jnp.float32))
    o_ref[...] = jnp.maximum(acc + b_ref[...], 0.0)


def conv_bn_relu_pool(x, params, *, ksize, padding, dilation, pool=2):
    """conv_block(act=True) followed by MaxPool2d(2,2), as one pallas_call."""
    w_full, scale, bias = params
    N, H, W, Cin = x.shape
    Cout = w_full.shape[-1]
    assert H + 2 * padding - dilation * (ksize - 1) == H   # "same" conv
    assert H % pool == 0 and W % pool == 0
    Hp, Wp = H // pool, W // pool
    Mo = N * Hp * Wp

    xp = jnp.pad(x, ((0, 0), (padding, padding), (padding, padding), (0, 0)))
    taps = _kept_taps(ksize, padding, dilation, H, W)
    subs = []
    for dh in range(pool):
        for dw in range(pool):
            cols = []
            for (i, j) in taps:
                v = xp[:, i * dilation + dh:i * dilation + dh + H:pool,
                       j * dilation + dw:j * dilation + dw + W:pool, :]
                cols.append(v.reshape(Mo, Cin))
            subs.append(jnp.concatenate(cols, axis=-1).T)      # (K, Mo)
    pT = jnp.stack(subs, axis=0)                               # (pool*pool, K, Mo)

    idx = np.array([i * ksize + j for (i, j) in taps])
    wT = (w_full[idx] * scale[None, None, :]).reshape(len(taps) * Cin, Cout).T

    out = pl.pallas_call(
        functools.partial(_conv_pool_kernel, n_sub=pool * pool),
        out_shape=jax.ShapeDtypeStruct((Cout, Mo), jnp.float32),
        in_specs=[_VMEM, _VMEM, _VMEM],
        out_specs=_VMEM,
    )(pT, wT, bias.reshape(Cout, 1))
    return out.T.reshape(N, Hp, Wp, Cout)                      # back to NHWC


# ------------- kernel 2: c4 + entire dilated_conv block (fused) --------------
def _make_tail_kernel(plans):
    pc4 = plans["c4"]
    branch_plans = [plans[k] for k in ("dc1", "dc2", "dc3", "dc4")]
    p5, p6 = plans["dc5"], plans["dc6"]
    N, H, W = pc4.N, pc4.H, pc4.W
    co = p6.cout

    def kernel(x_ref, f4_ref,
               wc4, bc4, wd1, bd1, wd2, bd2, wd3, bd3, wd4, bd4,
               wd5, bd5, wd6, bd6, o_ref, *scratch):
        it = iter(scratch)
        x4buf = next(it)            # (M, Cout)   c4 output (for ref row-slicing)
        xcat = next(it)             # (M, 4*Cout) concat of the dilated branches

        def run_conv(plan, src, w_ref, b_ref, relu):
            if plan.direct:
                y = jnp.dot(src, w_ref[...],
                            preferred_element_type=jnp.float32) + b_ref[...]
            else:
                pad_ref = next(it)
                pat_ref = next(it)
                p, d, cin = plan.padding, plan.dilation, plan.cin
                pad_ref[...] = jnp.zeros(pad_ref.shape, jnp.float32)
                c0 = 0
                for piece, ci in zip(src, plan.cins):
                    for n in range(N):
                        for h in range(H):
                            pad_ref[n, p + h, p:p + W, c0:c0 + ci] = piece(n, h)
                    c0 += ci
                for t, (i, j) in enumerate(plan.taps):
                    for n in range(N):
                        for h in range(H):
                            r = (n * H + h) * W
                            pat_ref[r:r + W, t * cin:(t + 1) * cin] = (
                                pad_ref[n, i * d + h, j * d:j * d + W, :])
                y = jnp.dot(pat_ref[...], w_ref[...],
                            preferred_element_type=jnp.float32) + b_ref[...]
            return jnp.maximum(y, 0.0) if relu else y

        # ---- c4: 3x3 conv on channel-concat([x, f4]) ----
        def x_piece(n, h):
            r = (n * H + h) * W
            return x_ref[r:r + W, :]

        def f4_piece(n, h):
            return f4_ref[n, h, :, :]

        x4 = run_conv(pc4, [x_piece, f4_piece], wc4, bc4, relu=True)
        x4buf[...] = x4

        def x4_piece(n, h):
            r = (n * H + h) * W
            return x4buf[r:r + W, :]

        # ---- dilated branches dc1..dc4 (zero-padding taps skipped statically) --
        branch_wb = [(wd1, bd1), (wd2, bd2), (wd3, bd3), (wd4, bd4)]
        for k, (plan, (w_ref, b_ref)) in enumerate(zip(branch_plans, branch_wb)):
            if plan.direct:
                xk = run_conv(plan, x4, w_ref, b_ref, relu=True)
            else:
                xk = run_conv(plan, [x4_piece], w_ref, b_ref, relu=True)
            xcat[:, k * co:(k + 1) * co] = xk

        # ---- dc5 on the branch concat, dc6 skip path, residual ReLU ----
        def cat_piece(n, h):
            r = (n * H + h) * W
            return xcat[r:r + W, :]

        xc = run_conv(p5, [cat_piece], wd5, bd5, relu=False)
        xs = run_conv(p6, x4, wd6, bd6, relu=False)
        o_ref[...] = jnp.maximum(xc + xs, 0.0)

    return kernel


def fused_c4_dilated(x, f4, params):
    """c4 (conv+BN+ReLU on concat([x, f4])) + the full dilated_conv block."""
    N, H, W, C = x.shape
    cf4 = f4.shape[-1]
    cout = params["c4"][0].shape[-1]

    plans = {
        "c4": _ConvPlan(N, H, W, (C, cf4), cout, 3, 1, 1),
        "dc1": _ConvPlan(N, H, W, (cout,), cout, 1, 0, 1),
        "dc2": _ConvPlan(N, H, W, (cout,), cout, 3, 6, 6),
        "dc3": _ConvPlan(N, H, W, (cout,), cout, 3, 12, 12),
        "dc4": _ConvPlan(N, H, W, (cout,), cout, 3, 18, 18),
        "dc5": _ConvPlan(N, H, W, (4 * cout,), cout, 3, 1, 1),
        "dc6": _ConvPlan(N, H, W, (cout,), cout, 1, 0, 1),
    }
    order = ("c4", "dc1", "dc2", "dc3", "dc4", "dc5", "dc6")

    args = [x.reshape(N * H * W, C), f4]
    for name in order:
        w_full, scale, bias = params[name]
        args.append(plans[name].pack_w(w_full, scale))
        args.append(bias.reshape(1, cout))

    scratch = [pltpu.VMEM((N * H * W, cout), jnp.float32),
               pltpu.VMEM((N * H * W, 4 * cout), jnp.float32)]
    for name in order:
        scratch += plans[name].scratch()

    out = pl.pallas_call(
        _make_tail_kernel(plans),
        out_shape=jax.ShapeDtypeStruct((N * H * W, cout), jnp.float32),
        in_specs=[_VMEM] * len(args),
        out_specs=_VMEM,
        scratch_shapes=scratch,
    )(*args)
    return out.reshape(N, H, W, cout)


# --------------------------- parameter construction --------------------------
def make_conv_bn_params(key, cin, cout, ksize):
    """Deterministic synthetic params for Conv2d(bias=True) + BatchNorm2d (eval)."""
    kh = kw = ksize
    k1, k2, k3, k4, k5, k6 = jax.random.split(key, 6)
    fan_in = cin * kh * kw
    # w[t, cin, cout] corresponds to torch Conv2d.weight[cout, cin, t//kw, t%kw]
    w = jax.random.normal(k1, (kh * kw, cin, cout), jnp.float32) / np.sqrt(fan_in)
    conv_b = 0.1 * jax.random.normal(k2, (cout,), jnp.float32)
    gamma = 1.0 + 0.1 * jax.random.normal(k3, (cout,), jnp.float32)
    beta = 0.1 * jax.random.normal(k4, (cout,), jnp.float32)
    rmean = 0.1 * jax.random.normal(k5, (cout,), jnp.float32)
    rvar = jnp.abs(1.0 + 0.1 * jax.random.normal(k6, (cout,), jnp.float32))
    scale = gamma / jnp.sqrt(rvar + 1e-5)
    bias = scale * (conv_b - rmean) + beta
    return w, scale, bias


def make_fedb_params(key, in_c, out_c):
    ks = jax.random.split(key, 10)
    p = {}
    p["c1"] = make_conv_bn_params(ks[0], in_c[0], out_c, 3)
    p["c2"] = make_conv_bn_params(ks[1], out_c + in_c[1], out_c, 3)
    p["c3"] = make_conv_bn_params(ks[2], out_c + in_c[2], out_c, 3)
    p["c4"] = make_conv_bn_params(ks[3], out_c + in_c[3], out_c, 3)
    p["dc1"] = make_conv_bn_params(ks[4], out_c, out_c, 1)
    p["dc2"] = make_conv_bn_params(ks[5], out_c, out_c, 3)
    p["dc3"] = make_conv_bn_params(ks[6], out_c, out_c, 3)
    p["dc4"] = make_conv_bn_params(ks[7], out_c, out_c, 3)
    p["dc5"] = make_conv_bn_params(ks[8], out_c * 4, out_c, 3)
    p["dc6"] = make_conv_bn_params(ks[9], out_c, out_c, 1)
    return p


# -------------------------------- forward pass -------------------------------
def feature_enhancement_dilated_block_apply(params, f1, f2, f3, f4):
    x = conv_bn_relu_pool(f1, params["c1"], ksize=3, padding=1, dilation=1)
    x = conv_bn_relu_pool(jnp.concatenate([x, f2], axis=-1), params["c2"],
                          ksize=3, padding=1, dilation=1)
    x = conv_bn_relu_pool(jnp.concatenate([x, f3], axis=-1), params["c3"],
                          ksize=3, padding=1, dilation=1)
    return fused_c4_dilated(x, f4, params)


# ------------------------- pure-XLA reference (check) ------------------------
def _conv_bn_ref(x, params, *, ksize, padding, dilation, relu):
    w_full, scale, bias = params
    cin, cout = w_full.shape[1], w_full.shape[2]
    w4d = w_full.reshape(ksize, ksize, cin, cout)
    y = jax.lax.conv_general_dilated(
        x, w4d, window_strides=(1, 1),
        padding=[(padding, padding), (padding, padding)],
        rhs_dilation=(dilation, dilation),
        dimension_numbers=("NHWC", "HWIO", "NHWC"),
        precision=jax.lax.Precision.HIGHEST)
    y = y * scale + bias
    return jnp.maximum(y, 0.0) if relu else y


def _pool_ref(x):
    return jnp.maximum(jnp.maximum(x[:, ::2, ::2, :], x[:, ::2, 1::2, :]),
                       jnp.maximum(x[:, 1::2, ::2, :], x[:, 1::2, 1::2, :]))


def forward_reference(params, f1, f2, f3, f4):
    cb = _conv_bn_ref
    x = _pool_ref(cb(f1, params["c1"], ksize=3, padding=1, dilation=1, relu=True))
    x = jnp.concatenate([x, f2], axis=-1)
    x = _pool_ref(cb(x, params["c2"], ksize=3, padding=1, dilation=1, relu=True))
    x = jnp.concatenate([x, f3], axis=-1)
    x = _pool_ref(cb(x, params["c3"], ksize=3, padding=1, dilation=1, relu=True))
    x = jnp.concatenate([x, f4], axis=-1)
    x = cb(x, params["c4"], ksize=3, padding=1, dilation=1, relu=True)
    x1 = cb(x, params["dc1"], ksize=1, padding=0, dilation=1, relu=True)
    x2 = cb(x, params["dc2"], ksize=3, padding=6, dilation=6, relu=True)
    x3 = cb(x, params["dc3"], ksize=3, padding=12, dilation=12, relu=True)
    x4 = cb(x, params["dc4"], ksize=3, padding=18, dilation=18, relu=True)
    xc = cb(jnp.concatenate([x1, x2, x3, x4], axis=-1), params["dc5"],
            ksize=3, padding=1, dilation=1, relu=False)
    xs = cb(x, params["dc6"], ksize=1, padding=0, dilation=1, relu=False)
    return jnp.maximum(xc + xs, 0.0)


# ------------------------------------ main ------------------------------------
if __name__ == "__main__":
    in_c = (4, 8, 8, 8)
    out_c = 8
    N, H, W = 2, 16, 16

    key = jax.random.PRNGKey(0)
    kp, k1, k2, k3, k4 = jax.random.split(key, 5)
    params = make_fedb_params(kp, in_c, out_c)

    # NHWC inputs (PyTorch NCHW equivalents: (2,4,16,16), (2,8,8,8), ...)
    f1 = jax.random.normal(k1, (N, H, W, in_c[0]), jnp.float32)
    f2 = jax.random.normal(k2, (N, H // 2, W // 2, in_c[1]), jnp.float32)
    f3 = jax.random.normal(k3, (N, H // 4, W // 4, in_c[2]), jnp.float32)
    f4 = jax.random.normal(k4, (N, H // 8, W // 8, in_c[3]), jnp.float32)

    fwd = jax.jit(feature_enhancement_dilated_block_apply)
    out = jax.block_until_ready(fwd(params, f1, f2, f3, f4))

    assert out.shape == (N, H // 8, W // 8, out_c), out.shape
    assert bool(jnp.all(jnp.isfinite(out)))

    ref = forward_reference(params, f1, f2, f3, f4)
    err = float(jnp.max(jnp.abs(out - ref)))
    assert err < 5e-2, f"mismatch vs XLA reference: max abs err = {err}"
    print("KERNEL_OK")
</pallas_src>

<mosaic_0001>
module attributes {stable_mosaic.version = 11 : i64} {
  func.func @_conv_pool_kernel(%arg0: memref<4x36x128xf32, #tpu.memory_space<vmem>>, %arg1: memref<8x36xf32, #tpu.memory_space<vmem>>, %arg2: memref<8x1xf32, #tpu.memory_space<vmem>>, %arg3: memref<8x128xf32, #tpu.memory_space<vmem>>) attributes {dimension_semantics = [], scalar_prefetch = 0 : i64, scratch_operands = 0 : i64, tpu.core_type = #tpu.core_type<tc>} {
    %c0 = arith.constant 0 : index
    %c0_0 = arith.constant 0 : index
    %0 = vector.load %arg1[%c0, %c0_0] : memref<8x36xf32, #tpu.memory_space<vmem>>, vector<8x36xf32>
    %c0_1 = arith.constant 0 : index
    %c0_2 = arith.constant 0 : index
    %c0_3 = arith.constant 0 : index
    %1 = vector.load %arg0[%c0_1, %c0_2, %c0_3] : memref<4x36x128xf32, #tpu.memory_space<vmem>>, vector<1x36x128xf32>
    %2 = vector.shape_cast %1 : vector<1x36x128xf32> to vector<36x128xf32>
    %cst = arith.constant dense<0.000000e+00> : vector<8x128xf32>
    %3 = tpu.matmul %0, %2, %cst {dimension_numbers = #tpu.dot_dimension_numbers<[1], [0], [0], [1], [0, 0, 1, 1], [], []>} : vector<8x36xf32>, vector<36x128xf32>, vector<8x128xf32> -> vector<8x128xf32>
    %c0_4 = arith.constant 0 : index
    %c0_5 = arith.constant 0 : index
    %4 = vector.load %arg1[%c0_4, %c0_5] : memref<8x36xf32, #tpu.memory_space<vmem>>, vector<8x36xf32>
    %c1 = arith.constant 1 : index
    %c0_6 = arith.constant 0 : index
    %c0_7 = arith.constant 0 : index
    %5 = vector.load %arg0[%c1, %c0_6, %c0_7] : memref<4x36x128xf32, #tpu.memory_space<vmem>>, vector<1x36x128xf32>
    %6 = vector.shape_cast %5 : vector<1x36x128xf32> to vector<36x128xf32>
    %cst_8 = arith.constant dense<0.000000e+00> : vector<8x128xf32>
    %7 = tpu.matmul %4, %6, %cst_8 {dimension_numbers = #tpu.dot_dimension_numbers<[1], [0], [0], [1], [0, 0, 1, 1], [], []>} : vector<8x36xf32>, vector<36x128xf32>, vector<8x128xf32> -> vector<8x128xf32>
    %8 = arith.maximumf %3, %7 : vector<8x128xf32>
    %c0_9 = arith.constant 0 : index
    %c0_10 = arith.constant 0 : index
    %9 = vector.load %arg1[%c0_9, %c0_10] : memref<8x36xf32, #tpu.memory_space<vmem>>, vector<8x36xf32>
    %c2 = arith.constant 2 : index
    %c0_11 = arith.constant 0 : index
    %c0_12 = arith.constant 0 : index
    %10 = vector.load %arg0[%c2, %c0_11, %c0_12] : memref<4x36x128xf32, #tpu.memory_space<vmem>>, vector<1x36x128xf32>
    %11 = vector.shape_cast %10 : vector<1x36x128xf32> to vector<36x128xf32>
    %cst_13 = arith.constant dense<0.000000e+00> : vector<8x128xf32>
    %12 = tpu.matmul %9, %11, %cst_13 {dimension_numbers = #tpu.dot_dimension_numbers<[1], [0], [0], [1], [0, 0, 1, 1], [], []>} : vector<8x36xf32>, vector<36x128xf32>, vector<8x128xf32> -> vector<8x128xf32>
    %13 = arith.maximumf %8, %12 : vector<8x128xf32>
    %c0_14 = arith.constant 0 : index
    %c0_15 = arith.constant 0 : index
    %14 = vector.load %arg1[%c0_14, %c0_15] : memref<8x36xf32, #tpu.memory_space<vmem>>, vector<8x36xf32>
    %c3 = arith.constant 3 : index
    %c0_16 = arith.constant 0 : index
    %c0_17 = arith.constant 0 : index
    %15 = vector.load %arg0[%c3, %c0_16, %c0_17] : memref<4x36x128xf32, #tpu.memory_space<vmem>>, vector<1x36x128xf32>
    %16 = vector.shape_cast %15 : vector<1x36x128xf32> to vector<36x128xf32>
    %cst_18 = arith.constant dense<0.000000e+00> : vector<8x128xf32>
    %17 = tpu.matmul %14, %16, %cst_18 {dimension_numbers = #tpu.dot_dimension_numbers<[1], [0], [0], [1], [0, 0, 1, 1], [], []>} : vector<8x36xf32>, vector<36x128xf32>, vector<8x128xf32> -> vector<8x128xf32>
    %18 = arith.maximumf %13, %17 : vector<8x128xf32>
    %c0_19 = arith.constant 0 : index
    %c0_20 = arith.constant 0 : index
    %19 = vector.load %arg2[%c0_19, %c0_20] : memref<8x1xf32, #tpu.memory_space<vmem>>, vector<8x1xf32>
    %20 = vector.broadcast %19 : vector<8x1xf32> to vector<8x128xf32>
    %21 = arith.addf %18, %20 : vector<8x128xf32>
    %cst_21 = arith.constant 0.000000e+00 : f32
    %22 = vector.broadcast %cst_21 : f32 to vector<8x128xf32>
    %23 = arith.maximumf %21, %22 : vector<8x128xf32>
    %c0_22 = arith.constant 0 : index
    %c0_23 = arith.constant 0 : index
    %24 = vector.load %arg3[%c0_22, %c0_23] : memref<8x128xf32, #tpu.memory_space<vmem>>, vector<8x128xf32>
    tpu.vector_store %arg3[%c0_22, %c0_23], %23 {strides = array<i32>} : memref<8x128xf32, #tpu.memory_space<vmem>>, vector<8x128xf32>,
    return
  }
}

module attributes {stable_mosaic.version = 11 : i64} {
  func.func @_conv_pool_kernel(%arg0: memref<4x144x32xf32, #tpu.memory_space<vmem>>, %arg1: memref<8x144xf32, #tpu.memory_space<vmem>>, %arg2: memref<8x1xf32, #tpu.memory_space<vmem>>, %arg3: memref<8x32xf32, #tpu.memory_space<vmem>>) attributes {dimension_semantics = [], scalar_prefetch = 0 : i64, scratch_operands = 0 : i64, tpu.core_type = #tpu.core_type<tc>} {
    %c0 = arith.constant 0 : index
    %c0_0 = arith.constant 0 : index
    %0 = vector.load %arg1[%c0, %c0_0] : memref<8x144xf32, #tpu.memory_space<vmem>>, vector<8x144xf32>
    %c0_1 = arith.constant 0 : index
    %c0_2 = arith.constant 0 : index
    %c0_3 = arith.constant 0 : index
    %1 = vector.load %arg0[%c0_1, %c0_2, %c0_3] : memref<4x144x32xf32, #tpu.memory_space<vmem>>, vector<1x144x32xf32>
    %2 = vector.shape_cast %1 : vector<1x144x32xf32> to vector<144x32xf32>
    %cst = arith.constant dense<0.000000e+00> : vector<8x32xf32>
    %3 = tpu.matmul %0, %2, %cst {dimension_numbers = #tpu.dot_dimension_numbers<[1], [0], [0], [1], [0, 0, 1, 1], [], []>} : vector<8x144xf32>, vector<144x32xf32>, vector<8x32xf32> -> vector<8x32xf32>
    %c0_4 = arith.constant 0 : index
    %c0_5 = arith.constant 0 : index
    %4 = vector.load %arg1[%c0_4, %c0_5] : memref<8x144xf32, #tpu.memory_space<vmem>>, vector<8x144xf32>
    %c1 = arith.constant 1 : index
    %c0_6 = arith.constant 0 : index
    %c0_7 = arith.constant 0 : index
    %5 = vector.load %arg0[%c1, %c0_6, %c0_7] : memref<4x144x32xf32, #tpu.memory_space<vmem>>, vector<1x144x32xf32>
    %6 = vector.shape_cast %5 : vector<1x144x32xf32> to vector<144x32xf32>
    %cst_8 = arith.constant dense<0.000000e+00> : vector<8x32xf32>
    %7 = tpu.matmul %4, %6, %cst_8 {dimension_numbers = #tpu.dot_dimension_numbers<[1], [0], [0], [1], [0, 0, 1, 1], [], []>} : vector<8x144xf32>, vector<144x32xf32>, vector<8x32xf32> -> vector<8x32xf32>
    %8 = arith.maximumf %3, %7 : vector<8x32xf32>
    %c0_9 = arith.constant 0 : index
    %c0_10 = arith.constant 0 : index
    %9 = vector.load %arg1[%c0_9, %c0_10] : memref<8x144xf32, #tpu.memory_space<vmem>>, vector<8x144xf32>
    %c2 = arith.constant 2 : index
    %c0_11 = arith.constant 0 : index
    %c0_12 = arith.constant 0 : index
    %10 = vector.load %arg0[%c2, %c0_11, %c0_12] : memref<4x144x32xf32, #tpu.memory_space<vmem>>, vector<1x144x32xf32>
    %11 = vector.shape_cast %10 : vector<1x144x32xf32> to vector<144x32xf32>
    %cst_13 = arith.constant dense<0.000000e+00> : vector<8x32xf32>
    %12 = tpu.matmul %9, %11, %cst_13 {dimension_numbers = #tpu.dot_dimension_numbers<[1], [0], [0], [1], [0, 0, 1, 1], [], []>} : vector<8x144xf32>, vector<144x32xf32>, vector<8x32xf32> -> vector<8x32xf32>
    %13 = arith.maximumf %8, %12 : vector<8x32xf32>
    %c0_14 = arith.constant 0 : index
    %c0_15 = arith.constant 0 : index
    %14 = vector.load %arg1[%c0_14, %c0_15] : memref<8x144xf32, #tpu.memory_space<vmem>>, vector<8x144xf32>
    %c3 = arith.constant 3 : index
    %c0_16 = arith.constant 0 : index
    %c0_17 = arith.constant 0 : index
    %15 = vector.load %arg0[%c3, %c0_16, %c0_17] : memref<4x144x32xf32, #tpu.memory_space<vmem>>, vector<1x144x32xf32>
    %16 = vector.shape_cast %15 : vector<1x144x32xf32> to vector<144x32xf32>
    %cst_18 = arith.constant dense<0.000000e+00> : vector<8x32xf32>
    %17 = tpu.matmul %14, %16, %cst_18 {dimension_numbers = #tpu.dot_dimension_numbers<[1], [0], [0], [1], [0, 0, 1, 1], [], []>} : vector<8x144xf32>, vector<144x32xf32>, vector<8x32xf32> -> vector<8x32xf32>
    %18 = arith.maximumf %13, %17 : vector<8x32xf32>
    %c0_19 = arith.constant 0 : index
    %c0_20 = arith.constant 0 : index
    %19 = vector.load %arg2[%c0_19, %c0_20] : memref<8x1xf32, #tpu.memory_space<vmem>>, vector<8x1xf32>
    %20 = vector.broadcast %19 : vector<8x1xf32> to vector<8x32xf32>
    %21 = arith.addf %18, %20 : vector<8x32xf32>
    %cst_21 = arith.constant 0.000000e+00 : f32
    %22 = vector.broadcast %cst_21 : f32 to vector<8x32xf32>
    %23 = arith.maximumf %21, %22 : vector<8x32xf32>
    %c0_22 = arith.constant 0 : index
    %c0_23 = arith.constant 0 : index
    %24 = vector.load %arg3[%c0_22, %c0_23] : memref<8x32xf32, #tpu.memory_space<vmem>>, vector<8x32xf32>
    tpu.vector_store %arg3[%c0_22, %c0_23], %23 {strides = array<i32>} : memref<8x32xf32, #tpu.memory_space<vmem>>, vector<8x32xf32>,
    return
  }
}

module attributes {stable_mosaic.version = 11 : i64} {
  func.func @_conv_pool_kernel(%arg0: memref<4x144x8xf32, #tpu.memory_space<vmem>>, %arg1: memref<8x144xf32, #tpu.memory_space<vmem>>, %arg2: memref<8x1xf32, #tpu.memory_space<vmem>>, %arg3: memref<8x8xf32, #tpu.memory_space<vmem>>) attributes {dimension_semantics = [], scalar_prefetch = 0 : i64, scratch_operands = 0 : i64, tpu.core_type = #tpu.core_type<tc>} {
    %c0 = arith.constant 0 : index
    %c0_0 = arith.constant 0 : index
    %0 = vector.load %arg1[%c0, %c0_0] : memref<8x144xf32, #tpu.memory_space<vmem>>, vector<8x144xf32>
    %c0_1 = arith.constant 0 : index
    %c0_2 = arith.constant 0 : index
    %c0_3 = arith.constant 0 : index
    %1 = vector.load %arg0[%c0_1, %c0_2, %c0_3] : memref<4x144x8xf32, #tpu.memory_space<vmem>>, vector<1x144x8xf32>
    %2 = vector.shape_cast %1 : vector<1x144x8xf32> to vector<144x8xf32>
    %cst = arith.constant dense<0.000000e+00> : vector<8x8xf32>
    %3 = tpu.matmul %0, %2, %cst {dimension_numbers = #tpu.dot_dimension_numbers<[1], [0], [0], [1], [0, 0, 1, 1], [], []>} : vector<8x144xf32>, vector<144x8xf32>, vector<8x8xf32> -> vector<8x8xf32>
    %c0_4 = arith.constant 0 : index
    %c0_5 = arith.constant 0 : index
    %4 = vector.load %arg1[%c0_4, %c0_5] : memref<8x144xf32, #tpu.memory_space<vmem>>, vector<8x144xf32>
    %c1 = arith.constant 1 : index
    %c0_6 = arith.constant 0 : index
    %c0_7 = arith.constant 0 : index
    %5 = vector.load %arg0[%c1, %c0_6, %c0_7] : memref<4x144x8xf32, #tpu.memory_space<vmem>>, vector<1x144x8xf32>
    %6 = vector.shape_cast %5 : vector<1x144x8xf32> to vector<144x8xf32>
    %cst_8 = arith.constant dense<0.000000e+00> : vector<8x8xf32>
    %7 = tpu.matmul %4, %6, %cst_8 {dimension_numbers = #tpu.dot_dimension_numbers<[1], [0], [0], [1], [0, 0, 1, 1], [], []>} : vector<8x144xf32>, vector<144x8xf32>, vector<8x8xf32> -> vector<8x8xf32>
    %8 = arith.maximumf %3, %7 : vector<8x8xf32>
    %c0_9 = arith.constant 0 : index
    %c0_10 = arith.constant 0 : index
    %9 = vector.load %arg1[%c0_9, %c0_10] : memref<8x144xf32, #tpu.memory_space<vmem>>, vector<8x144xf32>
    %c2 = arith.constant 2 : index
    %c0_11 = arith.constant 0 : index
    %c0_12 = arith.constant 0 : index
    %10 = vector.load %arg0[%c2, %c0_11, %c0_12] : memref<4x144x8xf32, #tpu.memory_space<vmem>>, vector<1x144x8xf32>
    %11 = vector.shape_cast %10 : vector<1x144x8xf32> to vector<144x8xf32>
    %cst_13 = arith.constant dense<0.000000e+00> : vector<8x8xf32>
    %12 = tpu.matmul %9, %11, %cst_13 {dimension_numbers = #tpu.dot_dimension_numbers<[1], [0], [0], [1], [0, 0, 1, 1], [], []>} : vector<8x144xf32>, vector<144x8xf32>, vector<8x8xf32> -> vector<8x8xf32>
    %13 = arith.maximumf %8, %12 : vector<8x8xf32>
    %c0_14 = arith.constant 0 : index
    %c0_15 = arith.constant 0 : index
    %14 = vector.load %arg1[%c0_14, %c0_15] : memref<8x144xf32, #tpu.memory_space<vmem>>, vector<8x144xf32>
    %c3 = arith.constant 3 : index
    %c0_16 = arith.constant 0 : index
    %c0_17 = arith.constant 0 : index
    %15 = vector.load %arg0[%c3, %c0_16, %c0_17] : memref<4x144x8xf32, #tpu.memory_space<vmem>>, vector<1x144x8xf32>
    %16 = vector.shape_cast %15 : vector<1x144x8xf32> to vector<144x8xf32>
    %cst_18 = arith.constant dense<0.000000e+00> : vector<8x8xf32>
    %17 = tpu.matmul %14, %16, %cst_18 {dimension_numbers = #tpu.dot_dimension_numbers<[1], [0], [0], [1], [0, 0, 1, 1], [], []>} : vector<8x144xf32>, vector<144x8xf32>, vector<8x8xf32> -> vector<8x8xf32>
    %18 = arith.maximumf %13, %17 : vector<8x8xf32>
    %c0_19 = arith.constant 0 : index
    %c0_20 = arith.constant 0 : index
    %19 = vector.load %arg2[%c0_19, %c0_20] : memref<8x1xf32, #tpu.memory_space<vmem>>, vector<8x1xf32>
    %20 = vector.broadcast %19 : vector<8x1xf32> to vector<8x8xf32>
    %21 = arith.addf %18, %20 : vector<8x8xf32>
    %cst_21 = arith.constant 0.000000e+00 : f32
    %22 = vector.broadcast %cst_21 : f32 to vector<8x8xf32>
    %23 = arith.maximumf %21, %22 : vector<8x8xf32>
    %c0_22 = arith.constant 0 : index
    %c0_23 = arith.constant 0 : index
    %24 = vector.load %arg3[%c0_22, %c0_23] : memref<8x8xf32, #tpu.memory_space<vmem>>, vector<8x8xf32>
    tpu.vector_store %arg3[%c0_22, %c0_23], %23 {strides = array<i32>} : memref<8x8xf32, #tpu.memory_space<vmem>>, vector<8x8xf32>,
    return
  }
}

module attributes {stable_mosaic.version = 11 : i64} {
  func.func @kernel(%arg0: memref<8x8xf32, #tpu.memory_space<vmem>>, %arg1: memref<2x2x2x8xf32, #tpu.memory_space<vmem>>, %arg2: memref<144x8xf32, #tpu.memory_space<vmem>>, %arg3: memref<1x8xf32, #tpu.memory_space<vmem>>, %arg4: memref<8x8xf32, #tpu.memory_space<vmem>>, %arg5: memref<1x8xf32, #tpu.memory_space<vmem>>, %arg6: memref<8x8xf32, #tpu.memory_space<vmem>>, %arg7: memref<1x8xf32, #tpu.memory_space<vmem>>, %arg8: memref<8x8xf32, #tpu.memory_space<vmem>>, %arg9: memref<1x8xf32, #tpu.memory_space<vmem>>, %arg10: memref<8x8xf32, #tpu.memory_space<vmem>>, %arg11: memref<1x8xf32, #tpu.memory_space<vmem>>, %arg12: memref<288x8xf32, #tpu.memory_space<vmem>>, %arg13: memref<1x8xf32, #tpu.memory_space<vmem>>, %arg14: memref<8x8xf32, #tpu.memory_space<vmem>>, %arg15: memref<1x8xf32, #tpu.memory_space<vmem>>, %arg16: memref<8x8xf32, #tpu.memory_space<vmem>>, %arg17: memref<8x8xf32, #tpu.memory_space<vmem>>, %arg18: memref<8x32xf32, #tpu.memory_space<vmem>>, %arg19: memref<2x4x4x16xf32, #tpu.memory_space<vmem>>, %arg20: memref<8x144xf32, #tpu.memory_space<vmem>>, %arg21: memref<2x4x4x32xf32, #tpu.memory_space<vmem>>, %arg22: memref<8x288xf32, #tpu.memory_space<vmem>>) attributes {dimension_semantics = [], scalar_prefetch = 0 : i64, scratch_operands = 6 : i64, tpu.core_type = #tpu.core_type<tc>} {
    %cst = arith.constant 0.000000e+00 : f32
    %0 = vector.broadcast %cst : f32 to vector<2x4x4x16xf32>
    %c0 = arith.constant 0 : index
    %c0_0 = arith.constant 0 : index
    %c0_1 = arith.constant 0 : index
    %c0_2 = arith.constant 0 : index
    %1 = vector.load %arg19[%c0, %c0_0, %c0_1, %c0_2] : memref<2x4x4x16xf32, #tpu.memory_space<vmem>>, vector<2x4x4x16xf32>
    tpu.vector_store %arg19[%c0, %c0_0, %c0_1, %c0_2], %0 {strides = array<i32>} : memref<2x4x4x16xf32, #tpu.memory_space<vmem>>, vector<2x4x4x16xf32>,
    %c0_3 = arith.constant 0 : index
    %c0_4 = arith.constant 0 : index
    %2 = vector.load %arg0[%c0_3, %c0_4] : memref<8x8xf32, #tpu.memory_space<vmem>>, vector<2x8xf32>
    %c0_5 = arith.constant 0 : index
    %c1 = arith.constant 1 : index
    %c1_6 = arith.constant 1 : index
    %c0_7 = arith.constant 0 : index
    %3 = vector.load %arg19[%c0_5, %c1, %c1_6, %c0_7] : memref<2x4x4x16xf32, #tpu.memory_space<vmem>>, vector<1x1x2x8xf32>
    %4 = vector.shape_cast %3 : vector<1x1x2x8xf32> to vector<2x8xf32>
    %5 = vector.shape_cast %2 : vector<2x8xf32> to vector<1x1x2x8xf32>
    tpu.vector_store %arg19[%c0_5, %c1, %c1_6, %c0_7], %5 {strides = array<i32>} : memref<2x4x4x16xf32, #tpu.memory_space<vmem>>, vector<1x1x2x8xf32>,
    %c2 = arith.constant 2 : index
    %c0_8 = arith.constant 0 : index
    %6 = vector.load %arg0[%c2, %c0_8] : memref<8x8xf32, #tpu.memory_space<vmem>>, vector<2x8xf32>
    %c0_9 = arith.constant 0 : index
    %c2_10 = arith.constant 2 : index
    %c1_11 = arith.constant 1 : index
    %c0_12 = arith.constant 0 : index
    %7 = vector.load %arg19[%c0_9, %c2_10, %c1_11, %c0_12] : memref<2x4x4x16xf32, #tpu.memory_space<vmem>>, vector<1x1x2x8xf32>
    %8 = vector.shape_cast %7 : vector<1x1x2x8xf32> to vector<2x8xf32>
    %9 = vector.shape_cast %6 : vector<2x8xf32> to vector<1x1x2x8xf32>
    tpu.vector_store %arg19[%c0_9, %c2_10, %c1_11, %c0_12], %9 {strides = array<i32>} : memref<2x4x4x16xf32, #tpu.memory_space<vmem>>, vector<1x1x2x8xf32>,
    %c4 = arith.constant 4 : index
    %c0_13 = arith.constant 0 : index
    %10 = vector.load %arg0[%c4, %c0_13] : memref<8x8xf32, #tpu.memory_space<vmem>>, vector<2x8xf32>
    %c1_14 = arith.constant 1 : index
    %c1_15 = arith.constant 1 : index
    %c1_16 = arith.constant 1 : index
    %c0_17 = arith.constant 0 : index
    %11 = vector.load %arg19[%c1_14, %c1_15, %c1_16, %c0_17] : memref<2x4x4x16xf32, #tpu.memory_space<vmem>>, vector<1x1x2x8xf32>
    %12 = vector.shape_cast %11 : vector<1x1x2x8xf32> to vector<2x8xf32>
    %13 = vector.shape_cast %10 : vector<2x8xf32> to vector<1x1x2x8xf32>
    tpu.vector_store %arg19[%c1_14, %c1_15, %c1_16, %c0_17], %13 {strides = array<i32>} : memref<2x4x4x16xf32, #tpu.memory_space<vmem>>, vector<1x1x2x8xf32>,
    %c6 = arith.constant 6 : index
    %c0_18 = arith.constant 0 : index
    %14 = vector.load %arg0[%c6, %c0_18] : memref<8x8xf32, #tpu.memory_space<vmem>>, vector<2x8xf32>
    %c1_19 = arith.constant 1 : index
    %c2_20 = arith.constant 2 : index
    %c1_21 = arith.constant 1 : index
    %c0_22 = arith.constant 0 : index
    %15 = vector.load %arg19[%c1_19, %c2_20, %c1_21, %c0_22] : memref<2x4x4x16xf32, #tpu.memory_space<vmem>>, vector<1x1x2x8xf32>
    %16 = vector.shape_cast %15 : vector<1x1x2x8xf32> to vector<2x8xf32>
    %17 = vector.shape_cast %14 : vector<2x8xf32> to vector<1x1x2x8xf32>
    tpu.vector_store %arg19[%c1_19, %c2_20, %c1_21, %c0_22], %17 {strides = array<i32>} : memref<2x4x4x16xf32, #tpu.memory_space<vmem>>, vector<1x1x2x8xf32>,
    %c0_23 = arith.constant 0 : index
    %c0_24 = arith.constant 0 : index
    %c0_25 = arith.constant 0 : index
    %c0_26 = arith.constant 0 : index
    %18 = vector.load %arg1[%c0_23, %c0_24, %c0_25, %c0_26] : memref<2x2x2x8xf32, #tpu.memory_space<vmem>>, vector<1x1x2x8xf32>
    %19 = vector.shape_cast %18 : vector<1x1x2x8xf32> to vector<2x8xf32>
    %c0_27 = arith.constant 0 : index
    %c1_28 = arith.constant 1 : index
    %c1_29 = arith.constant 1 : index
    %c8 = arith.constant 8 : index
    %20 = vector.load %arg19[%c0_27, %c1_28, %c1_29, %c8] : memref<2x4x4x16xf32, #tpu.memory_space<vmem>>, vector<1x1x2x8xf32>
    %21 = vector.shape_cast %20 : vector<1x1x2x8xf32> to vector<2x8xf32>
    %22 = vector.shape_cast %19 : vector<2x8xf32> to vector<1x1x2x8xf32>
    tpu.vector_store %arg19[%c0_27, %c1_28, %c1_29, %c8], %22 {strides = array<i32>} : memref<2x4x4x16xf32, #tpu.memory_space<vmem>>, vector<1x1x2x8xf32>,
    %c0_30 = arith.constant 0 : index
    %c1_31 = arith.constant 1 : index
    %c0_32 = arith.constant 0 : index
    %c0_33 = arith.constant 0 : index
    %23 = vector.load %arg1[%c0_30, %c1_31, %c0_32, %c0_33] : memref<2x2x2x8xf32, #tpu.memory_space<vmem>>, vector<1x1x2x8xf32>
    %24 = vector.shape_cast %23 : vector<1x1x2x8xf32> to vector<2x8xf32>
    %c0_34 = arith.constant 0 : index
    %c2_35 = arith.constant 2 : index
    %c1_36 = arith.constant 1 : index
    %c8_37 = arith.constant 8 : index
    %25 = vector.load %arg19[%c0_34, %c2_35, %c1_36, %c8_37] : memref<2x4x4x16xf32, #tpu.memory_space<vmem>>, vector<1x1x2x8xf32>
    %26 = vector.shape_cast %25 : vector<1x1x2x8xf32> to vector<2x8xf32>
    %27 = vector.shape_cast %24 : vector<2x8xf32> to vector<1x1x2x8xf32>
    tpu.vector_store %arg19[%c0_34, %c2_35, %c1_36, %c8_37], %27 {strides = array<i32>} : memref<2x4x4x16xf32, #tpu.memory_space<vmem>>, vector<1x1x2x8xf32>,
    %c1_38 = arith.constant 1 : index
    %c0_39 = arith.constant 0 : index
    %c0_40 = arith.constant 0 : index
    %c0_41 = arith.constant 0 : index
    %28 = vector.load %arg1[%c1_38, %c0_39, %c0_40, %c0_41] : memref<2x2x2x8xf32, #tpu.memory_space<vmem>>, vector<1x1x2x8xf32>
    %29 = vector.shape_cast %28 : vector<1x1x2x8xf32> to vector<2x8xf32>
    %c1_42 = arith.constant 1 : index
    %c1_43 = arith.constant 1 : index
    %c1_44 = arith.constant 1 : index
    %c8_45 = arith.constant 8 : index
    %30 = vector.load %arg19[%c1_42, %c1_43, %c1_44, %c8_45] : memref<2x4x4x16xf32, #tpu.memory_space<vmem>>, vector<1x1x2x8xf32>
    %31 = vector.shape_cast %30 : vector<1x1x2x8xf32> to vector<2x8xf32>
    %32 = vector.shape_cast %29 : vector<2x8xf32> to vector<1x1x2x8xf32>
    tpu.vector_store %arg19[%c1_42, %c1_43, %c1_44, %c8_45], %32 {strides = array<i32>} : memref<2x4x4x16xf32, #tpu.memory_space<vmem>>, vector<1x1x2x8xf32>,
    %c1_46 = arith.constant 1 : index
    %c1_47 = arith.constant 1 : index
    %c0_48 = arith.constant 0 : index
    %c0_49 = arith.constant 0 : index
    %33 = vector.load %arg1[%c1_46, %c1_47, %c0_48, %c0_49] : memref<2x2x2x8xf32, #tpu.memory_space<vmem>>, vector<1x1x2x8xf32>
    %34 = vector.shape_cast %33 : vector<1x1x2x8xf32> to vector<2x8xf32>
    %c1_50 = arith.constant 1 : index
    %c2_51 = arith.constant 2 : index
    %c1_52 = arith.constant 1 : index
    %c8_53 = arith.constant 8 : index
    %35 = vector.load %arg19[%c1_50, %c2_51, %c1_52, %c8_53] : memref<2x4x4x16xf32, #tpu.memory_space<vmem>>, vector<1x1x2x8xf32>
    %36 = vector.shape_cast %35 : vector<1x1x2x8xf32> to vector<2x8xf32>
    %37 = vector.shape_cast %34 : vector<2x8xf32> to vector<1x1x2x8xf32>
    tpu.vector_store %arg19[%c1_50, %c2_51, %c1_52, %c8_53], %37 {strides = array<i32>} : memref<2x4x4x16xf32, #tpu.memory_space<vmem>>, vector<1x1x2x8xf32>,
    %c0_54 = arith.constant 0 : index
    %c0_55 = arith.constant 0 : index
    %c0_56 = arith.constant 0 : index
    %c0_57 = arith.constant 0 : index
    %38 = vector.load %arg19[%c0_54, %c0_55, %c0_56, %c0_57] : memref<2x4x4x16xf32, #tpu.memory_space<vmem>>, vector<1x1x2x16xf32>
    %39 = vector.shape_cast %38 : vector<1x1x2x16xf32> to vector<2x16xf32>
    %c0_58 = arith.constant 0 : index
    %c0_59 = arith.constant 0 : index
    %40 = vector.load %arg20[%c0_58, %c0_59] : memref<8x144xf32, #tpu.memory_space<vmem>>, vector<2x16xf32>
    tpu.vector_store %arg20[%c0_58, %c0_59], %39 {strides = array<i32>} : memref<8x144xf32, #tpu.memory_space<vmem>>, vector<2x16xf32>,
    %c0_60 = arith.constant 0 : index
    %c1_61 = arith.constant 1 : index
    %c0_62 = arith.constant 0 : index
    %c0_63 = arith.constant 0 : index
    %41 = vector.load %arg19[%c0_60, %c1_61, %c0_62, %c0_63] : memref<2x4x4x16xf32, #tpu.memory_space<vmem>>, vector<1x1x2x16xf32>
    %42 = vector.shape_cast %41 : vector<1x1x2x16xf32> to vector<2x16xf32>
    %c2_64 = arith.constant 2 : index
    %c0_65 = arith.constant 0 : index
    %43 = vector.load %arg20[%c2_64, %c0_65] : memref<8x144xf32, #tpu.memory_space<vmem>>, vector<2x16xf32>
    tpu.vector_store %arg20[%c2_64, %c0_65], %42 {strides = array<i32>} : memref<8x144xf32, #tpu.memory_space<vmem>>, vector<2x16xf32>,
    %c1_66 = arith.constant 1 : index
    %c0_67 = arith.constant 0 : index
    %c0_68 = arith.constant 0 : index
    %c0_69 = arith.constant 0 : index
    %44 = vector.load %arg19[%c1_66, %c0_67, %c0_68, %c0_69] : memref<2x4x4x16xf32, #tpu.memory_space<vmem>>, vector<1x1x2x16xf32>
    %45 = vector.shape_cast %44 : vector<1x1x2x16xf32> to vector<2x16xf32>
    %c4_70 = arith.constant 4 : index
    %c0_71 = arith.constant 0 : index
    %46 = vector.load %arg20[%c4_70, %c0_71] : memref<8x144xf32, #tpu.memory_space<vmem>>, vector<2x16xf32>
    tpu.vector_store %arg20[%c4_70, %c0_71], %45 {strides = array<i32>} : memref<8x144xf32, #tpu.memory_space<vmem>>, vector<2x16xf32>,
    %c1_72 = arith.constant 1 : index
    %c1_73 = arith.constant 1 : index
    %c0_74 = arith.constant 0 : index
    %c0_75 = arith.constant 0 : index
    %47 = vector.load %arg19[%c1_72, %c1_73, %c0_74, %c0_75] : memref<2x4x4x16xf32, #tpu.memory_space<vmem>>, vector<1x1x2x16xf32>
    %48 = vector.shape_cast %47 : vector<1x1x2x16xf32> to vector<2x16xf32>
    %c6_76 = arith.constant 6 : index
    %c0_77 = arith.constant 0 : index
    %49 = vector.load %arg20[%c6_76, %c0_77] : memref<8x144xf32, #tpu.memory_space<vmem>>, vector<2x16xf32>
    tpu.vector_store %arg20[%c6_76, %c0_77], %48 {strides = array<i32>} : memref<8x144xf32, #tpu.memory_space<vmem>>, vector<2x16xf32>,
    %c0_78 = arith.constant 0 : index
    %c0_79 = arith.constant 0 : index
    %c1_80 = arith.constant 1 : index
    %c0_81 = arith.constant 0 : index
    %50 = vector.load %arg19[%c0_78, %c0_79, %c1_80, %c0_81] : memref<2x4x4x16xf32, #tpu.memory_space<vmem>>, vector<1x1x2x16xf32>
    %51 = vector.shape_cast %50 : vector<1x1x2x16xf32> to vector<2x16xf32>
    %c0_82 = arith.constant 0 : index
    %c16 = arith.constant 16 : index
    %52 = vector.load %arg20[%c0_82, %c16] : memref<8x144xf32, #tpu.memory_space<vmem>>, vector<2x16xf32>
    tpu.vector_store %arg20[%c0_82, %c16], %51 {strides = array<i32>} : memref<8x144xf32, #tpu.memory_space<vmem>>, vector<2x16xf32>,
    %c0_83 = arith.constant 0 : index
    %c1_84 = arith.constant 1 : index
    %c1_85 = arith.constant 1 : index
    %c0_86 = arith.constant 0 : index
    %53 = vector.load %arg19[%c0_83, %c1_84, %c1_85, %c0_86] : memref<2x4x4x16xf32, #tpu.memory_space<vmem>>, vector<1x1x2x16xf32>
    %54 = vector.shape_cast %53 : vector<1x1x2x16xf32> to vector<2x16xf32>
    %c2_87 = arith.constant 2 : index
    %c16_88 = arith.constant 16 : index
    %55 = vector.load %arg20[%c2_87, %c16_88] : memref<8x144xf32, #tpu.memory_space<vmem>>, vector<2x16xf32>
    tpu.vector_store %arg20[%c2_87, %c16_88], %54 {strides = array<i32>} : memref<8x144xf32, #tpu.memory_space<vmem>>, vector<2x16xf32>,
    %c1_89 = arith.constant 1 : index
    %c0_90 = arith.constant 0 : index
    %c1_91 = arith.constant 1 : index
    %c0_92 = arith.constant 0 : index
    %56 = vector.load %arg19[%c1_89, %c0_90, %c1_91, %c0_92] : memref<2x4x4x16xf32, #tpu.memory_space<vmem>>, vector<1x1x2x16xf32>
    %57 = vector.shape_cast %56 : vector<1x1x2x16xf32> to vector<2x16xf32>
    %c4_93 = arith.constant 4 : index
    %c16_94 = arith.constant 16 : index
    %58 = vector.load %arg20[%c4_93, %c16_94] : memref<8x144xf32, #tpu.memory_space<vmem>>, vector<2x16xf32>
    tpu.vector_store %arg20[%c4_93, %c16_94], %57 {strides = array<i32>} : memref<8x144xf32, #tpu.memory_space<vmem>>, vector<2x16xf32>,
    %c1_95 = arith.constant 1 : index
    %c1_96 = arith.constant 1 : index
    %c1_97 = arith.constant 1 : index
    %c0_98 = arith.constant 0 : index
    %59 = vector.load %arg19[%c1_95, %c1_96, %c1_97, %c0_98] : memref<2x4x4x16xf32, #tpu.memory_space<vmem>>, vector<1x1x2x16xf32>
    %60 = vector.shape_cast %59 : vector<1x1x2x16xf32> to vector<2x16xf32>
    %c6_99 = arith.constant 6 : index
    %c16_100 = arith.constant 16 : index
    %61 = vector.load %arg20[%c6_99, %c16_100] : memref<8x144xf32, #tpu.memory_space<vmem>>, vector<2x16xf32>
    tpu.vector_store %arg20[%c6_99, %c16_100], %60 {strides = array<i32>} : memref<8x144xf32, #tpu.memory_space<vmem>>, vector<2x16xf32>,
    %c0_101 = arith.constant 0 : index
    %c0_102 = arith.constant 0 : index
    %c2_103 = arith.constant 2 : index
    %c0_104 = arith.constant 0 : index
    %62 = vector.load %arg19[%c0_101, %c0_102, %c2_103, %c0_104] : memref<2x4x4x16xf32, #tpu.memory_space<vmem>>, vector<1x1x2x16xf32>
    %63 = vector.shape_cast %62 : vector<1x1x2x16xf32> to vector<2x16xf32>
    %c0_105 = arith.constant 0 : index
    %c32 = arith.constant 32 : index
    %64 = vector.load %arg20[%c0_105, %c32] : memref<8x144xf32, #tpu.memory_space<vmem>>, vector<2x16xf32>
    tpu.vector_store %arg20[%c0_105, %c32], %63 {strides = array<i32>} : memref<8x144xf32, #tpu.memory_space<vmem>>, vector<2x16xf32>,
    %c0_106 = arith.constant 0 : index
    %c1_107 = arith.constant 1 : index
    %c2_108 = arith.constant 2 : index
    %c0_109 = arith.constant 0 : index
    %65 = vector.load %arg19[%c0_106, %c1_107, %c2_108, %c0_109] : memref<2x4x4x16xf32, #tpu.memory_space<vmem>>, vector<1x1x2x16xf32>
    %66 = vector.shape_cast %65 : vector<1x1x2x16xf32> to vector<2x16xf32>
    %c2_110 = arith.constant 2 : index
    %c32_111 = arith.constant 32 : index
    %67 = vector.load %arg20[%c2_110, %c32_111] : memref<8x144xf32, #tpu.memory_space<vmem>>, vector<2x16xf32>
    tpu.vector_store %arg20[%c2_110, %c32_111], %66 {strides = array<i32>} : memref<8x144xf32, #tpu.memory_space<vmem>>, vector<2x16xf32>,
    %c1_112 = arith.constant 1 : index
    %c0_113 = arith.constant 0 : index
    %c2_114 = arith.constant 2 : index
    %c0_115 = arith.constant 0 : index
    %68 = vector.load %arg19[%c1_112, %c0_113, %c2_114, %c0_115] : memref<2x4x4x16xf32, #tpu.memory_space<vmem>>, vector<1x1x2x16xf32>
    %69 = vector.shape_cast %68 : vector<1x1x2x16xf32> to vector<2x16xf32>
    %c4_116 = arith.constant 4 : index
    %c32_117 = arith.constant 32 : index
    %70 = vector.load %arg20[%c4_116, %c32_117] : memref<8x144xf32, #tpu.memory_space<vmem>>, vector<2x16xf32>
    tpu.vector_store %arg20[%c4_116, %c32_117], %69 {strides = array<i32>} : memref<8x144xf32, #tpu.memory_space<vmem>>, vector<2x16xf32>,
    %c1_118 = arith.constant 1 : index
    %c1_119 = arith.constant 1 : index
    %c2_120 = arith.constant 2 : index
    %c0_121 = arith.constant 0 : index
    %71 = vector.load %arg19[%c1_118, %c1_119, %c2_120, %c0_121] : memref<2x4x4x16xf32, #tpu.memory_space<vmem>>, vector<1x1x2x16xf32>
    %72 = vector.shape_cast %71 : vector<1x1x2x16xf32> to vector<2x16xf32>
    %c6_122 = arith.constant 6 : index
    %c32_123 = arith.constant 32 : index
    %73 = vector.load %arg20[%c6_122, %c32_123] : memref<8x144xf32, #tpu.memory_space<vmem>>, vector<2x16xf32>
    tpu.vector_store %arg20[%c6_122, %c32_123], %72 {strides = array<i32>} : memref<8x144xf32, #tpu.memory_space<vmem>>, vector<2x16xf32>,
    %c0_124 = arith.constant 0 : index
    %c1_125 = arith.constant 1 : index
    %c0_126 = arith.constant 0 : index
    %c0_127 = arith.constant 0 : index
    %74 = vector.load %arg19[%c0_124, %c1_125, %c0_126, %c0_127] : memref<2x4x4x16xf32, #tpu.memory_space<vmem>>, vector<1x1x2x16xf32>
    %75 = vector.shape_cast %74 : vector<1x1x2x16xf32> to vector<2x16xf32>
    %c0_128 = arith.constant 0 : index
    %c48 = arith.constant 48 : index
    %76 = vector.load %arg20[%c0_128, %c48] : memref<8x144xf32, #tpu.memory_space<vmem>>, vector<2x16xf32>
    tpu.vector_store %arg20[%c0_128, %c48], %75 {strides = array<i32>} : memref<8x144xf32, #tpu.memory_space<vmem>>, vector<2x16xf32>,
    %c0_129 = arith.constant 0 : index
    %c2_130 = arith.constant 2 : index
    %c0_131 = arith.constant 0 : index
    %c0_132 = arith.constant 0 : index
    %77 = vector.load %arg19[%c0_129, %c2_130, %c0_131, %c0_132] : memref<2x4x4x16xf32, #tpu.memory_space<vmem>>, vector<1x1x2x16xf32>
    %78 = vector.shape_cast %77 : vector<1x1x2x16xf32> to vector<2x16xf32>
    %c2_133 = arith.constant 2 : index
    %c48_134 = arith.constant 48 : index
    %79 = vector.load %arg20[%c2_133, %c48_134] : memref<8x144xf32, #tpu.memory_space<vmem>>, vector<2x16xf32>
    tpu.vector_store %arg20[%c2_133, %c48_134], %78 {strides = array<i32>} : memref<8x144xf32, #tpu.memory_space<vmem>>, vector<2x16xf32>,
    %c1_135 = arith.constant 1 : index
    %c1_136 = arith.constant 1 : index
    %c0_137 = arith.constant 0 : index
    %c0_138 = arith.constant 0 : index
    %80 = vector.load %arg19[%c1_135, %c1_136, %c0_137, %c0_138] : memref<2x4x4x16xf32, #tpu.memory_space<vmem>>, vector<1x1x2x16xf32>
    %81 = vector.shape_cast %80 : vector<1x1x2x16xf32> to vector<2x16xf32>
    %c4_139 = arith.constant 4 : index
    %c48_140 = arith.constant 48 : index
    %82 = vector.load %arg20[%c4_139, %c48_140] : memref<8x144xf32, #tpu.memory_space<vmem>>, vector<2x16xf32>
    tpu.vector_store %arg20[%c4_139, %c48_140], %81 {strides = array<i32>} : memref<8x144xf32, #tpu.memory_space<vmem>>, vector<2x16xf32>,
    %c1_141 = arith.constant 1 : index
    %c2_142 = arith.constant 2 : index
    %c0_143 = arith.constant 0 : index
    %c0_144 = arith.constant 0 : index
    %83 = vector.load %arg19[%c1_141, %c2_142, %c0_143, %c0_144] : memref<2x4x4x16xf32, #tpu.memory_space<vmem>>, vector<1x1x2x16xf32>
    %84 = vector.shape_cast %83 : vector<1x1x2x16xf32> to vector<2x16xf32>
    %c6_145 = arith.constant 6 : index
    %c48_146 = arith.constant 48 : index
    %85 = vector.load %arg20[%c6_145, %c48_146] : memref<8x144xf32, #tpu.memory_space<vmem>>, vector<2x16xf32>
    tpu.vector_store %arg20[%c6_145, %c48_146], %84 {strides = array<i32>} : memref<8x144xf32, #tpu.memory_space<vmem>>, vector<2x16xf32>,
    %c0_147 = arith.constant 0 : index
    %c1_148 = arith.constant 1 : index
    %c1_149 = arith.constant 1 : index
    %c0_150 = arith.constant 0 : index
    %86 = vector.load %arg19[%c0_147, %c1_148, %c1_149, %c0_150] : memref<2x4x4x16xf32, #tpu.memory_space<vmem>>, vector<1x1x2x16xf32>
    %87 = vector.shape_cast %86 : vector<1x1x2x16xf32> to vector<2x16xf32>
    %c0_151 = arith.constant 0 : index
    %c64 = arith.constant 64 : index
    %88 = vector.load %arg20[%c0_151, %c64] : memref<8x144xf32, #tpu.memory_space<vmem>>, vector<2x16xf32>
    tpu.vector_store %arg20[%c0_151, %c64], %87 {strides = array<i32>} : memref<8x144xf32, #tpu.memory_space<vmem>>, vector<2x16xf32>,
    %c0_152 = arith.constant 0 : index
    %c2_153 = arith.constant 2 : index
    %c1_154 = arith.constant 1 : index
    %c0_155 = arith.constant 0 : index
    %89 = vector.load %arg19[%c0_152, %c2_153, %c1_154, %c0_155] : memref<2x4x4x16xf32, #tpu.memory_space<vmem>>, vector<1x1x2x16xf32>
    %90 = vector.shape_cast %89 : vector<1x1x2x16xf32> to vector<2x16xf32>
    %c2_156 = arith.constant 2 : index
    %c64_157 = arith.constant 64 : index
    %91 = vector.load %arg20[%c2_156, %c64_157] : memref<8x144xf32, #tpu.memory_space<vmem>>, vector<2x16xf32>
    tpu.vector_store %arg20[%c2_156, %c64_157], %90 {strides = array<i32>} : memref<8x144xf32, #tpu.memory_space<vmem>>, vector<2x16xf32>,
    %c1_158 = arith.constant 1 : index
    %c1_159 = arith.constant 1 : index
    %c1_160 = arith.constant 1 : index
    %c0_161 = arith.constant 0 : index
    %92 = vector.load %arg19[%c1_158, %c1_159, %c1_160, %c0_161] : memref<2x4x4x16xf32, #tpu.memory_space<vmem>>, vector<1x1x2x16xf32>
    %93 = vector.shape_cast %92 : vector<1x1x2x16xf32> to vector<2x16xf32>
    %c4_162 = arith.constant 4 : index
    %c64_163 = arith.constant 64 : index
    %94 = vector.load %arg20[%c4_162, %c64_163] : memref<8x144xf32, #tpu.memory_space<vmem>>, vector<2x16xf32>
    tpu.vector_store %arg20[%c4_162, %c64_163], %93 {strides = array<i32>} : memref<8x144xf32, #tpu.memory_space<vmem>>, vector<2x16xf32>,
    %c1_164 = arith.constant 1 : index
    %c2_165 = arith.constant 2 : index
    %c1_166 = arith.constant 1 : index
    %c0_167 = arith.constant 0 : index
    %95 = vector.load %arg19[%c1_164, %c2_165, %c1_166, %c0_167] : memref<2x4x4x16xf32, #tpu.memory_space<vmem>>, vector<1x1x2x16xf32>
    %96 = vector.shape_cast %95 : vector<1x1x2x16xf32> to vector<2x16xf32>
    %c6_168 = arith.constant 6 : index
    %c64_169 = arith.constant 64 : index
    %97 = vector.load %arg20[%c6_168, %c64_169] : memref<8x144xf32, #tpu.memory_space<vmem>>, vector<2x16xf32>
    tpu.vector_store %arg20[%c6_168, %c64_169], %96 {strides = array<i32>} : memref<8x144xf32, #tpu.memory_space<vmem>>, vector<2x16xf32>,
    %c0_170 = arith.constant 0 : index
    %c1_171 = arith.constant 1 : index
    %c2_172 = arith.constant 2 : index
    %c0_173 = arith.constant 0 : index
    %98 = vector.load %arg19[%c0_170, %c1_171, %c2_172, %c0_173] : memref<2x4x4x16xf32, #tpu.memory_space<vmem>>, vector<1x1x2x16xf32>
    %99 = vector.shape_cast %98 : vector<1x1x2x16xf32> to vector<2x16xf32>
    %c0_174 = arith.constant 0 : index
    %c80 = arith.constant 80 : index
    %100 = vector.load %arg20[%c0_174, %c80] : memref<8x144xf32, #tpu.memory_space<vmem>>, vector<2x16xf32>
    tpu.vector_store %arg20[%c0_174, %c80], %99 {strides = array<i32>} : memref<8x144xf32, #tpu.memory_space<vmem>>, vector<2x16xf32>,
    %c0_175 = arith.constant 0 : index
    %c2_176 = arith.constant 2 : index
    %c2_177 = arith.constant 2 : index
    %c0_178 = arith.constant 0 : index
    %101 = vector.load %arg19[%c0_175, %c2_176, %c2_177, %c0_178] : memref<2x4x4x16xf32, #tpu.memory_space<vmem>>, vector<1x1x2x16xf32>
    %102 = vector.shape_cast %101 : vector<1x1x2x16xf32> to vector<2x16xf32>
    %c2_179 = arith.constant 2 : index
    %c80_180 = arith.constant 80 : index
    %103 = vector.load %arg20[%c2_179, %c80_180] : memref<8x144xf32, #tpu.memory_space<vmem>>, vector<2x16xf32>
    tpu.vector_store %arg20[%c2_179, %c80_180], %102 {strides = array<i32>} : memref<8x144xf32, #tpu.memory_space<vmem>>, vector<2x16xf32>,
    %c1_181 = arith.constant 1 : index
    %c1_182 = arith.constant 1 : index
    %c2_183 = arith.constant 2 : index
    %c0_184 = arith.constant 0 : index
    %104 = vector.load %arg19[%c1_181, %c1_182, %c2_183, %c0_184] : memref<2x4x4x16xf32, #tpu.memory_space<vmem>>, vector<1x1x2x16xf32>
    %105 = vector.shape_cast %104 : vector<1x1x2x16xf32> to vector<2x16xf32>
    %c4_185 = arith.constant 4 : index
    %c80_186 = arith.constant 80 : index
    %106 = vector.load %arg20[%c4_185, %c80_186] : memref<8x144xf32, #tpu.memory_space<vmem>>, vector<2x16xf32>
    tpu.vector_store %arg20[%c4_185, %c80_186], %105 {strides = array<i32>} : memref<8x144xf32, #tpu.memory_space<vmem>>, vector<2x16xf32>,
    %c1_187 = arith.constant 1 : index
    %c2_188 = arith.constant 2 : index
    %c2_189 = arith.constant 2 : index
    %c0_190 = arith.constant 0 : index
    %107 = vector.load %arg19[%c1_187, %c2_188, %c2_189, %c0_190] : memref<2x4x4x16xf32, #tpu.memory_space<vmem>>, vector<1x1x2x16xf32>
    %108 = vector.shape_cast %107 : vector<1x1x2x16xf32> to vector<2x16xf32>
    %c6_191 = arith.constant 6 : index
    %c80_192 = arith.constant 80 : index
    %109 = vector.load %arg20[%c6_191, %c80_192] : memref<8x144xf32, #tpu.memory_space<vmem>>, vector<2x16xf32>
    tpu.vector_store %arg20[%c6_191, %c80_192], %108 {strides = array<i32>} : memref<8x144xf32, #tpu.memory_space<vmem>>, vector<2x16xf32>,
    %c0_193 = arith.constant 0 : index
    %c2_194 = arith.constant 2 : index
    %c0_195 = arith.constant 0 : index
    %c0_196 = arith.constant 0 : index
    %110 = vector.load %arg19[%c0_193, %c2_194, %c0_195, %c0_196] : memref<2x4x4x16xf32, #tpu.memory_space<vmem>>, vector<1x1x2x16xf32>
    %111 = vector.shape_cast %110 : vector<1x1x2x16xf32> to vector<2x16xf32>
    %c0_197 = arith.constant 0 : index
    %c96 = arith.constant 96 : index
    %112 = vector.load %arg20[%c0_197, %c96] : memref<8x144xf32, #tpu.memory_space<vmem>>, vector<2x16xf32>
    tpu.vector_store %arg20[%c0_197, %c96], %111 {strides = array<i32>} : memref<8x144xf32, #tpu.memory_space<vmem>>, vector<2x16xf32>,
    %c0_198 = arith.constant 0 : index
    %c3 = arith.constant 3 : index
    %c0_199 = arith.constant 0 : index
    %c0_200 = arith.constant 0 : index
    %113 = vector.load %arg19[%c0_198, %c3, %c0_199, %c0_200] : memref<2x4x4x16xf32, #tpu.memory_space<vmem>>, vector<1x1x2x16xf32>
    %114 = vector.shape_cast %113 : vector<1x1x2x16xf32> to vector<2x16xf32>
    %c2_201 = arith.constant 2 : index
    %c96_202 = arith.constant 96 : index
    %115 = vector.load %arg20[%c2_201, %c96_202] : memref<8x144xf32, #tpu.memory_space<vmem>>, vector<2x16xf32>
    tpu.vector_store %arg20[%c2_201, %c96_202], %114 {strides = array<i32>} : memref<8x144xf32, #tpu.memory_space<vmem>>, vector<2x16xf32>,
    %c1_203 = arith.constant 1 : index
    %c2_204 = arith.constant 2 : index
    %c0_205 = arith.constant 0 : index
    %c0_206 = arith.constant 0 : index
    %116 = vector.load %arg19[%c1_203, %c2_204, %c0_205, %c0_206] : memref<2x4x4x16xf32, #tpu.memory_space<vmem>>, vector<1x1x2x16xf32>
    %117 = vector.shape_cast %116 : vector<1x1x2x16xf32> to vector<2x16xf32>
    %c4_207 = arith.constant 4 : index
    %c96_208 = arith.constant 96 : index
    %118 = vector.load %arg20[%c4_207, %c96_208] : memref<8x144xf32, #tpu.memory_space<vmem>>, vector<2x16xf32>
    tpu.vector_store %arg20[%c4_207, %c96_208], %117 {strides = array<i32>} : memref<8x144xf32, #tpu.memory_space<vmem>>, vector<2x16xf32>,
    %c1_209 = arith.constant 1 : index
    %c3_210 = arith.constant 3 : index
    %c0_211 = arith.constant 0 : index
    %c0_212 = arith.constant 0 : index
    %119 = vector.load %arg19[%c1_209, %c3_210, %c0_211, %c0_212] : memref<2x4x4x16xf32, #tpu.memory_space<vmem>>, vector<1x1x2x16xf32>
    %120 = vector.shape_cast %119 : vector<1x1x2x16xf32> to vector<2x16xf32>
    %c6_213 = arith.constant 6 : index
    %c96_214 = arith.constant 96 : index
    %121 = vector.load %arg20[%c6_213, %c96_214] : memref<8x144xf32, #tpu.memory_space<vmem>>, vector<2x16xf32>
    tpu.vector_store %arg20[%c6_213, %c96_214], %120 {strides = array<i32>} : memref<8x144xf32, #tpu.memory_space<vmem>>, vector<2x16xf32>,
    %c0_215 = arith.constant 0 : index
    %c2_216 = arith.constant 2 : index
    %c1_217 = arith.constant 1 : index
    %c0_218 = arith.constant 0 : index
    %122 = vector.load %arg19[%c0_215, %c2_216, %c1_217, %c0_218] : memref<2x4x4x16xf32, #tpu.memory_space<vmem>>, vector<1x1x2x16xf32>
    %123 = vector.shape_cast %122 : vector<1x1x2x16xf32> to vector<2x16xf32>
    %c0_219 = arith.constant 0 : index
    %c112 = arith.constant 112 : index
    %124 = vector.load %arg20[%c0_219, %c112] : memref<8x144xf32, #tpu.memory_space<vmem>>, vector<2x16xf32>
    tpu.vector_store %arg20[%c0_219, %c112], %123 {strides = array<i32>} : memref<8x144xf32, #tpu.memory_space<vmem>>, vector<2x16xf32>,
    %c0_220 = arith.constant 0 : index
    %c3_221 = arith.constant 3 : index
    %c1_222 = arith.constant 1 : index
    %c0_223 = arith.constant 0 : index
    %125 = vector.load %arg19[%c0_220, %c3_221, %c1_222, %c0_223] : memref<2x4x4x16xf32, #tpu.memory_space<vmem>>, vector<1x1x2x16xf32>
    %126 = vector.shape_cast %125 : vector<1x1x2x16xf32> to vector<2x16xf32>
    %c2_224 = arith.constant 2 : index
    %c112_225 = arith.constant 112 : index
    %127 = vector.load %arg20[%c2_224, %c112_225] : memref<8x144xf32, #tpu.memory_space<vmem>>, vector<2x16xf32>
    tpu.vector_store %arg20[%c2_224, %c112_225], %126 {strides = array<i32>} : memref<8x144xf32, #tpu.memory_space<vmem>>, vector<2x16xf32>,
    %c1_226 = arith.constant 1 : index
    %c2_227 = arith.constant 2 : index
    %c1_228 = arith.constant 1 : index
    %c0_229 = arith.constant 0 : index
    %128 = vector.load %arg19[%c1_226, %c2_227, %c1_228, %c0_229] : memref<2x4x4x16xf32, #tpu.memory_space<vmem>>, vector<1x1x2x16xf32>
    %129 = vector.shape_cast %128 : vector<1x1x2x16xf32> to vector<2x16xf32>
    %c4_230 = arith.constant 4 : index
    %c112_231 = arith.constant 112 : index
    %130 = vector.load %arg20[%c4_230, %c112_231] : memref<8x144xf32, #tpu.memory_space<vmem>>, vector<2x16xf32>
    tpu.vector_store %arg20[%c4_230, %c112_231], %129 {strides = array<i32>} : memref<8x144xf32, #tpu.memory_space<vmem>>, vector<2x16xf32>,
    %c1_232 = arith.constant 1 : index
    %c3_233 = arith.constant 3 : index
    %c1_234 = arith.constant 1 : index
    %c0_235 = arith.constant 0 : index
    %131 = vector.load %arg19[%c1_232, %c3_233, %c1_234, %c0_235] : memref<2x4x4x16xf32, #tpu.memory_space<vmem>>, vector<1x1x2x16xf32>
    %132 = vector.shape_cast %131 : vector<1x1x2x16xf32> to vector<2x16xf32>
    %c6_236 = arith.constant 6 : index
    %c112_237 = arith.constant 112 : index
    %133 = vector.load %arg20[%c6_236, %c112_237] : memref<8x144xf32, #tpu.memory_space<vmem>>, vector<2x16xf32>
    tpu.vector_store %arg20[%c6_236, %c112_237], %132 {strides = array<i32>} : memref<8x144xf32, #tpu.memory_space<vmem>>, vector<2x16xf32>,
    %c0_238 = arith.constant 0 : index
    %c2_239 = arith.constant 2 : index
    %c2_240 = arith.constant 2 : index
    %c0_241 = arith.constant 0 : index
    %134 = vector.load %arg19[%c0_238, %c2_239, %c2_240, %c0_241] : memref<2x4x4x16xf32, #tpu.memory_space<vmem>>, vector<1x1x2x16xf32>
    %135 = vector.shape_cast %134 : vector<1x1x2x16xf32> to vector<2x16xf32>
    %c0_242 = arith.constant 0 : index
    %c128 = arith.constant 128 : index
    %136 = vector.load %arg20[%c0_242, %c128] : memref<8x144xf32, #tpu.memory_space<vmem>>, vector<2x16xf32>
    tpu.vector_store %arg20[%c0_242, %c128], %135 {strides = array<i32>} : memref<8x144xf32, #tpu.memory_space<vmem>>, vector<2x16xf32>,
    %c0_243 = arith.constant 0 : index
    %c3_244 = arith.constant 3 : index
    %c2_245 = arith.constant 2 : index
    %c0_246 = arith.constant 0 : index
    %137 = vector.load %arg19[%c0_243, %c3_244, %c2_245, %c0_246] : memref<2x4x4x16xf32, #tpu.memory_space<vmem>>, vector<1x1x2x16xf32>
    %138 = vector.shape_cast %137 : vector<1x1x2x16xf32> to vector<2x16xf32>
    %c2_247 = arith.constant 2 : index
    %c128_248 = arith.constant 128 : index
    %139 = vector.load %arg20[%c2_247, %c128_248] : memref<8x144xf32, #tpu.memory_space<vmem>>, vector<2x16xf32>
    tpu.vector_store %arg20[%c2_247, %c128_248], %138 {strides = array<i32>} : memref<8x144xf32, #tpu.memory_space<vmem>>, vector<2x16xf32>,
    %c1_249 = arith.constant 1 : index
    %c2_250 = arith.constant 2 : index
    %c2_251 = arith.constant 2 : index
    %c0_252 = arith.constant 0 : index
    %140 = vector.load %arg19[%c1_249, %c2_250, %c2_251, %c0_252] : memref<2x4x4x16xf32, #tpu.memory_space<vmem>>, vector<1x1x2x16xf32>
    %141 = vector.shape_cast %140 : vector<1x1x2x16xf32> to vector<2x16xf32>
    %c4_253 = arith.constant 4 : index
    %c128_254 = arith.constant 128 : index
    %142 = vector.load %arg20[%c4_253, %c128_254] : memref<8x144xf32, #tpu.memory_space<vmem>>, vector<2x16xf32>
    tpu.vector_store %arg20[%c4_253, %c128_254], %141 {strides = array<i32>} : memref<8x144xf32, #tpu.memory_space<vmem>>, vector<2x16xf32>,
    %c1_255 = arith.constant 1 : index
    %c3_256 = arith.constant 3 : index
    %c2_257 = arith.constant 2 : index
    %c0_258 = arith.constant 0 : index
    %143 = vector.load %arg19[%c1_255, %c3_256, %c2_257, %c0_258] : memref<2x4x4x16xf32, #tpu.memory_space<vmem>>, vector<1x1x2x16xf32>
    %144 = vector.shape_cast %143 : vector<1x1x2x16xf32> to vector<2x16xf32>
    %c6_259 = arith.constant 6 : index
    %c128_260 = arith.constant 128 : index
    %145 = vector.load %arg20[%c6_259, %c128_260] : memref<8x144xf32, #tpu.memory_space<vmem>>, vector<2x16xf32>
    tpu.vector_store %arg20[%c6_259, %c128_260], %144 {strides = array<i32>} : memref<8x144xf32, #tpu.memory_space<vmem>>, vector<2x16xf32>,
    %c0_261 = arith.constant 0 : index
    %c0_262 = arith.constant 0 : index
    %146 = vector.load %arg20[%c0_261, %c0_262] : memref<8x144xf32, #tpu.memory_space<vmem>>, vector<8x144xf32>
    %c0_263 = arith.constant 0 : index
    %c0_264 = arith.constant 0 : index
    %147 = vector.load %arg2[%c0_263, %c0_264] : memref<144x8xf32, #tpu.memory_space<vmem>>, vector<144x8xf32>
    %cst_265 = arith.constant dense<0.000000e+00> : vector<8x8xf32>
    %148 = tpu.matmul %146, %147, %cst_265 {dimension_numbers = #tpu.dot_dimension_numbers<[1], [0], [0], [1], [0, 0, 1, 1], [], []>} : vector<8x144xf32>, vector<144x8xf32>, vector<8x8xf32> -> vector<8x8xf32>
    %c0_266 = arith.constant 0 : index
    %c0_267 = arith.constant 0 : index
    %149 = vector.load %arg3[%c0_266, %c0_267] : memref<1x8xf32, #tpu.memory_space<vmem>>, vector<1x8xf32>
    %150 = vector.broadcast %149 : vector<1x8xf32> to vector<8x8xf32>
    %151 = arith.addf %148, %150 : vector<8x8xf32>
    %cst_268 = arith.constant 0.000000e+00 : f32
    %152 = vector.broadcast %cst_268 : f32 to vector<8x8xf32>
    %153 = arith.maximumf %151, %152 : vector<8x8xf32>
    %c0_269 = arith.constant 0 : index
    %c0_270 = arith.constant 0 : index
    %154 = vector.load %arg17[%c0_269, %c0_270] : memref<8x8xf32, #tpu.memory_space<vmem>>, vector<8x8xf32>
    tpu.vector_store %arg17[%c0_269, %c0_270], %153 {strides = array<i32>} : memref<8x8xf32, #tpu.memory_space<vmem>>, vector<8x8xf32>,
    %c0_271 = arith.constant 0 : index
    %c0_272 = arith.constant 0 : index
    %155 = vector.load %arg4[%c0_271, %c0_272] : memref<8x8xf32, #tpu.memory_space<vmem>>, vector<8x8xf32>
    %cst_273 = arith.constant dense<0.000000e+00> : vector<8x8xf32>
    %156 = tpu.matmul %153, %155, %cst_273 {dimension_numbers = #tpu.dot_dimension_numbers<[1], [0], [0], [1], [0, 0, 1, 1], [], []>} : vector<8x8xf32>, vector<8x8xf32>, vector<8x8xf32> -> vector<8x8xf32>
    %c0_274 = arith.constant 0 : index
    %c0_275 = arith.constant 0 : index
    %157 = vector.load %arg5[%c0_274, %c0_275] : memref<1x8xf32, #tpu.memory_space<vmem>>, vector<1x8xf32>
    %158 = vector.broadcast %157 : vector<1x8xf32> to vector<8x8xf32>
    %159 = arith.addf %156, %158 : vector<8x8xf32>
    %cst_276 = arith.constant 0.000000e+00 : f32
    %160 = vector.broadcast %cst_276 : f32 to vector<8x8xf32>
    %161 = arith.maximumf %159, %160 : vector<8x8xf32>
    %c0_277 = arith.constant 0 : index
    %c0_278 = arith.constant 0 : index
    %162 = vector.load %arg18[%c0_277, %c0_278] : memref<8x32xf32, #tpu.memory_space<vmem>>, vector<8x8xf32>
    tpu.vector_store %arg18[%c0_277, %c0_278], %161 {strides = array<i32>} : memref<8x32xf32, #tpu.memory_space<vmem>>, vector<8x8xf32>,
    %c0_279 = arith.constant 0 : index
    %c0_280 = arith.constant 0 : index
    %163 = vector.load %arg6[%c0_279, %c0_280] : memref<8x8xf32, #tpu.memory_space<vmem>>, vector<8x8xf32>
    %cst_281 = arith.constant dense<0.000000e+00> : vector<8x8xf32>
    %164 = tpu.matmul %153, %163, %cst_281 {dimension_numbers = #tpu.dot_dimension_numbers<[1], [0], [0], [1], [0, 0, 1, 1], [], []>} : vector<8x8xf32>, vector<8x8xf32>, vector<8x8xf32> -> vector<8x8xf32>
    %c0_282 = arith.constant 0 : index
    %c0_283 = arith.constant 0 : index
    %165 = vector.load %arg7[%c0_282, %c0_283] : memref<1x8xf32, #tpu.memory_space<vmem>>, vector<1x8xf32>
    %166 = vector.broadcast %165 : vector<1x8xf32> to vector<8x8xf32>
    %167 = arith.addf %164, %166 : vector<8x8xf32>
    %cst_284 = arith.constant 0.000000e+00 : f32
    %168 = vector.broadcast %cst_284 : f32 to vector<8x8xf32>
    %169 = arith.maximumf %167, %168 : vector<8x8xf32>
    %c0_285 = arith.constant 0 : index
    %c8_286 = arith.constant 8 : index
    %170 = vector.load %arg18[%c0_285, %c8_286] : memref<8x32xf32, #tpu.memory_space<vmem>>, vector<8x8xf32>
    tpu.vector_store %arg18[%c0_285, %c8_286], %169 {strides = array<i32>} : memref<8x32xf32, #tpu.memory_space<vmem>>, vector<8x8xf32>,
    %c0_287 = arith.constant 0 : index
    %c0_288 = arith.constant 0 : index
    %171 = vector.load %arg8[%c0_287, %c0_288] : memref<8x8xf32, #tpu.memory_space<vmem>>, vector<8x8xf32>
    %cst_289 = arith.constant dense<0.000000e+00> : vector<8x8xf32>
    %172 = tpu.matmul %153, %171, %cst_289 {dimension_numbers = #tpu.dot_dimension_numbers<[1], [0], [0], [1], [0, 0, 1, 1], [], []>} : vector<8x8xf32>, vector<8x8xf32>, vector<8x8xf32> -> vector<8x8xf32>
    %c0_290 = arith.constant 0 : index
    %c0_291 = arith.constant 0 : index
    %173 = vector.load %arg9[%c0_290, %c0_291] : memref<1x8xf32, #tpu.memory_space<vmem>>, vector<1x8xf32>
    %174 = vector.broadcast %173 : vector<1x8xf32> to vector<8x8xf32>
    %175 = arith.addf %172, %174 : vector<8x8xf32>
    %cst_292 = arith.constant 0.000000e+00 : f32
    %176 = vector.broadcast %cst_292 : f32 to vector<8x8xf32>
    %177 = arith.maximumf %175, %176 : vector<8x8xf32>
    %c0_293 = arith.constant 0 : index
    %c16_294 = arith.constant 16 : index
    %178 = vector.load %arg18[%c0_293, %c16_294] : memref<8x32xf32, #tpu.memory_space<vmem>>, vector<8x8xf32>
    tpu.vector_store %arg18[%c0_293, %c16_294], %177 {strides = array<i32>} : memref<8x32xf32, #tpu.memory_space<vmem>>, vector<8x8xf32>,
    %c0_295 = arith.constant 0 : index
    %c0_296 = arith.constant 0 : index
    %179 = vector.load %arg10[%c0_295, %c0_296] : memref<8x8xf32, #tpu.memory_space<vmem>>, vector<8x8xf32>
    %cst_297 = arith.constant dense<0.000000e+00> : vector<8x8xf32>
    %180 = tpu.matmul %153, %179, %cst_297 {dimension_numbers = #tpu.dot_dimension_numbers<[1], [0], [0], [1], [0, 0, 1, 1], [], []>} : vector<8x8xf32>, vector<8x8xf32>, vector<8x8xf32> -> vector<8x8xf32>
    %c0_298 = arith.constant 0 : index
    %c0_299 = arith.constant 0 : index
    %181 = vector.load %arg11[%c0_298, %c0_299] : memref<1x8xf32, #tpu.memory_space<vmem>>, vector<1x8xf32>
    %182 = vector.broadcast %181 : vector<1x8xf32> to vector<8x8xf32>
    %183 = arith.addf %180, %182 : vector<8x8xf32>
    %cst_300 = arith.constant 0.000000e+00 : f32
    %184 = vector.broadcast %cst_300 : f32 to vector<8x8xf32>
    %185 = arith.maximumf %183, %184 : vector<8x8xf32>
    %c0_301 = arith.constant 0 : index
    %c24 = arith.constant 24 : index
    %186 = vector.load %arg18[%c0_301, %c24] : memref<8x32xf32, #tpu.memory_space<vmem>>, vector<8x8xf32>
    tpu.vector_store %arg18[%c0_301, %c24], %185 {strides = array<i32>} : memref<8x32xf32, #tpu.memory_space<vmem>>, vector<8x8xf32>,
    %cst_302 = arith.constant 0.000000e+00 : f32
    %187 = vector.broadcast %cst_302 : f32 to vector<2x4x4x32xf32>
    %c0_303 = arith.constant 0 : index
    %c0_304 = arith.constant 0 : index
    %c0_305 = arith.constant 0 : index
    %c0_306 = arith.constant 0 : index
    %188 = vector.load %arg21[%c0_303, %c0_304, %c0_305, %c0_306] : memref<2x4x4x32xf32, #tpu.memory_space<vmem>>, vector<2x4x4x32xf32>
    tpu.vector_store %arg21[%c0_303, %c0_304, %c0_305, %c0_306], %187 {strides = array<i32>} : memref<2x4x4x32xf32, #tpu.memory_space<vmem>>, vector<2x4x4x32xf32>,
    %c0_307 = arith.constant 0 : index
    %c0_308 = arith.constant 0 : index
    %189 = vector.load %arg18[%c0_307, %c0_308] : memref<8x32xf32, #tpu.memory_space<vmem>>, vector<2x32xf32>
    %c0_309 = arith.constant 0 : index
    %c1_310 = arith.constant 1 : index
    %c1_311 = arith.constant 1 : index
    %c0_312 = arith.constant 0 : index
    %190 = vector.load %arg21[%c0_309, %c1_310, %c1_311, %c0_312] : memref<2x4x4x32xf32, #tpu.memory_space<vmem>>, vector<1x1x2x32xf32>
    %191 = vector.shape_cast %190 : vector<1x1x2x32xf32> to vector<2x32xf32>
    %192 = vector.shape_cast %189 : vector<2x32xf32> to vector<1x1x2x32xf32>
    tpu.vector_store %arg21[%c0_309, %c1_310, %c1_311, %c0_312], %192 {strides = array<i32>} : memref<2x4x4x32xf32, #tpu.memory_space<vmem>>, vector<1x1x2x32xf32>,
    %c2_313 = arith.constant 2 : index
    %c0_314 = arith.constant 0 : index
    %193 = vector.load %arg18[%c2_313, %c0_314] : memref<8x32xf32, #tpu.memory_space<vmem>>, vector<2x32xf32>
    %c0_315 = arith.constant 0 : index
    %c2_316 = arith.constant 2 : index
    %c1_317 = arith.constant 1 : index
    %c0_318 = arith.constant 0 : index
    %194 = vector.load %arg21[%c0_315, %c2_316, %c1_317, %c0_318] : memref<2x4x4x32xf32, #tpu.memory_space<vmem>>, vector<1x1x2x32xf32>
    %195 = vector.shape_cast %194 : vector<1x1x2x32xf32> to vector<2x32xf32>
    %196 = vector.shape_cast %193 : vector<2x32xf32> to vector<1x1x2x32xf32>
    tpu.vector_store %arg21[%c0_315, %c2_316, %c1_317, %c0_318], %196 {strides = array<i32>} : memref<2x4x4x32xf32, #tpu.memory_space<vmem>>, vector<1x1x2x32xf32>,
    %c4_319 = arith.constant 4 : index
    %c0_320 = arith.constant 0 : index
    %197 = vector.load %arg18[%c4_319, %c0_320] : memref<8x32xf32, #tpu.memory_space<vmem>>, vector<2x32xf32>
    %c1_321 = arith.constant 1 : index
    %c1_322 = arith.constant 1 : index
    %c1_323 = arith.constant 1 : index
    %c0_324 = arith.constant 0 : index
    %198 = vector.load %arg21[%c1_321, %c1_322, %c1_323, %c0_324] : memref<2x4x4x32xf32, #tpu.memory_space<vmem>>, vector<1x1x2x32xf32>
    %199 = vector.shape_cast %198 : vector<1x1x2x32xf32> to vector<2x32xf32>
    %200 = vector.shape_cast %197 : vector<2x32xf32> to vector<1x1x2x32xf32>
    tpu.vector_store %arg21[%c1_321, %c1_322, %c1_323, %c0_324], %200 {strides = array<i32>} : memref<2x4x4x32xf32, #tpu.memory_space<vmem>>, vector<1x1x2x32xf32>,
    %c6_325 = arith.constant 6 : index
    %c0_326 = arith.constant 0 : index
    %201 = vector.load %arg18[%c6_325, %c0_326] : memref<8x32xf32, #tpu.memory_space<vmem>>, vector<2x32xf32>
    %c1_327 = arith.constant 1 : index
    %c2_328 = arith.constant 2 : index
    %c1_329 = arith.constant 1 : index
    %c0_330 = arith.constant 0 : index
    %202 = vector.load %arg21[%c1_327, %c2_328, %c1_329, %c0_330] : memref<2x4x4x32xf32, #tpu.memory_space<vmem>>, vector<1x1x2x32xf32>
    %203 = vector.shape_cast %202 : vector<1x1x2x32xf32> to vector<2x32xf32>
    %204 = vector.shape_cast %201 : vector<2x32xf32> to vector<1x1x2x32xf32>
    tpu.vector_store %arg21[%c1_327, %c2_328, %c1_329, %c0_330], %204 {strides = array<i32>} : memref<2x4x4x32xf32, #tpu.memory_space<vmem>>, vector<1x1x2x32xf32>,
    %c0_331 = arith.constant 0 : index
    %c0_332 = arith.constant 0 : index
    %c0_333 = arith.constant 0 : index
    %c0_334 = arith.constant 0 : index
    %205 = vector.load %arg21[%c0_331, %c0_332, %c0_333, %c0_334] : memref<2x4x4x32xf32, #tpu.memory_space<vmem>>, vector<1x1x2x32xf32>
    %206 = vector.shape_cast %205 : vector<1x1x2x32xf32> to vector<2x32xf32>
    %c0_335 = arith.constant 0 : index
    %c0_336 = arith.constant 0 : index
    %207 = vector.load %arg22[%c0_335, %c0_336] : memref<8x288xf32, #tpu.memory_space<vmem>>, vector<2x32xf32>
    tpu.vector_store %arg22[%c0_335, %c0_336], %206 {strides = array<i32>} : memref<8x288xf32, #tpu.memory_space<vmem>>, vector<2x32xf32>,
    %c0_337 = arith.constant 0 : index
    %c1_338 = arith.constant 1 : index
    %c0_339 = arith.constant 0 : index
    %c0_340 = arith.constant 0 : index
    %208 = vector.load %arg21[%c0_337, %c1_338, %c0_339, %c0_340] : memref<2x4x4x32xf32, #tpu.memory_space<vmem>>, vector<1x1x2x32xf32>
    %209 = vector.shape_cast %208 : vector<1x1x2x32xf32> to vector<2x32xf32>
    %c2_341 = arith.constant 2 : index
    %c0_342 = arith.constant 0 : index
    %210 = vector.load %arg22[%c2_341, %c0_342] : memref<8x288xf32, #tpu.memory_space<vmem>>, vector<2x32xf32>
    tpu.vector_store %arg22[%c2_341, %c0_342], %209 {strides = array<i32>} : memref<8x288xf32, #tpu.memory_space<vmem>>, vector<2x32xf32>,
    %c1_343 = arith.constant 1 : index
    %c0_344 = arith.constant 0 : index
    %c0_345 = arith.constant 0 : index
    %c0_346 = arith.constant 0 : index
    %211 = vector.load %arg21[%c1_343, %c0_344, %c0_345, %c0_346] : memref<2x4x4x32xf32, #tpu.memory_space<vmem>>, vector<1x1x2x32xf32>
    %212 = vector.shape_cast %211 : vector<1x1x2x32xf32> to vector<2x32xf32>
    %c4_347 = arith.constant 4 : index
    %c0_348 = arith.constant 0 : index
    %213 = vector.load %arg22[%c4_347, %c0_348] : memref<8x288xf32, #tpu.memory_space<vmem>>, vector<2x32xf32>
    tpu.vector_store %arg22[%c4_347, %c0_348], %212 {strides = array<i32>} : memref<8x288xf32, #tpu.memory_space<vmem>>, vector<2x32xf32>,
    %c1_349 = arith.constant 1 : index
    %c1_350 = arith.constant 1 : index
    %c0_351 = arith.constant 0 : index
    %c0_352 = arith.constant 0 : index
    %214 = vector.load %arg21[%c1_349, %c1_350, %c0_351, %c0_352] : memref<2x4x4x32xf32, #tpu.memory_space<vmem>>, vector<1x1x2x32xf32>
    %215 = vector.shape_cast %214 : vector<1x1x2x32xf32> to vector<2x32xf32>
    %c6_353 = arith.constant 6 : index
    %c0_354 = arith.constant 0 : index
    %216 = vector.load %arg22[%c6_353, %c0_354] : memref<8x288xf32, #tpu.memory_space<vmem>>, vector<2x32xf32>
    tpu.vector_store %arg22[%c6_353, %c0_354], %215 {strides = array<i32>} : memref<8x288xf32, #tpu.memory_space<vmem>>, vector<2x32xf32>,
    %c0_355 = arith.constant 0 : index
    %c0_356 = arith.constant 0 : index
    %c1_357 = arith.constant 1 : index
    %c0_358 = arith.constant 0 : index
    %217 = vector.load %arg21[%c0_355, %c0_356, %c1_357, %c0_358] : memref<2x4x4x32xf32, #tpu.memory_space<vmem>>, vector<1x1x2x32xf32>
    %218 = vector.shape_cast %217 : vector<1x1x2x32xf32> to vector<2x32xf32>
    %c0_359 = arith.constant 0 : index
    %c32_360 = arith.constant 32 : index
    %219 = vector.load %arg22[%c0_359, %c32_360] : memref<8x288xf32, #tpu.memory_space<vmem>>, vector<2x32xf32>
    tpu.vector_store %arg22[%c0_359, %c32_360], %218 {strides = array<i32>} : memref<8x288xf32, #tpu.memory_space<vmem>>, vector<2x32xf32>,
    %c0_361 = arith.constant 0 : index
    %c1_362 = arith.constant 1 : index
    %c1_363 = arith.constant 1 : index
    %c0_364 = arith.constant 0 : index
    %220 = vector.load %arg21[%c0_361, %c1_362, %c1_363, %c0_364] : memref<2x4x4x32xf32, #tpu.memory_space<vmem>>, vector<1x1x2x32xf32>
    %221 = vector.shape_cast %220 : vector<1x1x2x32xf32> to vector<2x32xf32>
    %c2_365 = arith.constant 2 : index
    %c32_366 = arith.constant 32 : index
    %222 = vector.load %arg22[%c2_365, %c32_366] : memref<8x288xf32, #tpu.memory_space<vmem>>, vector<2x32xf32>
    tpu.vector_store %arg22[%c2_365, %c32_366], %221 {strides = array<i32>} : memref<8x288xf32, #tpu.memory_space<vmem>>, vector<2x32xf32>,
    %c1_367 = arith.constant 1 : index
    %c0_368 = arith.constant 0 : index
    %c1_369 = arith.constant 1 : index
    %c0_370 = arith.constant 0 : index
    %223 = vector.load %arg21[%c1_367, %c0_368, %c1_369, %c0_370] : memref<2x4x4x32xf32, #tpu.memory_space<vmem>>, vector<1x1x2x32xf32>
    %224 = vector.shape_cast %223 : vector<1x1x2x32xf32> to vector<2x32xf32>
    %c4_371 = arith.constant 4 : index
    %c32_372 = arith.constant 32 : index
    %225 = vector.load %arg22[%c4_371, %c32_372] : memref<8x288xf32, #tpu.memory_space<vmem>>, vector<2x32xf32>
    tpu.vector_store %arg22[%c4_371, %c32_372], %224 {strides = array<i32>} : memref<8x288xf32, #tpu.memory_space<vmem>>, vector<2x32xf32>,
    %c1_373 = arith.constant 1 : index
    %c1_374 = arith.constant 1 : index
    %c1_375 = arith.constant 1 : index
    %c0_376 = arith.constant 0 : index
    %226 = vector.load %arg21[%c1_373, %c1_374, %c1_375, %c0_376] : memref<2x4x4x32xf32, #tpu.memory_space<vmem>>, vector<1x1x2x32xf32>
    %227 = vector.shape_cast %226 : vector<1x1x2x32xf32> to vector<2x32xf32>
    %c6_377 = arith.constant 6 : index
    %c32_378 = arith.constant 32 : index
    %228 = vector.load %arg22[%c6_377, %c32_378] : memref<8x288xf32, #tpu.memory_space<vmem>>, vector<2x32xf32>
    tpu.vector_store %arg22[%c6_377, %c32_378], %227 {strides = array<i32>} : memref<8x288xf32, #tpu.memory_space<vmem>>, vector<2x32xf32>,
    %c0_379 = arith.constant 0 : index
    %c0_380 = arith.constant 0 : index
    %c2_381 = arith.constant 2 : index
    %c0_382 = arith.constant 0 : index
    %229 = vector.load %arg21[%c0_379, %c0_380, %c2_381, %c0_382] : memref<2x4x4x32xf32, #tpu.memory_space<vmem>>, vector<1x1x2x32xf32>
    %230 = vector.shape_cast %229 : vector<1x1x2x32xf32> to vector<2x32xf32>
    %c0_383 = arith.constant 0 : index
    %c64_384 = arith.constant 64 : index
    %231 = vector.load %arg22[%c0_383, %c64_384] : memref<8x288xf32, #tpu.memory_space<vmem>>, vector<2x32xf32>
    tpu.vector_store %arg22[%c0_383, %c64_384], %230 {strides = array<i32>} : memref<8x288xf32, #tpu.memory_space<vmem>>, vector<2x32xf32>,
    %c0_385 = arith.constant 0 : index
    %c1_386 = arith.constant 1 : index
    %c2_387 = arith.constant 2 : index
    %c0_388 = arith.constant 0 : index
    %232 = vector.load %arg21[%c0_385, %c1_386, %c2_387, %c0_388] : memref<2x4x4x32xf32, #tpu.memory_space<vmem>>, vector<1x1x2x32xf32>
    %233 = vector.shape_cast %232 : vector<1x1x2x32xf32> to vector<2x32xf32>
    %c2_389 = arith.constant 2 : index
    %c64_390 = arith.constant 64 : index
    %234 = vector.load %arg22[%c2_389, %c64_390] : memref<8x288xf32, #tpu.memory_space<vmem>>, vector<2x32xf32>
    tpu.vector_store %arg22[%c2_389, %c64_390], %233 {strides = array<i32>} : memref<8x288xf32, #tpu.memory_space<vmem>>, vector<2x32xf32>,
    %c1_391 = arith.constant 1 : index
    %c0_392 = arith.constant 0 : index
    %c2_393 = arith.constant 2 : index
    %c0_394 = arith.constant 0 : index
    %235 = vector.load %arg21[%c1_391, %c0_392, %c2_393, %c0_394] : memref<2x4x4x32xf32, #tpu.memory_space<vmem>>, vector<1x1x2x32xf32>
    %236 = vector.shape_cast %235 : vector<1x1x2x32xf32> to vector<2x32xf32>
    %c4_395 = arith.constant 4 : index
    %c64_396 = arith.constant 64 : index
    %237 = vector.load %arg22[%c4_395, %c64_396] : memref<8x288xf32, #tpu.memory_space<vmem>>, vector<2x32xf32>
    tpu.vector_store %arg22[%c4_395, %c64_396], %236 {strides = array<i32>} : memref<8x288xf32, #tpu.memory_space<vmem>>, vector<2x32xf32>,
    %c1_397 = arith.constant 1 : index
    %c1_398 = arith.constant 1 : index
    %c2_399 = arith.constant 2 : index
    %c0_400 = arith.constant 0 : index
    %238 = vector.load %arg21[%c1_397, %c1_398, %c2_399, %c0_400] : memref<2x4x4x32xf32, #tpu.memory_space<vmem>>, vector<1x1x2x32xf32>
    %239 = vector.shape_cast %238 : vector<1x1x2x32xf32> to vector<2x32xf32>
    %c6_401 = arith.constant 6 : index
    %c64_402 = arith.constant 64 : index
    %240 = vector.load %arg22[%c6_401, %c64_402] : memref<8x288xf32, #tpu.memory_space<vmem>>, vector<2x32xf32>
    tpu.vector_store %arg22[%c6_401, %c64_402], %239 {strides = array<i32>} : memref<8x288xf32, #tpu.memory_space<vmem>>, vector<2x32xf32>,
    %c0_403 = arith.constant 0 : index
    %c1_404 = arith.constant 1 : index
    %c0_405 = arith.constant 0 : index
    %c0_406 = arith.constant 0 : index
    %241 = vector.load %arg21[%c0_403, %c1_404, %c0_405, %c0_406] : memref<2x4x4x32xf32, #tpu.memory_space<vmem>>, vector<1x1x2x32xf32>
    %242 = vector.shape_cast %241 : vector<1x1x2x32xf32> to vector<2x32xf32>
    %c0_407 = arith.constant 0 : index
    %c96_408 = arith.constant 96 : index
    %243 = vector.load %arg22[%c0_407, %c96_408] : memref<8x288xf32, #tpu.memory_space<vmem>>, vector<2x32xf32>
    tpu.vector_store %arg22[%c0_407, %c96_408], %242 {strides = array<i32>} : memref<8x288xf32, #tpu.memory_space<vmem>>, vector<2x32xf32>,
    %c0_409 = arith.constant 0 : index
    %c2_410 = arith.constant 2 : index
    %c0_411 = arith.constant 0 : index
    %c0_412 = arith.constant 0 : index
    %244 = vector.load %arg21[%c0_409, %c2_410, %c0_411, %c0_412] : memref<2x4x4x32xf32, #tpu.memory_space<vmem>>, vector<1x1x2x32xf32>
    %245 = vector.shape_cast %244 : vector<1x1x2x32xf32> to vector<2x32xf32>
    %c2_413 = arith.constant 2 : index
    %c96_414 = arith.constant 96 : index
    %246 = vector.load %arg22[%c2_413, %c96_414] : memref<8x288xf32, #tpu.memory_space<vmem>>, vector<2x32xf32>
    tpu.vector_store %arg22[%c2_413, %c96_414], %245 {strides = array<i32>} : memref<8x288xf32, #tpu.memory_space<vmem>>, vector<2x32xf32>,
    %c1_415 = arith.constant 1 : index
    %c1_416 = arith.constant 1 : index
    %c0_417 = arith.constant 0 : index
    %c0_418 = arith.constant 0 : index
    %247 = vector.load %arg21[%c1_415, %c1_416, %c0_417, %c0_418] : memref<2x4x4x32xf32, #tpu.memory_space<vmem>>, vector<1x1x2x32xf32>
    %248 = vector.shape_cast %247 : vector<1x1x2x32xf32> to vector<2x32xf32>
    %c4_419 = arith.constant 4 : index
    %c96_420 = arith.constant 96 : index
    %249 = vector.load %arg22[%c4_419, %c96_420] : memref<8x288xf32, #tpu.memory_space<vmem>>, vector<2x32xf32>
    tpu.vector_store %arg22[%c4_419, %c96_420], %248 {strides = array<i32>} : memref<8x288xf32, #tpu.memory_space<vmem>>, vector<2x32xf32>,
    %c1_421 = arith.constant 1 : index
    %c2_422 = arith.constant 2 : index
    %c0_423 = arith.constant 0 : index
    %c0_424 = arith.constant 0 : index
    %250 = vector.load %arg21[%c1_421, %c2_422, %c0_423, %c0_424] : memref<2x4x4x32xf32, #tpu.memory_space<vmem>>, vector<1x1x2x32xf32>
    %251 = vector.shape_cast %250 : vector<1x1x2x32xf32> to vector<2x32xf32>
    %c6_425 = arith.constant 6 : index
    %c96_426 = arith.constant 96 : index
    %252 = vector.load %arg22[%c6_425, %c96_426] : memref<8x288xf32, #tpu.memory_space<vmem>>, vector<2x32xf32>
    tpu.vector_store %arg22[%c6_425, %c96_426], %251 {strides = array<i32>} : memref<8x288xf32, #tpu.memory_space<vmem>>, vector<2x32xf32>,
    %c0_427 = arith.constant 0 : index
    %c1_428 = arith.constant 1 : index
    %c1_429 = arith.constant 1 : index
    %c0_430 = arith.constant 0 : index
    %253 = vector.load %arg21[%c0_427, %c1_428, %c1_429, %c0_430] : memref<2x4x4x32xf32, #tpu.memory_space<vmem>>, vector<1x1x2x32xf32>
    %254 = vector.shape_cast %253 : vector<1x1x2x32xf32> to vector<2x32xf32>
    %c0_431 = arith.constant 0 : index
    %c128_432 = arith.constant 128 : index
    %255 = vector.load %arg22[%c0_431, %c128_432] : memref<8x288xf32, #tpu.memory_space<vmem>>, vector<2x32xf32>
    tpu.vector_store %arg22[%c0_431, %c128_432], %254 {strides = array<i32>} : memref<8x288xf32, #tpu.memory_space<vmem>>, vector<2x32xf32>,
    %c0_433 = arith.constant 0 : index
    %c2_434 = arith.constant 2 : index
    %c1_435 = arith.constant 1 : index
    %c0_436 = arith.constant 0 : index
    %256 = vector.load %arg21[%c0_433, %c2_434, %c1_435, %c0_436] : memref<2x4x4x32xf32, #tpu.memory_space<vmem>>, vector<1x1x2x32xf32>
    %257 = vector.shape_cast %256 : vector<1x1x2x32xf32> to vector<2x32xf32>
    %c2_437 = arith.constant 2 : index
    %c128_438 = arith.constant 128 : index
    %258 = vector.load %arg22[%c2_437, %c128_438] : memref<8x288xf32, #tpu.memory_space<vmem>>, vector<2x32xf32>
    tpu.vector_store %arg22[%c2_437, %c128_438], %257 {strides = array<i32>} : memref<8x288xf32, #tpu.memory_space<vmem>>, vector<2x32xf32>,
    %c1_439 = arith.constant 1 : index
    %c1_440 = arith.constant 1 : index
    %c1_441 = arith.constant 1 : index
    %c0_442 = arith.constant 0 : index
    %259 = vector.load %arg21[%c1_439, %c1_440, %c1_441, %c0_442] : memref<2x4x4x32xf32, #tpu.memory_space<vmem>>, vector<1x1x2x32xf32>
    %260 = vector.shape_cast %259 : vector<1x1x2x32xf32> to vector<2x32xf32>
    %c4_443 = arith.constant 4 : index
    %c128_444 = arith.constant 128 : index
    %261 = vector.load %arg22[%c4_443, %c128_444] : memref<8x288xf32, #tpu.memory_space<vmem>>, vector<2x32xf32>
    tpu.vector_store %arg22[%c4_443, %c128_444], %260 {strides = array<i32>} : memref<8x288xf32, #tpu.memory_space<vmem>>, vector<2x32xf32>,
    %c1_445 = arith.constant 1 : index
    %c2_446 = arith.constant 2 : index
    %c1_447 = arith.constant 1 : index
    %c0_448 = arith.constant 0 : index
    %262 = vector.load %arg21[%c1_445, %c2_446, %c1_447, %c0_448] : memref<2x4x4x32xf32, #tpu.memory_space<vmem>>, vector<1x1x2x32xf32>
    %263 = vector.shape_cast %262 : vector<1x1x2x32xf32> to vector<2x32xf32>
    %c6_449 = arith.constant 6 : index
    %c128_450 = arith.constant 128 : index
    %264 = vector.load %arg22[%c6_449, %c128_450] : memref<8x288xf32, #tpu.memory_space<vmem>>, vector<2x32xf32>
    tpu.vector_store %arg22[%c6_449, %c128_450], %263 {strides = array<i32>} : memref<8x288xf32, #tpu.memory_space<vmem>>, vector<2x32xf32>,
    %c0_451 = arith.constant 0 : index
    %c1_452 = arith.constant 1 : index
    %c2_453 = arith.constant 2 : index
    %c0_454 = arith.constant 0 : index
    %265 = vector.load %arg21[%c0_451, %c1_452, %c2_453, %c0_454] : memref<2x4x4x32xf32, #tpu.memory_space<vmem>>, vector<1x1x2x32xf32>
    %266 = vector.shape_cast %265 : vector<1x1x2x32xf32> to vector<2x32xf32>
    %c0_455 = arith.constant 0 : index
    %c160 = arith.constant 160 : index
    %267 = vector.load %arg22[%c0_455, %c160] : memref<8x288xf32, #tpu.memory_space<vmem>>, vector<2x32xf32>
    tpu.vector_store %arg22[%c0_455, %c160], %266 {strides = array<i32>} : memref<8x288xf32, #tpu.memory_space<vmem>>, vector<2x32xf32>,
    %c0_456 = arith.constant 0 : index
    %c2_457 = arith.constant 2 : index
    %c2_458 = arith.constant 2 : index
    %c0_459 = arith.constant 0 : index
    %268 = vector.load %arg21[%c0_456, %c2_457, %c2_458, %c0_459] : memref<2x4x4x32xf32, #tpu.memory_space<vmem>>, vector<1x1x2x32xf32>
    %269 = vector.shape_cast %268 : vector<1x1x2x32xf32> to vector<2x32xf32>
    %c2_460 = arith.constant 2 : index
    %c160_461 = arith.constant 160 : index
    %270 = vector.load %arg22[%c2_460, %c160_461] : memref<8x288xf32, #tpu.memory_space<vmem>>, vector<2x32xf32>
    tpu.vector_store %arg22[%c2_460, %c160_461], %269 {strides = array<i32>} : memref<8x288xf32, #tpu.memory_space<vmem>>, vector<2x32xf32>,
    %c1_462 = arith.constant 1 : index
    %c1_463 = arith.constant 1 : index
    %c2_464 = arith.constant 2 : index
    %c0_465 = arith.constant 0 : index
    %271 = vector.load %arg21[%c1_462, %c1_463, %c2_464, %c0_465] : memref<2x4x4x32xf32, #tpu.memory_space<vmem>>, vector<1x1x2x32xf32>
    %272 = vector.shape_cast %271 : vector<1x1x2x32xf32> to vector<2x32xf32>
    %c4_466 = arith.constant 4 : index
    %c160_467 = arith.constant 160 : index
    %273 = vector.load %arg22[%c4_466, %c160_467] : memref<8x288xf32, #tpu.memory_space<vmem>>, vector<2x32xf32>
    tpu.vector_store %arg22[%c4_466, %c160_467], %272 {strides = array<i32>} : memref<8x288xf32, #tpu.memory_space<vmem>>, vector<2x32xf32>,
    %c1_468 = arith.constant 1 : index
    %c2_469 = arith.constant 2 : index
    %c2_470 = arith.constant 2 : index
    %c0_471 = arith.constant 0 : index
    %274 = vector.load %arg21[%c1_468, %c2_469, %c2_470, %c0_471] : memref<2x4x4x32xf32, #tpu.memory_space<vmem>>, vector<1x1x2x32xf32>
    %275 = vector.shape_cast %274 : vector<1x1x2x32xf32> to vector<2x32xf32>
    %c6_472 = arith.constant 6 : index
    %c160_473 = arith.constant 160 : index
    %276 = vector.load %arg22[%c6_472, %c160_473] : memref<8x288xf32, #tpu.memory_space<vmem>>, vector<2x32xf32>
    tpu.vector_store %arg22[%c6_472, %c160_473], %275 {strides = array<i32>} : memref<8x288xf32, #tpu.memory_space<vmem>>, vector<2x32xf32>,
    %c0_474 = arith.constant 0 : index
    %c2_475 = arith.constant 2 : index
    %c0_476 = arith.constant 0 : index
    %c0_477 = arith.constant 0 : index
    %277 = vector.load %arg21[%c0_474, %c2_475, %c0_476, %c0_477] : memref<2x4x4x32xf32, #tpu.memory_space<vmem>>, vector<1x1x2x32xf32>
    %278 = vector.shape_cast %277 : vector<1x1x2x32xf32> to vector<2x32xf32>
    %c0_478 = arith.constant 0 : index
    %c192 = arith.constant 192 : index
    %279 = vector.load %arg22[%c0_478, %c192] : memref<8x288xf32, #tpu.memory_space<vmem>>, vector<2x32xf32>
    tpu.vector_store %arg22[%c0_478, %c192], %278 {strides = array<i32>} : memref<8x288xf32, #tpu.memory_space<vmem>>, vector<2x32xf32>,
    %c0_479 = arith.constant 0 : index
    %c3_480 = arith.constant 3 : index
    %c0_481 = arith.constant 0 : index
    %c0_482 = arith.constant 0 : index
    %280 = vector.load %arg21[%c0_479, %c3_480, %c0_481, %c0_482] : memref<2x4x4x32xf32, #tpu.memory_space<vmem>>, vector<1x1x2x32xf32>
    %281 = vector.shape_cast %280 : vector<1x1x2x32xf32> to vector<2x32xf32>
    %c2_483 = arith.constant 2 : index
    %c192_484 = arith.constant 192 : index
    %282 = vector.load %arg22[%c2_483, %c192_484] : memref<8x288xf32, #tpu.memory_space<vmem>>, vector<2x32xf32>
    tpu.vector_store %arg22[%c2_483, %c192_484], %281 {strides = array<i32>} : memref<8x288xf32, #tpu.memory_space<vmem>>, vector<2x32xf32>,
    %c1_485 = arith.constant 1 : index
    %c2_486 = arith.constant 2 : index
    %c0_487 = arith.constant 0 : index
    %c0_488 = arith.constant 0 : index
    %283 = vector.load %arg21[%c1_485, %c2_486, %c0_487, %c0_488] : memref<2x4x4x32xf32, #tpu.memory_space<vmem>>, vector<1x1x2x32xf32>
    %284 = vector.shape_cast %283 : vector<1x1x2x32xf32> to vector<2x32xf32>
    %c4_489 = arith.constant 4 : index
    %c192_490 = arith.constant 192 : index
    %285 = vector.load %arg22[%c4_489, %c192_490] : memref<8x288xf32, #tpu.memory_space<vmem>>, vector<2x32xf32>
    tpu.vector_store %arg22[%c4_489, %c192_490], %284 {strides = array<i32>} : memref<8x288xf32, #tpu.memory_space<vmem>>, vector<2x32xf32>,
    %c1_491 = arith.constant 1 : index
    %c3_492 = arith.constant 3 : index
    %c0_493 = arith.constant 0 : index
    %c0_494 = arith.constant 0 : index
    %286 = vector.load %arg21[%c1_491, %c3_492, %c0_493, %c0_494] : memref<2x4x4x32xf32, #tpu.memory_space<vmem>>, vector<1x1x2x32xf32>
    %287 = vector.shape_cast %286 : vector<1x1x2x32xf32> to vector<2x32xf32>
    %c6_495 = arith.constant 6 : index
    %c192_496 = arith.constant 192 : index
    %288 = vector.load %arg22[%c6_495, %c192_496] : memref<8x288xf32, #tpu.memory_space<vmem>>, vector<2x32xf32>
    tpu.vector_store %arg22[%c6_495, %c192_496], %287 {strides = array<i32>} : memref<8x288xf32, #tpu.memory_space<vmem>>, vector<2x32xf32>,
    %c0_497 = arith.constant 0 : index
    %c2_498 = arith.constant 2 : index
    %c1_499 = arith.constant 1 : index
    %c0_500 = arith.constant 0 : index
    %289 = vector.load %arg21[%c0_497, %c2_498, %c1_499, %c0_500] : memref<2x4x4x32xf32, #tpu.memory_space<vmem>>, vector<1x1x2x32xf32>
    %290 = vector.shape_cast %289 : vector<1x1x2x32xf32> to vector<2x32xf32>
    %c0_501 = arith.constant 0 : index
    %c224 = arith.constant 224 : index
    %291 = vector.load %arg22[%c0_501, %c224] : memref<8x288xf32, #tpu.memory_space<vmem>>, vector<2x32xf32>
    tpu.vector_store %arg22[%c0_501, %c224], %290 {strides = array<i32>} : memref<8x288xf32, #tpu.memory_space<vmem>>, vector<2x32xf32>,
    %c0_502 = arith.constant 0 : index
    %c3_503 = arith.constant 3 : index
    %c1_504 = arith.constant 1 : index
    %c0_505 = arith.constant 0 : index
    %292 = vector.load %arg21[%c0_502, %c3_503, %c1_504, %c0_505] : memref<2x4x4x32xf32, #tpu.memory_space<vmem>>, vector<1x1x2x32xf32>
    %293 = vector.shape_cast %292 : vector<1x1x2x32xf32> to vector<2x32xf32>
    %c2_506 = arith.constant 2 : index
    %c224_507 = arith.constant 224 : index
    %294 = vector.load %arg22[%c2_506, %c224_507] : memref<8x288xf32, #tpu.memory_space<vmem>>, vector<2x32xf32>
    tpu.vector_store %arg22[%c2_506, %c224_507], %293 {strides = array<i32>} : memref<8x288xf32, #tpu.memory_space<vmem>>, vector<2x32xf32>,
    %c1_508 = arith.constant 1 : index
    %c2_509 = arith.constant 2 : index
    %c1_510 = arith.constant 1 : index
    %c0_511 = arith.constant 0 : index
    %295 = vector.load %arg21[%c1_508, %c2_509, %c1_510, %c0_511] : memref<2x4x4x32xf32, #tpu.memory_space<vmem>>, vector<1x1x2x32xf32>
    %296 = vector.shape_cast %295 : vector<1x1x2x32xf32> to vector<2x32xf32>
    %c4_512 = arith.constant 4 : index
    %c224_513 = arith.constant 224 : index
    %297 = vector.load %arg22[%c4_512, %c224_513] : memref<8x288xf32, #tpu.memory_space<vmem>>, vector<2x32xf32>
    tpu.vector_store %arg22[%c4_512, %c224_513], %296 {strides = array<i32>} : memref<8x288xf32, #tpu.memory_space<vmem>>, vector<2x32xf32>,
    %c1_514 = arith.constant 1 : index
    %c3_515 = arith.constant 3 : index
    %c1_516 = arith.constant 1 : index
    %c0_517 = arith.constant 0 : index
    %298 = vector.load %arg21[%c1_514, %c3_515, %c1_516, %c0_517] : memref<2x4x4x32xf32, #tpu.memory_space<vmem>>, vector<1x1x2x32xf32>
    %299 = vector.shape_cast %298 : vector<1x1x2x32xf32> to vector<2x32xf32>
    %c6_518 = arith.constant 6 : index
    %c224_519 = arith.constant 224 : index
    %300 = vector.load %arg22[%c6_518, %c224_519] : memref<8x288xf32, #tpu.memory_space<vmem>>, vector<2x32xf32>
    tpu.vector_store %arg22[%c6_518, %c224_519], %299 {strides = array<i32>} : memref<8x288xf32, #tpu.memory_space<vmem>>, vector<2x32xf32>,
    %c0_520 = arith.constant 0 : index
    %c2_521 = arith.constant 2 : index
    %c2_522 = arith.constant 2 : index
    %c0_523 = arith.constant 0 : index
    %301 = vector.load %arg21[%c0_520, %c2_521, %c2_522, %c0_523] : memref<2x4x4x32xf32, #tpu.memory_space<vmem>>, vector<1x1x2x32xf32>
    %302 = vector.shape_cast %301 : vector<1x1x2x32xf32> to vector<2x32xf32>
    %c0_524 = arith.constant 0 : index
    %c256 = arith.constant 256 : index
    %303 = vector.load %arg22[%c0_524, %c256] : memref<8x288xf32, #tpu.memory_space<vmem>>, vector<2x32xf32>
    tpu.vector_store %arg22[%c0_524, %c256], %302 {strides = array<i32>} : memref<8x288xf32, #tpu.memory_space<vmem>>, vector<2x32xf32>,
    %c0_525 = arith.constant 0 : index
    %c3_526 = arith.constant 3 : index
    %c2_527 = arith.constant 2 : index
    %c0_528 = arith.constant 0 : index
    %304 = vector.load %arg21[%c0_525, %c3_526, %c2_527, %c0_528] : memref<2x4x4x32xf32, #tpu.memory_space<vmem>>, vector<1x1x2x32xf32>
    %305 = vector.shape_cast %304 : vector<1x1x2x32xf32> to vector<2x32xf32>
    %c2_529 = arith.constant 2 : index
    %c256_530 = arith.constant 256 : index
    %306 = vector.load %arg22[%c2_529, %c256_530] : memref<8x288xf32, #tpu.memory_space<vmem>>, vector<2x32xf32>
    tpu.vector_store %arg22[%c2_529, %c256_530], %305 {strides = array<i32>} : memref<8x288xf32, #tpu.memory_space<vmem>>, vector<2x32xf32>,
    %c1_531 = arith.constant 1 : index
    %c2_532 = arith.constant 2 : index
    %c2_533 = arith.constant 2 : index
    %c0_534 = arith.constant 0 : index
    %307 = vector.load %arg21[%c1_531, %c2_532, %c2_533, %c0_534] : memref<2x4x4x32xf32, #tpu.memory_space<vmem>>, vector<1x1x2x32xf32>
    %308 = vector.shape_cast %307 : vector<1x1x2x32xf32> to vector<2x32xf32>
    %c4_535 = arith.constant 4 : index
    %c256_536 = arith.constant 256 : index
    %309 = vector.load %arg22[%c4_535, %c256_536] : memref<8x288xf32, #tpu.memory_space<vmem>>, vector<2x32xf32>
    tpu.vector_store %arg22[%c4_535, %c256_536], %308 {strides = array<i32>} : memref<8x288xf32, #tpu.memory_space<vmem>>, vector<2x32xf32>,
    %c1_537 = arith.constant 1 : index
    %c3_538 = arith.constant 3 : index
    %c2_539 = arith.constant 2 : index
    %c0_540 = arith.constant 0 : index
    %310 = vector.load %arg21[%c1_537, %c3_538, %c2_539, %c0_540] : memref<2x4x4x32xf32, #tpu.memory_space<vmem>>, vector<1x1x2x32xf32>
    %311 = vector.shape_cast %310 : vector<1x1x2x32xf32> to vector<2x32xf32>
    %c6_541 = arith.constant 6 : index
    %c256_542 = arith.constant 256 : index
    %312 = vector.load %arg22[%c6_541, %c256_542] : memref<8x288xf32, #tpu.memory_space<vmem>>, vector<2x32xf32>
    tpu.vector_store %arg22[%c6_541, %c256_542], %311 {strides = array<i32>} : memref<8x288xf32, #tpu.memory_space<vmem>>, vector<2x32xf32>,
    %c0_543 = arith.constant 0 : index
    %c0_544 = arith.constant 0 : index
    %313 = vector.load %arg22[%c0_543, %c0_544] : memref<8x288xf32, #tpu.memory_space<vmem>>, vector<8x288xf32>
    %c0_545 = arith.constant 0 : index
    %c0_546 = arith.constant 0 : index
    %314 = vector.load %arg12[%c0_545, %c0_546] : memref<288x8xf32, #tpu.memory_space<vmem>>, vector<288x8xf32>
    %cst_547 = arith.constant dense<0.000000e+00> : vector<8x8xf32>
    %315 = tpu.matmul %313, %314, %cst_547 {dimension_numbers = #tpu.dot_dimension_numbers<[1], [0], [0], [1], [0, 0, 1, 1], [], []>} : vector<8x288xf32>, vector<288x8xf32>, vector<8x8xf32> -> vector<8x8xf32>
    %c0_548 = arith.constant 0 : index
    %c0_549 = arith.constant 0 : index
    %316 = vector.load %arg13[%c0_548, %c0_549] : memref<1x8xf32, #tpu.memory_space<vmem>>, vector<1x8xf32>
    %317 = vector.broadcast %316 : vector<1x8xf32> to vector<8x8xf32>
    %318 = arith.addf %315, %317 : vector<8x8xf32>
    %c0_550 = arith.constant 0 : index
    %c0_551 = arith.constant 0 : index
    %319 = vector.load %arg14[%c0_550, %c0_551] : memref<8x8xf32, #tpu.memory_space<vmem>>, vector<8x8xf32>
    %cst_552 = arith.constant dense<0.000000e+00> : vector<8x8xf32>
    %320 = tpu.matmul %153, %319, %cst_552 {dimension_numbers = #tpu.dot_dimension_numbers<[1], [0], [0], [1], [0, 0, 1, 1], [], []>} : vector<8x8xf32>, vector<8x8xf32>, vector<8x8xf32> -> vector<8x8xf32>
    %c0_553 = arith.constant 0 : index
    %c0_554 = arith.constant 0 : index
    %321 = vector.load %arg15[%c0_553, %c0_554] : memref<1x8xf32, #tpu.memory_space<vmem>>, vector<1x8xf32>
    %322 = vector.broadcast %321 : vector<1x8xf32> to vector<8x8xf32>
    %323 = arith.addf %320, %322 : vector<8x8xf32>
    %324 = arith.addf %318, %323 : vector<8x8xf32>
    %cst_555 = arith.constant 0.000000e+00 : f32
    %325 = vector.broadcast %cst_555 : f32 to vector<8x8xf32>
    %326 = arith.maximumf %324, %325 : vector<8x8xf32>
    %c0_556 = arith.constant 0 : index
    %c0_557 = arith.constant 0 : index
    %327 = vector.load %arg16[%c0_556, %c0_557] : memref<8x8xf32, #tpu.memory_space<vmem>>, vector<8x8xf32>
    tpu.vector_store %arg16[%c0_556, %c0_557], %326 {strides = array<i32>} : memref<8x8xf32, #tpu.memory_space<vmem>>, vector<8x8xf32>,
    return
  }
}

</mosaic_0001>

<llo_original>
// kernel: feature_enhancement_dilated_block_apply.4
$region0: #{feature_enhancement_dilated_block_apply.4}
  #allocation0 [shape = 'u32[]', space=smem, size = 0x4, offset = 0x4, fixed_abs, tag = 'smem constant byte address 0x4 - core index']
  #allocation1 [shape = 'u32[72,128]{1,0:T(1,128)}', space=vmem, size = 0x9000, scoped, tag = 'internal scratch']
  %s0 = inlined_call_operand.vmem [shape: f32[4,36,128], index: 0, kind: input, shape index: {}]
  %s1 = inlined_call_operand.vmem [shape: f32[8,36], index: 1, kind: input, shape index: {}]
  %s2 = inlined_call_operand.vmem [shape: f32[8,1], index: 2, kind: input, shape index: {}]
  %s3 = inlined_call_operand.vmem [shape: f32[8,128], index: 3, kind: output, shape index: {}]
  %s4 = sld [smem:[#allocation0]]
  $region22: #{feature_enhancement_dilated_block_apply.4} parent=0
    _
  %s6 = ssub.s32 1, %s4
  %s7 = scalar_select 0, %s6, %s4
  // Predicated region
  $region2: #{feature_enhancement_dilated_block_apply.4} parent=0 // pred_check
    _
  $region3: #{feature_enhancement_dilated_block_apply.4} parent=0 // pred_check_branch
    %9 = sbr.rel (0) target = $region5
  $region4: #{feature_enhancement_dilated_block_apply.4} parent=0 // pred_region
    _
  $region5: #{feature_enhancement_dilated_block_apply.4} parent=0 // pred_fallthru
    _
  // Predicated region
  $region6: #{feature_enhancement_dilated_block_apply.4} parent=0 // pred_check
    _
  $region7: #{feature_enhancement_dilated_block_apply.4} parent=0 // pred_check_branch
    %11 = sbr.rel (0) target = $region9
  $region8: #{feature_enhancement_dilated_block_apply.4} parent=0 // pred_region
    _
  $region9: #{feature_enhancement_dilated_block_apply.4} parent=0 // pred_fallthru
    _
  // Predicated region
  $region10: #{feature_enhancement_dilated_block_apply.4} parent=0 // pred_check
    _
  $region11: #{feature_enhancement_dilated_block_apply.4} parent=0 // pred_check_branch
    %13 = sbr.rel (0) target = $region13
  $region12: #{feature_enhancement_dilated_block_apply.4} parent=0 // pred_region
    _
  $region13: #{feature_enhancement_dilated_block_apply.4} parent=0 // pred_fallthru
    _
  %v14 = vld [vmem:[%s1] sm:$0xff]
  %v15 = vld [vmem:[%s0] sm:$0xff]
  %v16 = vld [vmem:[%s0 + $0x8] sm:$0xff]
  %v17 = vld [vmem:[%s0 + $0x10] sm:$0xff]
  %v18 = vld [vmem:[%s0 + $0x18] sm:$0xff]
  %v19 = vld [vmem:[%s0 + $0x20] sm:$0xf]
  %vm20 = vcmask 293888
  %v22 = vsel %vm20, %v14, 0
  %vm24 = vcmask 1043456
  %v26 = vsel %vm24, %v19, 0
  %28 = vmatpush.msra.mxu0 0.0
  %29 = vmatpush.msra.mxu0 0.0
  %30 = vmatpush.msra.mxu0 0.0
  %31 = vmatpush.msra.mxu0 0.0
  %32 = vmatpush.msra.mxu0 0.0
  %33 = vmatpush.msra.mxu0 0.0
  %34 = vmatpush.msra.mxu0 0.0
  %35 = vmatpush.msra.mxu0 0.0
  %36 = vmatpush.msra.mxu0 0.0
  %37 = vmatpush.msra.mxu0 0.0
  %38 = vmatpush.msra.mxu0 0.0
  %39 = vmatpush.msra.mxu0 %v26
  %40 = vmatpush.msra.mxu0 %v18
  %41 = vmatpush.msra.mxu0 %v17
  %42 = vmatpush.msra.mxu0 %v16
  %43 = vmatpush.msra.mxu0 %v15
  %44 = vmatmul.f32.gmra.mxu0 %v22
  %v45 = vpop.f32.mrf.mxu0
  %v46 = vadd.f32 0.0, %v45
  %47 = vdwg.mxu0
  %s48 = scalar_lea.vmem %s0, 40
  %v49 = vld [vmem:[%s48] sm:$0xff]
  %v50 = vld [vmem:[%s48 + $0x8] sm:$0xff]
  %v51 = vld [vmem:[%s48 + $0x10] sm:$0xff]
  %v52 = vld [vmem:[%s48 + $0x18] sm:$0xff]
  %v53 = vld [vmem:[%s48 + $0x20] sm:$0xf]
  %v55 = vsel %vm24, %v53, 0
  %57 = vmatpush.msra.mxu0 0.0
  %58 = vmatpush.msra.mxu0 0.0
  %59 = vmatpush.msra.mxu0 0.0
  %60 = vmatpush.msra.mxu0 0.0
  %61 = vmatpush.msra.mxu0 0.0
  %62 = vmatpush.msra.mxu0 0.0
  %63 = vmatpush.msra.mxu0 0.0
  %64 = vmatpush.msra.mxu0 0.0
  %65 = vmatpush.msra.mxu0 0.0
  %66 = vmatpush.msra.mxu0 0.0
  %67 = vmatpush.msra.mxu0 0.0
  %68 = vmatpush.msra.mxu0 %v55
  %69 = vmatpush.msra.mxu0 %v52
  %70 = vmatpush.msra.mxu0 %v51
  %71 = vmatpush.msra.mxu0 %v50
  %72 = vmatpush.msra.mxu0 %v49
  %73 = vmatmul.f32.gmra.mxu0 %v22
  %v74 = vpop.f32.mrf.mxu0
  %v75 = vadd.f32 0.0, %v74
  %76 = vdwg.mxu0
  %v77 = vmax.f32 %v46, %v75
  %s78 = scalar_lea.vmem %s0, 80
  %v79 = vld [vmem:[%s78] sm:$0xff]
  %v80 = vld [vmem:[%s78 + $0x8] sm:$0xff]
  %v81 = vld [vmem:[%s78 + $0x10] sm:$0xff]
  %v82 = vld [vmem:[%s78 + $0x18] sm:$0xff]
  %v83 = vld [vmem:[%s78 + $0x20] sm:$0xf]
  %v85 = vsel %vm24, %v83, 0
  %87 = vmatpush.msra.mxu0 0.0
  %88 = vmatpush.msra.mxu0 0.0
  %89 = vmatpush.msra.mxu0 0.0
  %90 = vmatpush.msra.mxu0 0.0
  %91 = vmatpush.msra.mxu0 0.0
  %92 = vmatpush.msra.mxu0 0.0
  %93 = vmatpush.msra.mxu0 0.0
  %94 = vmatpush.msra.mxu0 0.0
  %95 = vmatpush.msra.mxu0 0.0
  %96 = vmatpush.msra.mxu0 0.0
  %97 = vmatpush.msra.mxu0 0.0
  %98 = vmatpush.msra.mxu0 %v85
  %99 = vmatpush.msra.mxu0 %v82
  %100 = vmatpush.msra.mxu0 %v81
  %101 = vmatpush.msra.mxu0 %v80
  %102 = vmatpush.msra.mxu0 %v79
  %103 = vmatmul.f32.gmra.mxu0 %v22
  %v104 = vpop.f32.mrf.mxu0
  %v105 = vadd.f32 0.0, %v104
  %106 = vdwg.mxu0
  %v107 = vmax.f32 %v77, %v105
  %s108 = scalar_lea.vmem %s0, 120
  %v109 = vld [vmem:[%s108] sm:$0xff]
  %v110 = vld [vmem:[%s108 + $0x8] sm:$0xff]
  %v111 = vld [vmem:[%s108 + $0x10] sm:$0xff]
  %v112 = vld [vmem:[%s108 + $0x18] sm:$0xff]
  %v113 = vld [vmem:[%s108 + $0x20] sm:$0xf]
  %v115 = vsel %vm24, %v113, 0
  %117 = vmatpush.msra.mxu0 0.0
  %118 = vmatpush.msra.mxu0 0.0
  %119 = vmatpush.msra.mxu0 0.0
  %120 = vmatpush.msra.mxu0 0.0
  %121 = vmatpush.msra.mxu0 0.0
  %122 = vmatpush.msra.mxu0 0.0
  %123 = vmatpush.msra.mxu0 0.0
  %124 = vmatpush.msra.mxu0 0.0
  %125 = vmatpush.msra.mxu0 0.0
  %126 = vmatpush.msra.mxu0 0.0
  %127 = vmatpush.msra.mxu0 0.0
  %128 = vmatpush.msra.mxu0 %v115
  %129 = vmatpush.msra.mxu0 %v112
  %130 = vmatpush.msra.mxu0 %v111
  %131 = vmatpush.msra.mxu0 %v110
  %132 = vmatpush.msra.mxu0 %v109
  %133 = vmatmul.f32.gmra.mxu0 %v22
  %v134 = vpop.f32.mrf.mxu0
  %v135 = vadd.f32 0.0, %v134
  %136 = vdwg.mxu0
  %v137 = vmax.f32 %v107, %v135
  %v138 = vld [vmem:[%s2] sm:$0xff]
  %140 = vset.pattern.permute.xlu0 0
  %141 = vperm.xlu0 %140, %v138
  %v142 = vpop.permute.xlu0 %141
  %v144 = vadd.f32 %v137, %v142
  %v145 = vmax.f32 %v144, 0.0
  %146 = vst [vmem:[%s3] sm:$0xff] %v145
  // Predicated region
  $region14: #{feature_enhancement_dilated_block_apply.4} parent=0 // pred_check
    _
  $region15: #{feature_enhancement_dilated_block_apply.4} parent=0 // pred_check_branch
    %148 = sbr.rel (0) target = $region17
  $region16: #{feature_enhancement_dilated_block_apply.4} parent=0 // pred_region
    _
  $region17: #{feature_enhancement_dilated_block_apply.4} parent=0 // pred_fallthru
    _
  // Predicated region
  $region18: #{feature_enhancement_dilated_block_apply.4} parent=0 // pred_check
    _
  $region19: #{feature_enhancement_dilated_block_apply.4} parent=0 // pred_check_branch
    %150 = sbr.rel (0) target = $region21
  $region20: #{feature_enhancement_dilated_block_apply.4} parent=0 // pred_region
    _
  $region21: #{feature_enhancement_dilated_block_apply.4} parent=0 // pred_fallthru
    _

// kernel: feature_enhancement_dilated_block_apply.5
$region0: #{feature_enhancement_dilated_block_apply.5}
  #allocation0 [shape = 'u32[]', space=smem, size = 0x4, offset = 0x4, fixed_abs, tag = 'smem constant byte address 0x4 - core index']
  #allocation1 [shape = 'u32[72,128]{1,0:T(1,128)}', space=vmem, size = 0x9000, scoped, tag = 'internal scratch']
  %s0 = inlined_call_operand.vmem [shape: f32[4,144,32], index: 0, kind: input, shape index: {}]
  %s1 = inlined_call_operand.vmem [shape: f32[8,144], index: 1, kind: input, shape index: {}]
  %s2 = inlined_call_operand.vmem [shape: f32[8,1], index: 2, kind: input, shape index: {}]
  %s3 = inlined_call_operand.vmem [shape: f32[8,32], index: 3, kind: output, shape index: {}]
  %s4 = sld [smem:[#allocation0]]
  $region22: #{feature_enhancement_dilated_block_apply.5} parent=0
    _
  %s6 = ssub.s32 1, %s4
  %s7 = scalar_select 0, %s6, %s4
  // Predicated region
  $region2: #{feature_enhancement_dilated_block_apply.5} parent=0 // pred_check
    _
  $region3: #{feature_enhancement_dilated_block_apply.5} parent=0 // pred_check_branch
    %9 = sbr.rel (0) target = $region5
  $region4: #{feature_enhancement_dilated_block_apply.5} parent=0 // pred_region
    _
  $region5: #{feature_enhancement_dilated_block_apply.5} parent=0 // pred_fallthru
    _
  // Predicated region
  $region6: #{feature_enhancement_dilated_block_apply.5} parent=0 // pred_check
    _
  $region7: #{feature_enhancement_dilated_block_apply.5} parent=0 // pred_check_branch
    %11 = sbr.rel (0) target = $region9
  $region8: #{feature_enhancement_dilated_block_apply.5} parent=0 // pred_region
    _
  $region9: #{feature_enhancement_dilated_block_apply.5} parent=0 // pred_fallthru
    _
  // Predicated region
  $region10: #{feature_enhancement_dilated_block_apply.5} parent=0 // pred_check
    _
  $region11: #{feature_enhancement_dilated_block_apply.5} parent=0 // pred_check_branch
    %13 = sbr.rel (0) target = $region13
  $region12: #{feature_enhancement_dilated_block_apply.5} parent=0 // pred_region
    _
  $region13: #{feature_enhancement_dilated_block_apply.5} parent=0 // pred_fallthru
    _
  %v14 = vld [vmem:[%s1] sm:$0xff]
  %v15 = vld [vmem:[%s1 + $0x8] sm:$0xff]
  %v16 = vld [vmem:[%s0] sm:$0xff]
  %v17 = vld [vmem:[%s0 + $0x8] sm:$0xff]
  %v18 = vld [vmem:[%s0 + $0x10] sm:$0xff]
  %v19 = vld [vmem:[%s0 + $0x18] sm:$0xff]
  %v20 = vld [vmem:[%s0 + $0x20] sm:$0xff]
  %v21 = vld [vmem:[%s0 + $0x28] sm:$0xff]
  %v22 = vld [vmem:[%s0 + $0x30] sm:$0xff]
  %v23 = vld [vmem:[%s0 + $0x38] sm:$0xff]
  %v24 = vld [vmem:[%s0 + $0x40] sm:$0xff]
  %v25 = vld [vmem:[%s0 + $0x48] sm:$0xff]
  %v26 = vld [vmem:[%s0 + $0x50] sm:$0xff]
  %v27 = vld [vmem:[%s0 + $0x58] sm:$0xff]
  %v28 = vld [vmem:[%s0 + $0x60] sm:$0xff]
  %v29 = vld [vmem:[%s0 + $0x68] sm:$0xff]
  %v30 = vld [vmem:[%s0 + $0x70] sm:$0xff]
  %v31 = vld [vmem:[%s0 + $0x78] sm:$0xff]
  %v32 = vld [vmem:[%s0 + $0x80] sm:$0xff]
  %v33 = vld [vmem:[%s0 + $0x88] sm:$0xff]
  %vm34 = vcmask 130048
  %v36 = vsel %vm34, %v15, 0
  %38 = vmatpush.msra.mxu0 %v31
  %39 = vmatpush.msra.mxu0 %v30
  %40 = vmatpush.msra.mxu0 %v29
  %41 = vmatpush.msra.mxu0 %v28
  %42 = vmatpush.msra.mxu0 %v27
  %43 = vmatpush.msra.mxu0 %v26
  %44 = vmatpush.msra.mxu0 %v25
  %45 = vmatpush.msra.mxu0 %v24
  %46 = vmatpush.msra.mxu0 %v23
  %47 = vmatpush.msra.mxu0 %v22
  %48 = vmatpush.msra.mxu0 %v21
  %49 = vmatpush.msra.mxu0 %v20
  %50 = vmatpush.msra.mxu0 %v19
  %51 = vmatpush.msra.mxu0 %v18
  %52 = vmatpush.msra.mxu0 %v17
  %53 = vmatpush.msra.mxu0 %v16
  %54 = vmatmul.f32.gmra.mxu0 %v14
  %v55 = vpop.f32.mrf.mxu0
  %v56 = vadd.f32 0.0, %v55
  %57 = vdwg.mxu0
  %58 = vmatpush.msra.mxu0 0.0
  %59 = vmatpush.msra.mxu0 0.0
  %60 = vmatpush.msra.mxu0 0.0
  %61 = vmatpush.msra.mxu0 0.0
  %62 = vmatpush.msra.mxu0 0.0
  %63 = vmatpush.msra.mxu0 0.0
  %64 = vmatpush.msra.mxu0 0.0
  %65 = vmatpush.msra.mxu0 0.0
  %66 = vmatpush.msra.mxu0 0.0
  %67 = vmatpush.msra.mxu0 0.0
  %68 = vmatpush.msra.mxu0 0.0
  %69 = vmatpush.msra.mxu0 0.0
  %70 = vmatpush.msra.mxu0 0.0
  %71 = vmatpush.msra.mxu0 0.0
  %72 = vmatpush.msra.mxu0 %v33
  %73 = vmatpush.msra.mxu0 %v32
  %74 = vmatmul.f32.gmra.mxu0 %v36
  %v75 = vpop.f32.mrf.mxu0
  %v76 = vadd.f32 %v56, %v75
  %77 = vdwg.mxu0
  %s78 = scalar_lea.vmem %s0, 144
  %v79 = vld [vmem:[%s78] sm:$0xff]
  %v80 = vld [vmem:[%s78 + $0x8] sm:$0xff]
  %v81 = vld [vmem:[%s78 + $0x10] sm:$0xff]
  %v82 = vld [vmem:[%s78 + $0x18] sm:$0xff]
  %v83 = vld [vmem:[%s78 + $0x20] sm:$0xff]
  %v84 = vld [vmem:[%s78 + $0x28] sm:$0xff]
  %v85 = vld [vmem:[%s78 + $0x30] sm:$0xff]
  %v86 = vld [vmem:[%s78 + $0x38] sm:$0xff]
  %v87 = vld [vmem:[%s78 + $0x40] sm:$0xff]
  %v88 = vld [vmem:[%s78 + $0x48] sm:$0xff]
  %v89 = vld [vmem:[%s78 + $0x50] sm:$0xff]
  %v90 = vld [vmem:[%s78 + $0x58] sm:$0xff]
  %v91 = vld [vmem:[%s78 + $0x60] sm:$0xff]
  %v92 = vld [vmem:[%s78 + $0x68] sm:$0xff]
  %v93 = vld [vmem:[%s78 + $0x70] sm:$0xff]
  %v94 = vld [vmem:[%s78 + $0x78] sm:$0xff]
  %v95 = vld [vmem:[%s78 + $0x80] sm:$0xff]
  %v96 = vld [vmem:[%s78 + $0x88] sm:$0xff]
  %97 = vmatpush.msra.mxu0 %v94
  %98 = vmatpush.msra.mxu0 %v93
  %99 = vmatpush.msra.mxu0 %v92
  %100 = vmatpush.msra.mxu0 %v91
  %101 = vmatpush.msra.mxu0 %v90
  %102 = vmatpush.msra.mxu0 %v89
  %103 = vmatpush.msra.mxu0 %v88
  %104 = vmatpush.msra.mxu0 %v87
  %105 = vmatpush.msra.mxu0 %v86
  %106 = vmatpush.msra.mxu0 %v85
  %107 = vmatpush.msra.mxu0 %v84
  %108 = vmatpush.msra.mxu0 %v83
  %109 = vmatpush.msra.mxu0 %v82
  %110 = vmatpush.msra.mxu0 %v81
  %111 = vmatpush.msra.mxu0 %v80
  %112 = vmatpush.msra.mxu0 %v79
  %113 = vmatmul.f32.gmra.mxu0 %v14
  %v114 = vpop.f32.mrf.mxu0
  %v115 = vadd.f32 0.0, %v114
  %116 = vdwg.mxu0
  %117 = vmatpush.msra.mxu0 0.0
  %118 = vmatpush.msra.mxu0 0.0
  %119 = vmatpush.msra.mxu0 0.0
  %120 = vmatpush.msra.mxu0 0.0
  %121 = vmatpush.msra.mxu0 0.0
  %122 = vmatpush.msra.mxu0 0.0
  %123 = vmatpush.msra.mxu0 0.0
  %124 = vmatpush.msra.mxu0 0.0
  %125 = vmatpush.msra.mxu0 0.0
  %126 = vmatpush.msra.mxu0 0.0
  %127 = vmatpush.msra.mxu0 0.0
  %128 = vmatpush.msra.mxu0 0.0
  %129 = vmatpush.msra.mxu0 0.0
  %130 = vmatpush.msra.mxu0 0.0
  %131 = vmatpush.msra.mxu0 %v96
  %132 = vmatpush.msra.mxu0 %v95
  %133 = vmatmul.f32.gmra.mxu0 %v36
  %v134 = vpop.f32.mrf.mxu0
  %v135 = vadd.f32 %v115, %v134
  %136 = vdwg.mxu0
  %v137 = vmax.f32 %v76, %v135
  %s138 = scalar_lea.vmem %s0, 288
  %v139 = vld [vmem:[%s138] sm:$0xff]
  %v140 = vld [vmem:[%s138 + $0x8] sm:$0xff]
  %v141 = vld [vmem:[%s138 + $0x10] sm:$0xff]
  %v142 = vld [vmem:[%s138 + $0x18] sm:$0xff]
  %v143 = vld [vmem:[%s138 + $0x20] sm:$0xff]
  %v144 = vld [vmem:[%s138 + $0x28] sm:$0xff]
  %v145 = vld [vmem:[%s138 + $0x30] sm:$0xff]
  %v146 = vld [vmem:[%s138 + $0x38] sm:$0xff]
  %v147 = vld [vmem:[%s138 + $0x40] sm:$0xff]
  %v148 = vld [vmem:[%s138 + $0x48] sm:$0xff]
  %v149 = vld [vmem:[%s138 + $0x50] sm:$0xff]
  %v150 = vld [vmem:[%s138 + $0x58] sm:$0xff]
  %v151 = vld [vmem:[%s138 + $0x60] sm:$0xff]
  %v152 = vld [vmem:[%s138 + $0x68] sm:$0xff]
  %v153 = vld [vmem:[%s138 + $0x70] sm:$0xff]
  %v154 = vld [vmem:[%s138 + $0x78] sm:$0xff]
  %v155 = vld [vmem:[%s138 + $0x80] sm:$0xff]
  %v156 = vld [vmem:[%s138 + $0x88] sm:$0xff]
  %157 = vmatpush.msra.mxu0 %v154
  %158 = vmatpush.msra.mxu0 %v153
  %159 = vmatpush.msra.mxu0 %v152
  %160 = vmatpush.msra.mxu0 %v151
  %161 = vmatpush.msra.mxu0 %v150
  %162 = vmatpush.msra.mxu0 %v149
  %163 = vmatpush.msra.mxu0 %v148
  %164 = vmatpush.msra.mxu0 %v147
  %165 = vmatpush.msra.mxu0 %v146
  %166 = vmatpush.msra.mxu0 %v145
  %167 = vmatpush.msra.mxu0 %v144
  %168 = vmatpush.msra.mxu0 %v143
  %169 = vmatpush.msra.mxu0 %v142
  %170 = vmatpush.msra.mxu0 %v141
  %171 = vmatpush.msra.mxu0 %v140
  %172 = vmatpush.msra.mxu0 %v139
  %173 = vmatmul.f32.gmra.mxu0 %v14
  %v174 = vpop.f32.mrf.mxu0
  %v175 = vadd.f32 0.0, %v174
  %176 = vdwg.mxu0
  %177 = vmatpush.msra.mxu0 0.0
  %178 = vmatpush.msra.mxu0 0.0
  %179 = vmatpush.msra.mxu0 0.0
  %180 = vmatpush.msra.mxu0 0.0
  %181 = vmatpush.msra.mxu0 0.0
  %182 = vmatpush.msra.mxu0 0.0
  %183 = vmatpush.msra.mxu0 0.0
  %184 = vmatpush.msra.mxu0 0.0
  %185 = vmatpush.msra.mxu0 0.0
  %186 = vmatpush.msra.mxu0 0.0
  %187 = vmatpush.msra.mxu0 0.0
  %188 = vmatpush.msra.mxu0 0.0
  %189 = vmatpush.msra.mxu0 0.0
  %190 = vmatpush.msra.mxu0 0.0
  %191 = vmatpush.msra.mxu0 %v156
  %192 = vmatpush.msra.mxu0 %v155
  %193 = vmatmul.f32.gmra.mxu0 %v36
  %v194 = vpop.f32.mrf.mxu0
  %v195 = vadd.f32 %v175, %v194
  %196 = vdwg.mxu0
  %v197 = vmax.f32 %v137, %v195
  %s198 = scalar_lea.vmem %s0, 432
  %v199 = vld [vmem:[%s198] sm:$0xff]
  %v200 = vld [vmem:[%s198 + $0x8] sm:$0xff]
  %v201 = vld [vmem:[%s198 + $0x10] sm:$0xff]
  %v202 = vld [vmem:[%s198 + $0x18] sm:$0xff]
  %v203 = vld [vmem:[%s198 + $0x20] sm:$0xff]
  %v204 = vld [vmem:[%s198 + $0x28] sm:$0xff]
  %v205 = vld [vmem:[%s198 + $0x30] sm:$0xff]
  %v206 = vld [vmem:[%s198 + $0x38] sm:$0xff]
  %v207 = vld [vmem:[%s198 + $0x40] sm:$0xff]
  %v208 = vld [vmem:[%s198 + $0x48] sm:$0xff]
  %v209 = vld [vmem:[%s198 + $0x50] sm:$0xff]
  %v210 = vld [vmem:[%s198 + $0x58] sm:$0xff]
  %v211 = vld [vmem:[%s198 + $0x60] sm:$0xff]
  %v212 = vld [vmem:[%s198 + $0x68] sm:$0xff]
  %v213 = vld [vmem:[%s198 + $0x70] sm:$0xff]
  %v214 = vld [vmem:[%s198 + $0x78] sm:$0xff]
  %v215 = vld [vmem:[%s198 + $0x80] sm:$0xff]
  %v216 = vld [vmem:[%s198 + $0x88] sm:$0xff]
  %217 = vmatpush.msra.mxu0 %v214
  %218 = vmatpush.msra.mxu0 %v213
  %219 = vmatpush.msra.mxu0 %v212
  %220 = vmatpush.msra.mxu0 %v211
  %221 = vmatpush.msra.mxu0 %v210
  %222 = vmatpush.msra.mxu0 %v209
  %223 = vmatpush.msra.mxu0 %v208
  %224 = vmatpush.msra.mxu0 %v207
  %225 = vmatpush.msra.mxu0 %v206
  %226 = vmatpush.msra.mxu0 %v205
  %227 = vmatpush.msra.mxu0 %v204
  %228 = vmatpush.msra.mxu0 %v203
  %229 = vmatpush.msra.mxu0 %v202
  %230 = vmatpush.msra.mxu0 %v201
  %231 = vmatpush.msra.mxu0 %v200
  %232 = vmatpush.msra.mxu0 %v199
  %233 = vmatmul.f32.gmra.mxu0 %v14
  %v234 = vpop.f32.mrf.mxu0
  %v235 = vadd.f32 0.0, %v234
  %236 = vdwg.mxu0
  %237 = vmatpush.msra.mxu0 0.0
  %238 = vmatpush.msra.mxu0 0.0
  %239 = vmatpush.msra.mxu0 0.0
  %240 = vmatpush.msra.mxu0 0.0
  %241 = vmatpush.msra.mxu0 0.0
  %242 = vmatpush.msra.mxu0 0.0
  %243 = vmatpush.msra.mxu0 0.0
  %244 = vmatpush.msra.mxu0 0.0
  %245 = vmatpush.msra.mxu0 0.0
  %246 = vmatpush.msra.mxu0 0.0
  %247 = vmatpush.msra.mxu0 0.0
  %248 = vmatpush.msra.mxu0 0.0
  %249 = vmatpush.msra.mxu0 0.0
  %250 = vmatpush.msra.mxu0 0.0
  %251 = vmatpush.msra.mxu0 %v216
  %252 = vmatpush.msra.mxu0 %v215
  %253 = vmatmul.f32.gmra.mxu0 %v36
  %v254 = vpop.f32.mrf.mxu0
  %v255 = vadd.f32 %v235, %v254
  %256 = vdwg.mxu0
  %v257 = vmax.f32 %v197, %v255
  %v258 = vld [vmem:[%s2] sm:$0xff]
  %260 = vset.pattern.permute.xlu0 0
  %261 = vperm.xlu0 %260, %v258
  %v262 = vpop.permute.xlu0 %261
  %v264 = vadd.f32 %v257, %v262
  %v265 = vmax.f32 %v264, 0.0
  %vm266 = vcmask 261120
  %267 = vst.msk [vmem:[%s3] sm:$0xff] %vm266, %v265
  // Predicated region
  $region14: #{feature_enhancement_dilated_block_apply.5} parent=0 // pred_check
    _
  $region15: #{feature_enhancement_dilated_block_apply.5} parent=0 // pred_check_branch
    %269 = sbr.rel (0) target = $region17
  $region16: #{feature_enhancement_dilated_block_apply.5} parent=0 // pred_region
    _
  $region17: #{feature_enhancement_dilated_block_apply.5} parent=0 // pred_fallthru
    _
  // Predicated region
  $region18: #{feature_enhancement_dilated_block_apply.5} parent=0 // pred_check
    _
  $region19: #{feature_enhancement_dilated_block_apply.5} parent=0 // pred_check_branch
    %271 = sbr.rel (0) target = $region21
  $region20: #{feature_enhancement_dilated_block_apply.5} parent=0 // pred_region
    _
  $region21: #{feature_enhancement_dilated_block_apply.5} parent=0 // pred_fallthru
    _

// kernel: feature_enhancement_dilated_block_apply.6
$region0: #{feature_enhancement_dilated_block_apply.6}
  #allocation0 [shape = 'u32[]', space=smem, size = 0x4, offset = 0x4, fixed_abs, tag = 'smem constant byte address 0x4 - core index']
  #allocation1 [shape = 'u32[72,128]{1,0:T(1,128)}', space=vmem, size = 0x9000, scoped, tag = 'internal scratch']
  %s0 = inlined_call_operand.vmem [shape: f32[4,144,8], index: 0, kind: input, shape index: {}]
  %s1 = inlined_call_operand.vmem [shape: f32[8,144], index: 1, kind: input, shape index: {}]
  %s2 = inlined_call_operand.vmem [shape: f32[8,1], index: 2, kind: input, shape index: {}]
  %s3 = inlined_call_operand.vmem [shape: f32[8,8], index: 3, kind: output, shape index: {}]
  %s4 = sld [smem:[#allocation0]]
  $region22: #{feature_enhancement_dilated_block_apply.6} parent=0
    _
  %s6 = ssub.s32 1, %s4
  %s7 = scalar_select 0, %s6, %s4
  // Predicated region
  $region2: #{feature_enhancement_dilated_block_apply.6} parent=0 // pred_check
    _
  $region3: #{feature_enhancement_dilated_block_apply.6} parent=0 // pred_check_branch
    %9 = sbr.rel (0) target = $region5
  $region4: #{feature_enhancement_dilated_block_apply.6} parent=0 // pred_region
    _
  $region5: #{feature_enhancement_dilated_block_apply.6} parent=0 // pred_fallthru
    _
  // Predicated region
  $region6: #{feature_enhancement_dilated_block_apply.6} parent=0 // pred_check
    _
  $region7: #{feature_enhancement_dilated_block_apply.6} parent=0 // pred_check_branch
    %11 = sbr.rel (0) target = $region9
  $region8: #{feature_enhancement_dilated_block_apply.6} parent=0 // pred_region
    _
  $region9: #{feature_enhancement_dilated_block_apply.6} parent=0 // pred_fallthru
    _
  // Predicated region
  $region10: #{feature_enhancement_dilated_block_apply.6} parent=0 // pred_check
    _
  $region11: #{feature_enhancement_dilated_block_apply.6} parent=0 // pred_check_branch
    %13 = sbr.rel (0) target = $region13
  $region12: #{feature_enhancement_dilated_block_apply.6} parent=0 // pred_region
    _
  $region13: #{feature_enhancement_dilated_block_apply.6} parent=0 // pred_fallthru
    _
  %v14 = vld [vmem:[%s1] sm:$0xff]
  %v15 = vld [vmem:[%s1 + $0x8] sm:$0xff]
  %v16 = vld [vmem:[%s0] sm:$0xff]
  %v17 = vld [vmem:[%s0 + $0x8] sm:$0xff]
  %v18 = vld [vmem:[%s0 + $0x10] sm:$0xff]
  %v19 = vld [vmem:[%s0 + $0x18] sm:$0xff]
  %v20 = vld [vmem:[%s0 + $0x20] sm:$0xff]
  %v21 = vld [vmem:[%s0 + $0x28] sm:$0xff]
  %v22 = vld [vmem:[%s0 + $0x30] sm:$0xff]
  %v23 = vld [vmem:[%s0 + $0x38] sm:$0xff]
  %v24 = vld [vmem:[%s0 + $0x40] sm:$0xff]
  %v25 = vld [vmem:[%s0 + $0x48] sm:$0xff]
  %v26 = vld [vmem:[%s0 + $0x50] sm:$0xff]
  %v27 = vld [vmem:[%s0 + $0x58] sm:$0xff]
  %v28 = vld [vmem:[%s0 + $0x60] sm:$0xff]
  %v29 = vld [vmem:[%s0 + $0x68] sm:$0xff]
  %v30 = vld [vmem:[%s0 + $0x70] sm:$0xff]
  %v31 = vld [vmem:[%s0 + $0x78] sm:$0xff]
  %v32 = vld [vmem:[%s0 + $0x80] sm:$0xff]
  %v33 = vld [vmem:[%s0 + $0x88] sm:$0xff]
  %vm34 = vcmask 130048
  %v36 = vsel %vm34, %v15, 0
  %38 = vmatpush.msra.mxu0 %v31
  %39 = vmatpush.msra.mxu0 %v30
  %40 = vmatpush.msra.mxu0 %v29
  %41 = vmatpush.msra.mxu0 %v28
  %42 = vmatpush.msra.mxu0 %v27
  %43 = vmatpush.msra.mxu0 %v26
  %44 = vmatpush.msra.mxu0 %v25
  %45 = vmatpush.msra.mxu0 %v24
  %46 = vmatpush.msra.mxu0 %v23
  %47 = vmatpush.msra.mxu0 %v22
  %48 = vmatpush.msra.mxu0 %v21
  %49 = vmatpush.msra.mxu0 %v20
  %50 = vmatpush.msra.mxu0 %v19
  %51 = vmatpush.msra.mxu0 %v18
  %52 = vmatpush.msra.mxu0 %v17
  %53 = vmatpush.msra.mxu0 %v16
  %54 = vmatmul.f32.gmra.mxu0 %v14
  %v55 = vpop.f32.mrf.mxu0
  %v56 = vadd.f32 0.0, %v55
  %57 = vdwg.mxu0
  %58 = vmatpush.msra.mxu0 0.0
  %59 = vmatpush.msra.mxu0 0.0
  %60 = vmatpush.msra.mxu0 0.0
  %61 = vmatpush.msra.mxu0 0.0
  %62 = vmatpush.msra.mxu0 0.0
  %63 = vmatpush.msra.mxu0 0.0
  %64 = vmatpush.msra.mxu0 0.0
  %65 = vmatpush.msra.mxu0 0.0
  %66 = vmatpush.msra.mxu0 0.0
  %67 = vmatpush.msra.mxu0 0.0
  %68 = vmatpush.msra.mxu0 0.0
  %69 = vmatpush.msra.mxu0 0.0
  %70 = vmatpush.msra.mxu0 0.0
  %71 = vmatpush.msra.mxu0 0.0
  %72 = vmatpush.msra.mxu0 %v33
  %73 = vmatpush.msra.mxu0 %v32
  %74 = vmatmul.f32.gmra.mxu0 %v36
  %v75 = vpop.f32.mrf.mxu0
  %v76 = vadd.f32 %v56, %v75
  %77 = vdwg.mxu0
  %s78 = scalar_lea.vmem %s0, 144
  %v79 = vld [vmem:[%s78] sm:$0xff]
  %v80 = vld [vmem:[%s78 + $0x8] sm:$0xff]
  %v81 = vld [vmem:[%s78 + $0x10] sm:$0xff]
  %v82 = vld [vmem:[%s78 + $0x18] sm:$0xff]
  %v83 = vld [vmem:[%s78 + $0x20] sm:$0xff]
  %v84 = vld [vmem:[%s78 + $0x28] sm:$0xff]
  %v85 = vld [vmem:[%s78 + $0x30] sm:$0xff]
  %v86 = vld [vmem:[%s78 + $0x38] sm:$0xff]
  %v87 = vld [vmem:[%s78 + $0x40] sm:$0xff]
  %v88 = vld [vmem:[%s78 + $0x48] sm:$0xff]
  %v89 = vld [vmem:[%s78 + $0x50] sm:$0xff]
  %v90 = vld [vmem:[%s78 + $0x58] sm:$0xff]
  %v91 = vld [vmem:[%s78 + $0x60] sm:$0xff]
  %v92 = vld [vmem:[%s78 + $0x68] sm:$0xff]
  %v93 = vld [vmem:[%s78 + $0x70] sm:$0xff]
  %v94 = vld [vmem:[%s78 + $0x78] sm:$0xff]
  %v95 = vld [vmem:[%s78 + $0x80] sm:$0xff]
  %v96 = vld [vmem:[%s78 + $0x88] sm:$0xff]
  %97 = vmatpush.msra.mxu0 %v94
  %98 = vmatpush.msra.mxu0 %v93
  %99 = vmatpush.msra.mxu0 %v92
  %100 = vmatpush.msra.mxu0 %v91
  %101 = vmatpush.msra.mxu0 %v90
  %102 = vmatpush.msra.mxu0 %v89
  %103 = vmatpush.msra.mxu0 %v88
  %104 = vmatpush.msra.mxu0 %v87
  %105 = vmatpush.msra.mxu0 %v86
  %106 = vmatpush.msra.mxu0 %v85
  %107 = vmatpush.msra.mxu0 %v84
  %108 = vmatpush.msra.mxu0 %v83
  %109 = vmatpush.msra.mxu0 %v82
  %110 = vmatpush.msra.mxu0 %v81
  %111 = vmatpush.msra.mxu0 %v80
  %112 = vmatpush.msra.mxu0 %v79
  %113 = vmatmul.f32.gmra.mxu0 %v14
  %v114 = vpop.f32.mrf.mxu0
  %v115 = vadd.f32 0.0, %v114
  %116 = vdwg.mxu0
  %117 = vmatpush.msra.mxu0 0.0
  %118 = vmatpush.msra.mxu0 0.0
  %119 = vmatpush.msra.mxu0 0.0
  %120 = vmatpush.msra.mxu0 0.0
  %121 = vmatpush.msra.mxu0 0.0
  %122 = vmatpush.msra.mxu0 0.0
  %123 = vmatpush.msra.mxu0 0.0
  %124 = vmatpush.msra.mxu0 0.0
  %125 = vmatpush.msra.mxu0 0.0
  %126 = vmatpush.msra.mxu0 0.0
  %127 = vmatpush.msra.mxu0 0.0
  %128 = vmatpush.msra.mxu0 0.0
  %129 = vmatpush.msra.mxu0 0.0
  %130 = vmatpush.msra.mxu0 0.0
  %131 = vmatpush.msra.mxu0 %v96
  %132 = vmatpush.msra.mxu0 %v95
  %133 = vmatmul.f32.gmra.mxu0 %v36
  %v134 = vpop.f32.mrf.mxu0
  %v135 = vadd.f32 %v115, %v134
  %136 = vdwg.mxu0
  %v137 = vmax.f32 %v76, %v135
  %s138 = scalar_lea.vmem %s0, 288
  %v139 = vld [vmem:[%s138] sm:$0xff]
  %v140 = vld [vmem:[%s138 + $0x8] sm:$0xff]
  %v141 = vld [vmem:[%s138 + $0x10] sm:$0xff]
  %v142 = vld [vmem:[%s138 + $0x18] sm:$0xff]
  %v143 = vld [vmem:[%s138 + $0x20] sm:$0xff]
  %v144 = vld [vmem:[%s138 + $0x28] sm:$0xff]
  %v145 = vld [vmem:[%s138 + $0x30] sm:$0xff]
  %v146 = vld [vmem:[%s138 + $0x38] sm:$0xff]
  %v147 = vld [vmem:[%s138 + $0x40] sm:$0xff]
  %v148 = vld [vmem:[%s138 + $0x48] sm:$0xff]
  %v149 = vld [vmem:[%s138 + $0x50] sm:$0xff]
  %v150 = vld [vmem:[%s138 + $0x58] sm:$0xff]
  %v151 = vld [vmem:[%s138 + $0x60] sm:$0xff]
  %v152 = vld [vmem:[%s138 + $0x68] sm:$0xff]
  %v153 = vld [vmem:[%s138 + $0x70] sm:$0xff]
  %v154 = vld [vmem:[%s138 + $0x78] sm:$0xff]
  %v155 = vld [vmem:[%s138 + $0x80] sm:$0xff]
  %v156 = vld [vmem:[%s138 + $0x88] sm:$0xff]
  %157 = vmatpush.msra.mxu0 %v154
  %158 = vmatpush.msra.mxu0 %v153
  %159 = vmatpush.msra.mxu0 %v152
  %160 = vmatpush.msra.mxu0 %v151
  %161 = vmatpush.msra.mxu0 %v150
  %162 = vmatpush.msra.mxu0 %v149
  %163 = vmatpush.msra.mxu0 %v148
  %164 = vmatpush.msra.mxu0 %v147
  %165 = vmatpush.msra.mxu0 %v146
  %166 = vmatpush.msra.mxu0 %v145
  %167 = vmatpush.msra.mxu0 %v144
  %168 = vmatpush.msra.mxu0 %v143
  %169 = vmatpush.msra.mxu0 %v142
  %170 = vmatpush.msra.mxu0 %v141
  %171 = vmatpush.msra.mxu0 %v140
  %172 = vmatpush.msra.mxu0 %v139
  %173 = vmatmul.f32.gmra.mxu0 %v14
  %v174 = vpop.f32.mrf.mxu0
  %v175 = vadd.f32 0.0, %v174
  %176 = vdwg.mxu0
  %177 = vmatpush.msra.mxu0 0.0
  %178 = vmatpush.msra.mxu0 0.0
  %179 = vmatpush.msra.mxu0 0.0
  %180 = vmatpush.msra.mxu0 0.0
  %181 = vmatpush.msra.mxu0 0.0
  %182 = vmatpush.msra.mxu0 0.0
  %183 = vmatpush.msra.mxu0 0.0
  %184 = vmatpush.msra.mxu0 0.0
  %185 = vmatpush.msra.mxu0 0.0
  %186 = vmatpush.msra.mxu0 0.0
  %187 = vmatpush.msra.mxu0 0.0
  %188 = vmatpush.msra.mxu0 0.0
  %189 = vmatpush.msra.mxu0 0.0
  %190 = vmatpush.msra.mxu0 0.0
  %191 = vmatpush.msra.mxu0 %v156
  %192 = vmatpush.msra.mxu0 %v155
  %193 = vmatmul.f32.gmra.mxu0 %v36
  %v194 = vpop.f32.mrf.mxu0
  %v195 = vadd.f32 %v175, %v194
  %196 = vdwg.mxu0
  %v197 = vmax.f32 %v137, %v195
  %s198 = scalar_lea.vmem %s0, 432
  %v199 = vld [vmem:[%s198] sm:$0xff]
  %v200 = vld [vmem:[%s198 + $0x8] sm:$0xff]
  %v201 = vld [vmem:[%s198 + $0x10] sm:$0xff]
  %v202 = vld [vmem:[%s198 + $0x18] sm:$0xff]
  %v203 = vld [vmem:[%s198 + $0x20] sm:$0xff]
  %v204 = vld [vmem:[%s198 + $0x28] sm:$0xff]
  %v205 = vld [vmem:[%s198 + $0x30] sm:$0xff]
  %v206 = vld [vmem:[%s198 + $0x38] sm:$0xff]
  %v207 = vld [vmem:[%s198 + $0x40] sm:$0xff]
  %v208 = vld [vmem:[%s198 + $0x48] sm:$0xff]
  %v209 = vld [vmem:[%s198 + $0x50] sm:$0xff]
  %v210 = vld [vmem:[%s198 + $0x58] sm:$0xff]
  %v211 = vld [vmem:[%s198 + $0x60] sm:$0xff]
  %v212 = vld [vmem:[%s198 + $0x68] sm:$0xff]
  %v213 = vld [vmem:[%s198 + $0x70] sm:$0xff]
  %v214 = vld [vmem:[%s198 + $0x78] sm:$0xff]
  %v215 = vld [vmem:[%s198 + $0x80] sm:$0xff]
  %v216 = vld [vmem:[%s198 + $0x88] sm:$0xff]
  %217 = vmatpush.msra.mxu0 %v214
  %218 = vmatpush.msra.mxu0 %v213
  %219 = vmatpush.msra.mxu0 %v212
  %220 = vmatpush.msra.mxu0 %v211
  %221 = vmatpush.msra.mxu0 %v210
  %222 = vmatpush.msra.mxu0 %v209
  %223 = vmatpush.msra.mxu0 %v208
  %224 = vmatpush.msra.mxu0 %v207
  %225 = vmatpush.msra.mxu0 %v206
  %226 = vmatpush.msra.mxu0 %v205
  %227 = vmatpush.msra.mxu0 %v204
  %228 = vmatpush.msra.mxu0 %v203
  %229 = vmatpush.msra.mxu0 %v202
  %230 = vmatpush.msra.mxu0 %v201
  %231 = vmatpush.msra.mxu0 %v200
  %232 = vmatpush.msra.mxu0 %v199
  %233 = vmatmul.f32.gmra.mxu0 %v14
  %v234 = vpop.f32.mrf.mxu0
  %v235 = vadd.f32 0.0, %v234
  %236 = vdwg.mxu0
  %237 = vmatpush.msra.mxu0 0.0
  %238 = vmatpush.msra.mxu0 0.0
  %239 = vmatpush.msra.mxu0 0.0
  %240 = vmatpush.msra.mxu0 0.0
  %241 = vmatpush.msra.mxu0 0.0
  %242 = vmatpush.msra.mxu0 0.0
  %243 = vmatpush.msra.mxu0 0.0
  %244 = vmatpush.msra.mxu0 0.0
  %245 = vmatpush.msra.mxu0 0.0
  %246 = vmatpush.msra.mxu0 0.0
  %247 = vmatpush.msra.mxu0 0.0
  %248 = vmatpush.msra.mxu0 0.0
  %249 = vmatpush.msra.mxu0 0.0
  %250 = vmatpush.msra.mxu0 0.0
  %251 = vmatpush.msra.mxu0 %v216
  %252 = vmatpush.msra.mxu0 %v215
  %253 = vmatmul.f32.gmra.mxu0 %v36
  %v254 = vpop.f32.mrf.mxu0
  %v255 = vadd.f32 %v235, %v254
  %256 = vdwg.mxu0
  %v257 = vmax.f32 %v197, %v255
  %v258 = vld [vmem:[%s2] sm:$0xff]
  %260 = vset.pattern.permute.xlu0 0
  %261 = vperm.xlu0 %260, %v258
  %v262 = vpop.permute.xlu0 %261
  %v264 = vadd.f32 %v257, %v262
  %v265 = vmax.f32 %v264, 0.0
  %vm266 = vcmask 64512
  %267 = vst.msk [vmem:[%s3] sm:$0xff] %vm266, %v265
  // Predicated region
  $region14: #{feature_enhancement_dilated_block_apply.6} parent=0 // pred_check
    _
  $region15: #{feature_enhancement_dilated_block_apply.6} parent=0 // pred_check_branch
    %269 = sbr.rel (0) target = $region17
  $region16: #{feature_enhancement_dilated_block_apply.6} parent=0 // pred_region
    _
  $region17: #{feature_enhancement_dilated_block_apply.6} parent=0 // pred_fallthru
    _
  // Predicated region
  $region18: #{feature_enhancement_dilated_block_apply.6} parent=0 // pred_check
    _
  $region19: #{feature_enhancement_dilated_block_apply.6} parent=0 // pred_check_branch
    %271 = sbr.rel (0) target = $region21
  $region20: #{feature_enhancement_dilated_block_apply.6} parent=0 // pred_region
    _
  $region21: #{feature_enhancement_dilated_block_apply.6} parent=0 // pred_fallthru
    _

// kernel: feature_enhancement_dilated_block_apply.7
$region0: #{feature_enhancement_dilated_block_apply.7}
  #allocation0 [shape = 'u32[]', space=smem, size = 0x4, offset = 0x4, fixed_abs, tag = 'smem constant byte address 0x4 - core index']
  #allocation1 [shape = 'u32[72,128]{1,0:T(1,128)}', space=vmem, size = 0x9000, scoped, tag = 'internal scratch']
  #allocation2 [shape = 'f32[8,8]{1,0:T(8,128)}', space=vmem, size = 0x1000, scoped, tag = 'scratch operand']
  #allocation3 [shape = 'f32[8,32]{1,0:T(8,128)}', space=vmem, size = 0x1000, scoped, tag = 'scratch operand']
  #allocation4 [shape = 'f32[2,4,4,16]{3,2,1,0:T(4,128)}', space=vmem, size = 0x4000, scoped, tag = 'scratch operand']
  #allocation5 [shape = 'f32[8,144]{1,0:T(8,128)}', space=vmem, size = 0x2000, scoped, tag = 'scratch operand']
  #allocation6 [shape = 'f32[2,4,4,32]{3,2,1,0:T(4,128)}', space=vmem, size = 0x4000, scoped, tag = 'scratch operand']
  #allocation7 [shape = 'f32[8,288]{1,0:T(8,128)}', space=vmem, size = 0x3000, scoped, tag = 'scratch operand']
  %s0 = inlined_call_operand.vmem [shape: f32[8,8], index: 0, kind: input, shape index: {}]
  %s1 = inlined_call_operand.vmem [shape: f32[2,2,2,8], index: 1, kind: input, shape index: {}]
  %s2 = inlined_call_operand.vmem [shape: f32[144,8], index: 2, kind: input, shape index: {}]
  %s3 = inlined_call_operand.vmem [shape: f32[1,8], index: 3, kind: input, shape index: {}]
  %s4 = inlined_call_operand.vmem [shape: f32[8,8], index: 4, kind: input, shape index: {}]
  %s5 = inlined_call_operand.vmem [shape: f32[1,8], index: 5, kind: input, shape index: {}]
  %s6 = inlined_call_operand.vmem [shape: f32[8,8], index: 6, kind: input, shape index: {}]
  %s7 = inlined_call_operand.vmem [shape: f32[1,8], index: 7, kind: input, shape index: {}]
  %s8 = inlined_call_operand.vmem [shape: f32[8,8], index: 8, kind: input, shape index: {}]
  %s9 = inlined_call_operand.vmem [shape: f32[1,8], index: 9, kind: input, shape index: {}]
  %s10 = inlined_call_operand.vmem [shape: f32[8,8], index: 10, kind: input, shape index: {}]
  %s11 = inlined_call_operand.vmem [shape: f32[1,8], index: 11, kind: input, shape index: {}]
  %s12 = inlined_call_operand.vmem [shape: f32[288,8], index: 12, kind: input, shape index: {}]
  %s13 = inlined_call_operand.vmem [shape: f32[1,8], index: 13, kind: input, shape index: {}]
  %s14 = inlined_call_operand.vmem [shape: f32[8,8], index: 14, kind: input, shape index: {}]
  %s15 = inlined_call_operand.vmem [shape: f32[1,8], index: 15, kind: input, shape index: {}]
  %s16 = inlined_call_operand.hbm [shape: f32[8,8], index: 16, kind: output, shape index: {}]
  %s17 = sld [smem:[#allocation0]]
  $region74: #{feature_enhancement_dilated_block_apply.7} parent=0
    _
  %s19 = ssub.s32 1, %s17
  %s20 = scalar_select 0, %s19, %s17
  $region1: #{feature_enhancement_dilated_block_apply.7} parent=0
    #allocation8 [shape = 'u8[4096]{0}', space=vmem, size = 0x1000, scoped, tag = 'output window, operand 0, single buffered']
    #allocation9 [shape = 's32[1]{0}', space=sflag, size = 0x4, scoped, tag = 'scoped memory for feature_enhancement_dilated_block_apply.7']
    %21 = vsyncpa [#allocation9], 0
    // Predicated region
    $region2: #{feature_enhancement_dilated_block_apply.7} parent=1 // pred_check
      _
    $region3: #{feature_enhancement_dilated_block_apply.7} parent=1 // pred_check_branch
      %23 = sbr.rel (0) target = $region5
    $region4: #{feature_enhancement_dilated_block_apply.7} parent=1 // pred_region
      _
    $region5: #{feature_enhancement_dilated_block_apply.7} parent=1 // pred_fallthru
      _
    // Predicated region
    $region6: #{feature_enhancement_dilated_block_apply.7} parent=1 // pred_check
      _
    $region7: #{feature_enhancement_dilated_block_apply.7} parent=1 // pred_check_branch
      %25 = sbr.rel (0) target = $region9
    $region8: #{feature_enhancement_dilated_block_apply.7} parent=1 // pred_region
      _
    $region9: #{feature_enhancement_dilated_block_apply.7} parent=1 // pred_fallthru
      _
    // Predicated region
    $region10: #{feature_enhancement_dilated_block_apply.7} parent=1 // pred_check
      _
    $region11: #{feature_enhancement_dilated_block_apply.7} parent=1 // pred_check_branch
      %27 = sbr.rel (0) target = $region13
    $region12: #{feature_enhancement_dilated_block_apply.7} parent=1 // pred_region
      _
    $region13: #{feature_enhancement_dilated_block_apply.7} parent=1 // pred_fallthru
      _
    // Predicated region
    $region14: #{feature_enhancement_dilated_block_apply.7} parent=1 // pred_check
      _
    $region15: #{feature_enhancement_dilated_block_apply.7} parent=1 // pred_check_branch
      %29 = sbr.rel (0) target = $region17
    $region16: #{feature_enhancement_dilated_block_apply.7} parent=1 // pred_region
      _
    $region17: #{feature_enhancement_dilated_block_apply.7} parent=1 // pred_fallthru
      _
    // Predicated region
    $region18: #{feature_enhancement_dilated_block_apply.7} parent=1 // pred_check
      _
    $region19: #{feature_enhancement_dilated_block_apply.7} parent=1 // pred_check_branch
      %31 = sbr.rel (0) target = $region21
    $region20: #{feature_enhancement_dilated_block_apply.7} parent=1 // pred_region
      _
    $region21: #{feature_enhancement_dilated_block_apply.7} parent=1 // pred_fallthru
      _
    // Predicated region
    $region22: #{feature_enhancement_dilated_block_apply.7} parent=1 // pred_check
      _
    $region23: #{feature_enhancement_dilated_block_apply.7} parent=1 // pred_check_branch
      %33 = sbr.rel (0) target = $region25
    $region24: #{feature_enhancement_dilated_block_apply.7} parent=1 // pred_region
      _
    $region25: #{feature_enhancement_dilated_block_apply.7} parent=1 // pred_fallthru
      _
    // Predicated region
    $region26: #{feature_enhancement_dilated_block_apply.7} parent=1 // pred_check
      _
    $region27: #{feature_enhancement_dilated_block_apply.7} parent=1 // pred_check_branch
      %35 = sbr.rel (0) target = $region29
    $region28: #{feature_enhancement_dilated_block_apply.7} parent=1 // pred_region
      _
    $region29: #{feature_enhancement_dilated_block_apply.7} parent=1 // pred_fallthru
      _
    // Predicated region
    $region30: #{feature_enhancement_dilated_block_apply.7} parent=1 // pred_check
      _
    $region31: #{feature_enhancement_dilated_block_apply.7} parent=1 // pred_check_branch
      %37 = sbr.rel (0) target = $region33
    $region32: #{feature_enhancement_dilated_block_apply.7} parent=1 // pred_region
      _
    $region33: #{feature_enhancement_dilated_block_apply.7} parent=1 // pred_fallthru
      _
    // Predicated region
    $region34: #{feature_enhancement_dilated_block_apply.7} parent=1 // pred_check
      _
    $region35: #{feature_enhancement_dilated_block_apply.7} parent=1 // pred_check_branch
      %39 = sbr.rel (0) target = $region37
    $region36: #{feature_enhancement_dilated_block_apply.7} parent=1 // pred_region
      _
    $region37: #{feature_enhancement_dilated_block_apply.7} parent=1 // pred_fallthru
      _
    // Predicated region
    $region38: #{feature_enhancement_dilated_block_apply.7} parent=1 // pred_check
      _
    $region39: #{feature_enhancement_dilated_block_apply.7} parent=1 // pred_check_branch
      %41 = sbr.rel (0) target = $region41
    $region40: #{feature_enhancement_dilated_block_apply.7} parent=1 // pred_region
      _
    $region41: #{feature_enhancement_dilated_block_apply.7} parent=1 // pred_fallthru
      _
    // Predicated region
    $region42: #{feature_enhancement_dilated_block_apply.7} parent=1 // pred_check
      _
    $region43: #{feature_enhancement_dilated_block_apply.7} parent=1 // pred_check_branch
      %43 = sbr.rel (0) target = $region45
    $region44: #{feature_enhancement_dilated_block_apply.7} parent=1 // pred_region
      _
    $region45: #{feature_enhancement_dilated_block_apply.7} parent=1 // pred_fallthru
      _
    // Predicated region
    $region46: #{feature_enhancement_dilated_block_apply.7} parent=1 // pred_check
      _
    $region47: #{feature_enhancement_dilated_block_apply.7} parent=1 // pred_check_branch
      %45 = sbr.rel (0) target = $region49
    $region48: #{feature_enhancement_dilated_block_apply.7} parent=1 // pred_region
      _
    $region49: #{feature_enhancement_dilated_block_apply.7} parent=1 // pred_fallthru
      _
    // Predicated region
    $region50: #{feature_enhancement_dilated_block_apply.7} parent=1 // pred_check
      _
    $region51: #{feature_enhancement_dilated_block_apply.7} parent=1 // pred_check_branch
      %47 = sbr.rel (0) target = $region53
    $region52: #{feature_enhancement_dilated_block_apply.7} parent=1 // pred_region
      _
    $region53: #{feature_enhancement_dilated_block_apply.7} parent=1 // pred_fallthru
      _
    // Predicated region
    $region54: #{feature_enhancement_dilated_block_apply.7} parent=1 // pred_check
      _
    $region55: #{feature_enhancement_dilated_block_apply.7} parent=1 // pred_check_branch
      %49 = sbr.rel (0) target = $region57
    $region56: #{feature_enhancement_dilated_block_apply.7} parent=1 // pred_region
      _
    $region57: #{feature_enhancement_dilated_block_apply.7} parent=1 // pred_fallthru
      _
    // Predicated region
    $region58: #{feature_enhancement_dilated_block_apply.7} parent=1 // pred_check
      _
    $region59: #{feature_enhancement_dilated_block_apply.7} parent=1 // pred_check_branch
      %51 = sbr.rel (0) target = $region61
    $region60: #{feature_enhancement_dilated_block_apply.7} parent=1 // pred_region
      _
    $region61: #{feature_enhancement_dilated_block_apply.7} parent=1 // pred_fallthru
      _
    // Predicated region
    $region62: #{feature_enhancement_dilated_block_apply.7} parent=1 // pred_check
      _
    $region63: #{feature_enhancement_dilated_block_apply.7} parent=1 // pred_check_branch
      %53 = sbr.rel (0) target = $region65
    $region64: #{feature_enhancement_dilated_block_apply.7} parent=1 // pred_region
      _
    $region65: #{feature_enhancement_dilated_block_apply.7} parent=1 // pred_fallthru
      _
    %vm54 = vcmask 125952
    %55 = vst.msk [vmem:[#allocation4] sm:$0xf] %vm54, 0.0
    %56 = vst.msk [vmem:[#allocation4 + $0x4] sm:$0xf] %vm54, 0.0
    %57 = vst.msk [vmem:[#allocation4 + $0x8] sm:$0xf] %vm54, 0.0
    %58 = vst.msk [vmem:[#allocation4 + $0xc] sm:$0xf] %vm54, 0.0
    %59 = vst.msk [vmem:[#allocation4 + $0x10] sm:$0xf] %vm54, 0.0
    %60 = vst.msk [vmem:[#allocation4 + $0x14] sm:$0xf] %vm54, 0.0
    %61 = vst.msk [vmem:[#allocation4 + $0x18] sm:$0xf] %vm54, 0.0
    %62 = vst.msk [vmem:[#allocation4 + $0x1c] sm:$0xf] %vm54, 0.0
    %v63 = vld [vmem:[%s0] sm:$0x3]
    %s64 = scalar_lea.vmem [#allocation4], 4
    %vm65 = vcmask 58368
    %66 = vst.msk [vmem:[%s64 + $0x1] sm:$0x3] %vm65, %v63
    %v67 = vld [vmem:[%s0 + $0x2] sm:$0x3]
    %s68 = scalar_lea.vmem [#allocation4], 8
    %69 = vst.msk [vmem:[%s68 + $0x1] sm:$0x3] %vm65, %v67
    %v70 = vld [vmem:[%s0 + $0x4] sm:$0x3]
    %s71 = scalar_lea.vmem [#allocation4], 20
    %72 = vst.msk [vmem:[%s71 + $0x1] sm:$0x3] %vm65, %v70
    %v73 = vld [vmem:[%s0 + $0x6] sm:$0x3]
    %s74 = scalar_lea.vmem [#allocation4], 24
    %75 = vst.msk [vmem:[%s74 + $0x1] sm:$0x3] %vm65, %v73
    %v76 = vld [vmem:[%s1] sm:$0x3]
    %78 = vrot.lane.b32.xlu0 %v76, 8
    %v79 = vpop.permute.xlu0 %78
    %vm81 = vcmask 123968
    %82 = vst.msk [vmem:[%s64 + $0x1] sm:$0x3] %vm81, %v79
    %s83 = scalar_lea.vmem %s1, 2
    %v84 = vld [vmem:[%s83] sm:$0x3]
    %86 = vrot.lane.b32.xlu0 %v84, 8
    %v87 = vpop.permute.xlu0 %86
    %89 = vst.msk [vmem:[%s68 + $0x1] sm:$0x3] %vm81, %v87
    %s90 = scalar_lea.vmem %s1, 4
    %v91 = vld [vmem:[%s90] sm:$0x3]
    %93 = vrot.lane.b32.xlu0 %v91, 8
    %v94 = vpop.permute.xlu0 %93
    %96 = vst.msk [vmem:[%s71 + $0x1] sm:$0x3] %vm81, %v94
    %s97 = scalar_lea.vmem %s1, 6
    %v98 = vld [vmem:[%s97] sm:$0x3]
    %100 = vrot.lane.b32.xlu0 %v98, 8
    %v101 = vpop.permute.xlu0 %100
    %103 = vst.msk [vmem:[%s74 + $0x1] sm:$0x3] %vm81, %v101
    %v104 = vld [vmem:[#allocation4] sm:$0x3]
    %vm105 = vcmask 123904
    %106 = vst.msk [vmem:[#allocation5] sm:$0x3] %vm105, %v104
    %v107 = vld [vmem:[%s64] sm:$0x3]
    %v109 = vrot.slane %v107, 6
    %vm111 = vcmask 125954
    %112 = vst.msk [vmem:[#allocation5] sm:$0xc] %vm111, %v109
    %s113 = scalar_lea.vmem [#allocation4], 16
    %v114 = vld [vmem:[%s113] sm:$0x3]
    %v116 = vrot.slane %v114, 4
    %vm118 = vcmask 128004
    %119 = vst.msk [vmem:[#allocation5] sm:$0x30] %vm118, %v116
    %v120 = vld [vmem:[%s71] sm:$0x3]
    %v122 = vrot.slane %v120, 2
    %vm124 = vcmask 130054
    %125 = vst.msk [vmem:[#allocation5] sm:$0xc0] %vm124, %v122
    %v126 = vld [vmem:[#allocation4 + $0x1] sm:$0x3]
    %128 = vrot.lane.b32.xlu0 %v126, 16
    %v129 = vpop.permute.xlu0 %128
    %vm131 = vcmask 255104
    %132 = vst.msk [vmem:[#allocation5] sm:$0x3] %vm131, %v129
    %v133 = vld [vmem:[%s64 + $0x1] sm:$0x3]
    %v135 = vrot.slane %v133, 6
    %136 = vrot.lane.b32.xlu0 %v135, 16
    %v137 = vpop.permute.xlu0 %136
    %vm139 = vcmask 257154
    %140 = vst.msk [vmem:[#allocation5] sm:$0xc] %vm139, %v137
    %v141 = vld [vmem:[%s113 + $0x1] sm:$0x3]
    %v143 = vrot.slane %v141, 4
    %144 = vrot.lane.b32.xlu0 %v143, 16
    %v145 = vpop.permute.xlu0 %144
    %vm147 = vcmask 259204
    %148 = vst.msk [vmem:[#allocation5] sm:$0x30] %vm147, %v145
    %v149 = vld [vmem:[%s71 + $0x1] sm:$0x3]
    %v151 = vrot.slane %v149, 2
    %152 = vrot.lane.b32.xlu0 %v151, 16
    %v153 = vpop.permute.xlu0 %152
    %vm155 = vcmask 261254
    %156 = vst.msk [vmem:[#allocation5] sm:$0xc0] %vm155, %v153
    %v157 = vld [vmem:[#allocation4 + $0x2] sm:$0x3]
    %159 = vrot.lane.b32.xlu0 %v157, 32
    %v160 = vpop.permute.xlu0 %159
    %vm162 = vcmask 386304
    %163 = vst.msk [vmem:[#allocation5] sm:$0x3] %vm162, %v160
    %v164 = vld [vmem:[%s64 + $0x2] sm:$0x3]
    %v166 = vrot.slane %v164, 6
    %167 = vrot.lane.b32.xlu0 %v166, 32
    %v168 = vpop.permute.xlu0 %167
    %vm170 = vcmask 388354
    %171 = vst.msk [vmem:[#allocation5] sm:$0xc] %vm170, %v168
    %v172 = vld [vmem:[%s113 + $0x2] sm:$0x3]
    %v174 = vrot.slane %v172, 4
    %175 = vrot.lane.b32.xlu0 %v174, 32
    %v176 = vpop.permute.xlu0 %175
    %vm178 = vcmask 390404
    %179 = vst.msk [vmem:[#allocation5] sm:$0x30] %vm178, %v176
    %v180 = vld [vmem:[%s71 + $0x2] sm:$0x3]
    %v182 = vrot.slane %v180, 2
    %183 = vrot.lane.b32.xlu0 %v182, 32
    %v184 = vpop.permute.xlu0 %183
    %vm186 = vcmask 392454
    %187 = vst.msk [vmem:[#allocation5] sm:$0xc0] %vm186, %v184
    %v188 = vld [vmem:[%s64] sm:$0x3]
    %190 = vrot.lane.b32.xlu0 %v188, 48
    %v191 = vpop.permute.xlu0 %190
    %vm193 = vcmask 517504
    %194 = vst.msk [vmem:[#allocation5] sm:$0x3] %vm193, %v191
    %v195 = vld [vmem:[%s68] sm:$0x3]
    %v197 = vrot.slane %v195, 6
    %198 = vrot.lane.b32.xlu0 %v197, 48
    %v199 = vpop.permute.xlu0 %198
    %vm201 = vcmask 519554
    %202 = vst.msk [vmem:[#allocation5] sm:$0xc] %vm201, %v199
    %v203 = vld [vmem:[%s71] sm:$0x3]
    %v205 = vrot.slane %v203, 4
    %206 = vrot.lane.b32.xlu0 %v205, 48
    %v207 = vpop.permute.xlu0 %206
    %vm209 = vcmask 521604
    %210 = vst.msk [vmem:[#allocation5] sm:$0x30] %vm209, %v207
    %v211 = vld [vmem:[%s74] sm:$0x3]
    %v213 = vrot.slane %v211, 2
    %214 = vrot.lane.b32.xlu0 %v213, 48
    %v215 = vpop.permute.xlu0 %214
    %vm217 = vcmask 523654
    %218 = vst.msk [vmem:[#allocation5] sm:$0xc0] %vm217, %v215
    %v219 = vld [vmem:[%s64 + $0x1] sm:$0x3]
    %221 = vrot.lane.b32.xlu0 %v219, 64
    %v222 = vpop.permute.xlu0 %221
    %vm224 = vcmask 648704
    %225 = vst.msk [vmem:[#allocation5] sm:$0x3] %vm224, %v222
    %v226 = vld [vmem:[%s68 + $0x1] sm:$0x3]
    %v228 = vrot.slane %v226, 6
    %229 = vrot.lane.b32.xlu0 %v228, 64
    %v230 = vpop.permute.xlu0 %229
    %vm232 = vcmask 650754
    %233 = vst.msk [vmem:[#allocation5] sm:$0xc] %vm232, %v230
    %v234 = vld [vmem:[%s71 + $0x1] sm:$0x3]
    %v236 = vrot.slane %v234, 4
    %237 = vrot.lane.b32.xlu0 %v236, 64
    %v238 = vpop.permute.xlu0 %237
    %vm240 = vcmask 652804
    %241 = vst.msk [vmem:[#allocation5] sm:$0x30] %vm240, %v238
    %v242 = vld [vmem:[%s74 + $0x1] sm:$0x3]
    %v244 = vrot.slane %v242, 2
    %245 = vrot.lane.b32.xlu0 %v244, 64
    %v246 = vpop.permute.xlu0 %245
    %vm248 = vcmask 654854
    %249 = vst.msk [vmem:[#allocation5] sm:$0xc0] %vm248, %v246
    %v250 = vld [vmem:[%s64 + $0x2] sm:$0x3]
    %252 = vrot.lane.b32.xlu0 %v250, 80
    %v253 = vpop.permute.xlu0 %252
    %vm255 = vcmask 779904
    %256 = vst.msk [vmem:[#allocation5] sm:$0x3] %vm255, %v253
    %v257 = vld [vmem:[%s68 + $0x2] sm:$0x3]
    %v259 = vrot.slane %v257, 6
    %260 = vrot.lane.b32.xlu0 %v259, 80
    %v261 = vpop.permute.xlu0 %260
    %vm263 = vcmask 781954
    %264 = vst.msk [vmem:[#allocation5] sm:$0xc] %vm263, %v261
    %v265 = vld [vmem:[%s71 + $0x2] sm:$0x3]
    %v267 = vrot.slane %v265, 4
    %268 = vrot.lane.b32.xlu0 %v267, 80
    %v269 = vpop.permute.xlu0 %268
    %vm271 = vcmask 784004
    %272 = vst.msk [vmem:[#allocation5] sm:$0x30] %vm271, %v269
    %v273 = vld [vmem:[%s74 + $0x2] sm:$0x3]
    %v275 = vrot.slane %v273, 2
    %276 = vrot.lane.b32.xlu0 %v275, 80
    %v277 = vpop.permute.xlu0 %276
    %vm279 = vcmask 786054
    %280 = vst.msk [vmem:[#allocation5] sm:$0xc0] %vm279, %v277
    %v281 = vld [vmem:[%s68] sm:$0x3]
    %283 = vrot.lane.b32.xlu0 %v281, 96
    %v284 = vpop.permute.xlu0 %283
    %vm286 = vcmask 911104
    %287 = vst.msk [vmem:[#allocation5] sm:$0x3] %vm286, %v284
    %s288 = scalar_lea.vmem [#allocation4], 12
    %v289 = vld [vmem:[%s288] sm:$0x3]
    %v291 = vrot.slane %v289, 6
    %292 = vrot.lane.b32.xlu0 %v291, 96
    %v293 = vpop.permute.xlu0 %292
    %vm295 = vcmask 913154
    %296 = vst.msk [vmem:[#allocation5] sm:$0xc] %vm295, %v293
    %v297 = vld [vmem:[%s74] sm:$0x3]
    %v299 = vrot.slane %v297, 4
    %300 = vrot.lane.b32.xlu0 %v299, 96
    %v301 = vpop.permute.xlu0 %300
    %vm303 = vcmask 915204
    %304 = vst.msk [vmem:[#allocation5] sm:$0x30] %vm303, %v301
    %s305 = scalar_lea.vmem [#allocation4], 28
    %v306 = vld [vmem:[%s305] sm:$0x3]
    %v308 = vrot.slane %v306, 2
    %309 = vrot.lane.b32.xlu0 %v308, 96
    %v310 = vpop.permute.xlu0 %309
    %vm312 = vcmask 917254
    %313 = vst.msk [vmem:[#allocation5] sm:$0xc0] %vm312, %v310
    %v314 = vld [vmem:[%s68 + $0x1] sm:$0x3]
    %316 = vrot.lane.b32.xlu0 %v314, 112
    %v317 = vpop.permute.xlu0 %316
    %vm319 = vcmask 1042304
    %320 = vst.msk [vmem:[#allocation5] sm:$0x3] %vm319, %v317
    %v321 = vld [vmem:[%s288 + $0x1] sm:$0x3]
    %v323 = vrot.slane %v321, 6
    %324 = vrot.lane.b32.xlu0 %v323, 112
    %v325 = vpop.permute.xlu0 %324
    %vm327 = vcmask 1044354
    %328 = vst.msk [vmem:[#allocation5] sm:$0xc] %vm327, %v325
    %v329 = vld [vmem:[%s74 + $0x1] sm:$0x3]
    %v331 = vrot.slane %v329, 4
    %332 = vrot.lane.b32.xlu0 %v331, 112
    %v333 = vpop.permute.xlu0 %332
    %vm335 = vcmask 1046404
    %336 = vst.msk [vmem:[#allocation5] sm:$0x30] %vm335, %v333
    %v337 = vld [vmem:[%s305 + $0x1] sm:$0x3]
    %v339 = vrot.slane %v337, 2
    %340 = vrot.lane.b32.xlu0 %v339, 112
    %v341 = vpop.permute.xlu0 %340
    %vm343 = vcmask 1048454
    %344 = vst.msk [vmem:[#allocation5] sm:$0xc0] %vm343, %v341
    %v345 = vld [vmem:[%s68 + $0x2] sm:$0x3]
    %346 = vst.msk [vmem:[#allocation5 + $0x8] sm:$0x3] %vm105, %v345
    %v347 = vld [vmem:[%s288 + $0x2] sm:$0x3]
    %v349 = vrot.slane %v347, 6
    %351 = vst.msk [vmem:[#allocation5 + $0x8] sm:$0xc] %vm111, %v349
    %v352 = vld [vmem:[%s74 + $0x2] sm:$0x3]
    %v354 = vrot.slane %v352, 4
    %356 = vst.msk [vmem:[#allocation5 + $0x8] sm:$0x30] %vm118, %v354
    %v357 = vld [vmem:[%s305 + $0x2] sm:$0x3]
    %v359 = vrot.slane %v357, 2
    %361 = vst.msk [vmem:[#allocation5 + $0x8] sm:$0xc0] %vm124, %v359
    %v362 = vld [vmem:[#allocation5] sm:$0xff]
    %v363 = vld [vmem:[#allocation5 + $0x8] sm:$0xff]
    %v364 = vld [vmem:[%s2] sm:$0xff]
    %v365 = vld [vmem:[%s2 + $0x8] sm:$0xff]
    %v366 = vld [vmem:[%s2 + $0x10] sm:$0xff]
    %v367 = vld [vmem:[%s2 + $0x18] sm:$0xff]
    %v368 = vld [vmem:[%s2 + $0x20] sm:$0xff]
    %v369 = vld [vmem:[%s2 + $0x28] sm:$0xff]
    %v370 = vld [vmem:[%s2 + $0x30] sm:$0xff]
    %v371 = vld [vmem:[%s2 + $0x38] sm:$0xff]
    %v372 = vld [vmem:[%s2 + $0x40] sm:$0xff]
    %v373 = vld [vmem:[%s2 + $0x48] sm:$0xff]
    %v374 = vld [vmem:[%s2 + $0x50] sm:$0xff]
    %v375 = vld [vmem:[%s2 + $0x58] sm:$0xff]
    %v376 = vld [vmem:[%s2 + $0x60] sm:$0xff]
    %v377 = vld [vmem:[%s2 + $0x68] sm:$0xff]
    %v378 = vld [vmem:[%s2 + $0x70] sm:$0xff]
    %v379 = vld [vmem:[%s2 + $0x78] sm:$0xff]
    %v380 = vld [vmem:[%s2 + $0x80] sm:$0xff]
    %v381 = vld [vmem:[%s2 + $0x88] sm:$0xff]
    %v382 = vld [vmem:[%s3] sm:$0x1]
    %v384 = vperm.slane %v382, 0
    %vm386 = vcmask 130048
    %v388 = vsel %vm386, %v363, 0
    %390 = vmatpush.msra.mxu0 %v379
    %391 = vmatpush.msra.mxu0 %v378
    %392 = vmatpush.msra.mxu0 %v377
    %393 = vmatpush.msra.mxu0 %v376
    %394 = vmatpush.msra.mxu0 %v375
    %395 = vmatpush.msra.mxu0 %v374
    %396 = vmatpush.msra.mxu0 %v373
    %397 = vmatpush.msra.mxu0 %v372
    %398 = vmatpush.msra.mxu0 %v371
    %399 = vmatpush.msra.mxu0 %v370
    %400 = vmatpush.msra.mxu0 %v369
    %401 = vmatpush.msra.mxu0 %v368
    %402 = vmatpush.msra.mxu0 %v367
    %403 = vmatpush.msra.mxu0 %v366
    %404 = vmatpush.msra.mxu0 %v365
    %405 = vmatpush.msra.mxu0 %v364
    %406 = vmatmul.f32.gmra.mxu0 %v362
    %v407 = vpop.f32.mrf.mxu0
    %v408 = vadd.f32 %v384, %v407
    %409 = vdwg.mxu0
    %410 = vmatpush.msra.mxu0 0.0
    %411 = vmatpush.msra.mxu0 0.0
    %412 = vmatpush.msra.mxu0 0.0
    %413 = vmatpush.msra.mxu0 0.0
    %414 = vmatpush.msra.mxu0 0.0
    %415 = vmatpush.msra.mxu0 0.0
    %416 = vmatpush.msra.mxu0 0.0
    %417 = vmatpush.msra.mxu0 0.0
    %418 = vmatpush.msra.mxu0 0.0
    %419 = vmatpush.msra.mxu0 0.0
    %420 = vmatpush.msra.mxu0 0.0
    %421 = vmatpush.msra.mxu0 0.0
    %422 = vmatpush.msra.mxu0 0.0
    %423 = vmatpush.msra.mxu0 0.0
    %424 = vmatpush.msra.mxu0 %v381
    %425 = vmatpush.msra.mxu0 %v380
    %426 = vmatmul.f32.gmra.mxu0 %v388
    %v427 = vpop.f32.mrf.mxu0
    %v428 = vadd.f32 %v408, %v427
    %429 = vdwg.mxu0
    %v430 = vmax.f32 %v428, 0.0
    %vm431 = vcmask 64512
    %432 = vst.msk [vmem:[#allocation2] sm:$0xff] %vm431, %v430
    %v433 = vld [vmem:[%s4] sm:$0xff]
    %v434 = vld [vmem:[%s5] sm:$0x1]
    %v436 = vperm.slane %v434, 0
    %v439 = vsel %vm431, %v430, 0
    %441 = vmatpush.msra.mxu0 0.0
    %442 = vmatpush.msra.mxu0 0.0
    %443 = vmatpush.msra.mxu0 0.0
    %444 = vmatpush.msra.mxu0 0.0
    %445 = vmatpush.msra.mxu0 0.0
    %446 = vmatpush.msra.mxu0 0.0
    %447 = vmatpush.msra.mxu0 0.0
    %448 = vmatpush.msra.mxu0 0.0
    %449 = vmatpush.msra.mxu0 0.0
    %450 = vmatpush.msra.mxu0 0.0
    %451 = vmatpush.msra.mxu0 0.0
    %452 = vmatpush.msra.mxu0 0.0
    %453 = vmatpush.msra.mxu0 0.0
    %454 = vmatpush.msra.mxu0 0.0
    %455 = vmatpush.msra.mxu0 0.0
    %456 = vmatpush.msra.mxu0 %v433
    %457 = vmatmul.f32.gmra.mxu0 %v439
    %v458 = vpop.f32.mrf.mxu0
    %v459 = vadd.f32 %v436, %v458
    %460 = vdwg.mxu0
    %v461 = vmax.f32 %v459, 0.0
    %462 = vst.msk [vmem:[#allocation3] sm:$0xff] %vm431, %v461
    %v463 = vld [vmem:[%s6] sm:$0xff]
    %v464 = vld [vmem:[%s7] sm:$0x1]
    %v466 = vperm.slane %v464, 0
    %468 = vmatpush.msra.mxu0 0.0
    %469 = vmatpush.msra.mxu0 0.0
    %470 = vmatpush.msra.mxu0 0.0
    %471 = vmatpush.msra.mxu0 0.0
    %472 = vmatpush.msra.mxu0 0.0
    %473 = vmatpush.msra.mxu0 0.0
    %474 = vmatpush.msra.mxu0 0.0
    %475 = vmatpush.msra.mxu0 0.0
    %476 = vmatpush.msra.mxu0 0.0
    %477 = vmatpush.msra.mxu0 0.0
    %478 = vmatpush.msra.mxu0 0.0
    %479 = vmatpush.msra.mxu0 0.0
    %480 = vmatpush.msra.mxu0 0.0
    %481 = vmatpush.msra.mxu0 0.0
    %482 = vmatpush.msra.mxu0 0.0
    %483 = vmatpush.msra.mxu0 %v463
    %484 = vmatmul.f32.gmra.mxu0 %v439
    %v485 = vpop.f32.mrf.mxu0
    %v486 = vadd.f32 %v466, %v485
    %487 = vdwg.mxu0
    %v488 = vmax.f32 %v486, 0.0
    %490 = vrot.lane.b32.xlu0 %v488, 8
    %v491 = vpop.permute.xlu0 %490
    %vm493 = vcmask 130112
    %494 = vst.msk [vmem:[#allocation3] sm:$0xff] %vm493, %v491
    %v495 = vld [vmem:[%s8] sm:$0xff]
    %v496 = vld [vmem:[%s9] sm:$0x1]
    %v498 = vperm.slane %v496, 0
    %500 = vmatpush.msra.mxu0 0.0
    %501 = vmatpush.msra.mxu0 0.0
    %502 = vmatpush.msra.mxu0 0.0
    %503 = vmatpush.msra.mxu0 0.0
    %504 = vmatpush.msra.mxu0 0.0
    %505 = vmatpush.msra.mxu0 0.0
    %506 = vmatpush.msra.mxu0 0.0
    %507 = vmatpush.msra.mxu0 0.0
    %508 = vmatpush.msra.mxu0 0.0
    %509 = vmatpush.msra.mxu0 0.0
    %510 = vmatpush.msra.mxu0 0.0
    %511 = vmatpush.msra.mxu0 0.0
    %512 = vmatpush.msra.mxu0 0.0
    %513 = vmatpush.msra.mxu0 0.0
    %514 = vmatpush.msra.mxu0 0.0
    %515 = vmatpush.msra.mxu0 %v495
    %516 = vmatmul.f32.gmra.mxu0 %v439
    %v517 = vpop.f32.mrf.mxu0
    %v518 = vadd.f32 %v498, %v517
    %519 = vdwg.mxu0
    %v520 = vmax.f32 %v518, 0.0
    %522 = vrot.lane.b32.xlu0 %v520, 16
    %v523 = vpop.permute.xlu0 %522
    %vm525 = vcmask 195712
    %526 = vst.msk [vmem:[#allocation3] sm:$0xff] %vm525, %v523
    %v527 = vld [vmem:[%s10] sm:$0xff]
    %v528 = vld [vmem:[%s11] sm:$0x1]
    %v530 = vperm.slane %v528, 0
    %532 = vmatpush.msra.mxu0 0.0
    %533 = vmatpush.msra.mxu0 0.0
    %534 = vmatpush.msra.mxu0 0.0
    %535 = vmatpush.msra.mxu0 0.0
    %536 = vmatpush.msra.mxu0 0.0
    %537 = vmatpush.msra.mxu0 0.0
    %538 = vmatpush.msra.mxu0 0.0
    %539 = vmatpush.msra.mxu0 0.0
    %540 = vmatpush.msra.mxu0 0.0
    %541 = vmatpush.msra.mxu0 0.0
    %542 = vmatpush.msra.mxu0 0.0
    %543 = vmatpush.msra.mxu0 0.0
    %544 = vmatpush.msra.mxu0 0.0
    %545 = vmatpush.msra.mxu0 0.0
    %546 = vmatpush.msra.mxu0 0.0
    %547 = vmatpush.msra.mxu0 %v527
    %548 = vmatmul.f32.gmra.mxu0 %v439
    %v549 = vpop.f32.mrf.mxu0
    %v550 = vadd.f32 %v530, %v549
    %551 = vdwg.mxu0
    %v552 = vmax.f32 %v550, 0.0
    %554 = vrot.lane.b32.xlu0 %v552, 24
    %v555 = vpop.permute.xlu0 %554
    %vm557 = vcmask 261312
    %558 = vst.msk [vmem:[#allocation3] sm:$0xff] %vm557, %v555
    %vm559 = vcmask 257024
    %560 = vst.msk [vmem:[#allocation6] sm:$0xf] %vm559, 0.0
    %561 = vst.msk [vmem:[#allocation6 + $0x4] sm:$0xf] %vm559, 0.0
    %562 = vst.msk [vmem:[#allocation6 + $0x8] sm:$0xf] %vm559, 0.0
    %563 = vst.msk [vmem:[#allocation6 + $0xc] sm:$0xf] %vm559, 0.0
    %564 = vst.msk [vmem:[#allocation6 + $0x10] sm:$0xf] %vm559, 0.0
    %565 = vst.msk [vmem:[#allocation6 + $0x14] sm:$0xf] %vm559, 0.0
    %566 = vst.msk [vmem:[#allocation6 + $0x18] sm:$0xf] %vm559, 0.0
    %567 = vst.msk [vmem:[#allocation6 + $0x1c] sm:$0xf] %vm559, 0.0
    %v568 = vld [vmem:[#allocation3] sm:$0x3]
    %s569 = scalar_lea.vmem [#allocation6], 4
    %vm570 = vcmask 254976
    %571 = vst.msk [vmem:[%s569 + $0x1] sm:$0x3] %vm570, %v568
    %v572 = vld [vmem:[#allocation3 + $0x2] sm:$0x3]
    %s573 = scalar_lea.vmem [#allocation6], 8
    %574 = vst.msk [vmem:[%s573 + $0x1] sm:$0x3] %vm570, %v572
    %v575 = vld [vmem:[#allocation3 + $0x4] sm:$0x3]
    %s576 = scalar_lea.vmem [#allocation6], 20
    %577 = vst.msk [vmem:[%s576 + $0x1] sm:$0x3] %vm570, %v575
    %v578 = vld [vmem:[#allocation3 + $0x6] sm:$0x3]
    %s579 = scalar_lea.vmem [#allocation6], 24
    %580 = vst.msk [vmem:[%s579 + $0x1] sm:$0x3] %vm570, %v578
    %v581 = vld [vmem:[#allocation6] sm:$0x3]
    %582 = vst.msk [vmem:[#allocation7] sm:$0x3] %vm570, %v581
    %v583 = vld [vmem:[%s569] sm:$0x3]
    %v585 = vrot.slane %v583, 6
    %vm587 = vcmask 257026
    %588 = vst.msk [vmem:[#allocation7] sm:$0xc] %vm587, %v585
    %s589 = scalar_lea.vmem [#allocation6], 16
    %v590 = vld [vmem:[%s589] sm:$0x3]
    %v592 = vrot.slane %v590, 4
    %vm594 = vcmask 259076
    %595 = vst.msk [vmem:[#allocation7] sm:$0x30] %vm594, %v592
    %v596 = vld [vmem:[%s576] sm:$0x3]
    %v598 = vrot.slane %v596, 2
    %vm600 = vcmask 261126
    %601 = vst.msk [vmem:[#allocation7] sm:$0xc0] %vm600, %v598
    %v602 = vld [vmem:[#allocation6 + $0x1] sm:$0x3]
    %604 = vrot.lane.b32.xlu0 %v602, 32
    %v605 = vpop.permute.xlu0 %604
    %vm607 = vcmask 517376
    %608 = vst.msk [vmem:[#allocation7] sm:$0x3] %vm607, %v605
    %v609 = vld [vmem:[%s569 + $0x1] sm:$0x3]
    %v611 = vrot.slane %v609, 6
    %612 = vrot.lane.b32.xlu0 %v611, 32
    %v613 = vpop.permute.xlu0 %612
    %vm615 = vcmask 519426
    %616 = vst.msk [vmem:[#allocation7] sm:$0xc] %vm615, %v613
    %v617 = vld [vmem:[%s589 + $0x1] sm:$0x3]
    %v619 = vrot.slane %v617, 4
    %620 = vrot.lane.b32.xlu0 %v619, 32
    %v621 = vpop.permute.xlu0 %620
    %vm623 = vcmask 521476
    %624 = vst.msk [vmem:[#allocation7] sm:$0x30] %vm623, %v621
    %v625 = vld [vmem:[%s576 + $0x1] sm:$0x3]
    %v627 = vrot.slane %v625, 2
    %628 = vrot.lane.b32.xlu0 %v627, 32
    %v629 = vpop.permute.xlu0 %628
    %vm631 = vcmask 523526
    %632 = vst.msk [vmem:[#allocation7] sm:$0xc0] %vm631, %v629
    %v633 = vld [vmem:[#allocation6 + $0x2] sm:$0x3]
    %635 = vrot.lane.b32.xlu0 %v633, 64
    %v636 = vpop.permute.xlu0 %635
    %vm638 = vcmask 779776
    %639 = vst.msk [vmem:[#allocation7] sm:$0x3] %vm638, %v636
    %v640 = vld [vmem:[%s569 + $0x2] sm:$0x3]
    %v642 = vrot.slane %v640, 6
    %643 = vrot.lane.b32.xlu0 %v642, 64
    %v644 = vpop.permute.xlu0 %643
    %vm646 = vcmask 781826
    %647 = vst.msk [vmem:[#allocation7] sm:$0xc] %vm646, %v644
    %v648 = vld [vmem:[%s589 + $0x2] sm:$0x3]
    %v650 = vrot.slane %v648, 4
    %651 = vrot.lane.b32.xlu0 %v650, 64
    %v652 = vpop.permute.xlu0 %651
    %vm654 = vcmask 783876
    %655 = vst.msk [vmem:[#allocation7] sm:$0x30] %vm654, %v652
    %v656 = vld [vmem:[%s576 + $0x2] sm:$0x3]
    %v658 = vrot.slane %v656, 2
    %659 = vrot.lane.b32.xlu0 %v658, 64
    %v660 = vpop.permute.xlu0 %659
    %vm662 = vcmask 785926
    %663 = vst.msk [vmem:[#allocation7] sm:$0xc0] %vm662, %v660
    %v664 = vld [vmem:[%s569] sm:$0x3]
    %666 = vrot.lane.b32.xlu0 %v664, 96
    %v667 = vpop.permute.xlu0 %666
    %vm669 = vcmask 1042176
    %670 = vst.msk [vmem:[#allocation7] sm:$0x3] %vm669, %v667
    %v671 = vld [vmem:[%s573] sm:$0x3]
    %v673 = vrot.slane %v671, 6
    %674 = vrot.lane.b32.xlu0 %v673, 96
    %v675 = vpop.permute.xlu0 %674
    %vm677 = vcmask 1044226
    %678 = vst.msk [vmem:[#allocation7] sm:$0xc] %vm677, %v675
    %v679 = vld [vmem:[%s576] sm:$0x3]
    %v681 = vrot.slane %v679, 4
    %682 = vrot.lane.b32.xlu0 %v681, 96
    %v683 = vpop.permute.xlu0 %682
    %vm685 = vcmask 1046276
    %686 = vst.msk [vmem:[#allocation7] sm:$0x30] %vm685, %v683
    %v687 = vld [vmem:[%s579] sm:$0x3]
    %v689 = vrot.slane %v687, 2
    %690 = vrot.lane.b32.xlu0 %v689, 96
    %v691 = vpop.permute.xlu0 %690
    %vm693 = vcmask 1048326
    %694 = vst.msk [vmem:[#allocation7] sm:$0xc0] %vm693, %v691
    %v695 = vld [vmem:[%s569 + $0x1] sm:$0x3]
    %696 = vst.msk [vmem:[#allocation7 + $0x8] sm:$0x3] %vm570, %v695
    %v697 = vld [vmem:[%s573 + $0x1] sm:$0x3]
    %v699 = vrot.slane %v697, 6
    %701 = vst.msk [vmem:[#allocation7 + $0x8] sm:$0xc] %vm587, %v699
    %v702 = vld [vmem:[%s576 + $0x1] sm:$0x3]
    %v704 = vrot.slane %v702, 4
    %706 = vst.msk [vmem:[#allocation7 + $0x8] sm:$0x30] %vm594, %v704
    %v707 = vld [vmem:[%s579 + $0x1] sm:$0x3]
    %v709 = vrot.slane %v707, 2
    %711 = vst.msk [vmem:[#allocation7 + $0x8] sm:$0xc0] %vm600, %v709
    %v712 = vld [vmem:[%s569 + $0x2] sm:$0x3]
    %714 = vrot.lane.b32.xlu0 %v712, 32
    %v715 = vpop.permute.xlu0 %714
    %717 = vst.msk [vmem:[#allocation7 + $0x8] sm:$0x3] %vm607, %v715
    %v718 = vld [vmem:[%s573 + $0x2] sm:$0x3]
    %v720 = vrot.slane %v718, 6
    %721 = vrot.lane.b32.xlu0 %v720, 32
    %v722 = vpop.permute.xlu0 %721
    %724 = vst.msk [vmem:[#allocation7 + $0x8] sm:$0xc] %vm615, %v722
    %v725 = vld [vmem:[%s576 + $0x2] sm:$0x3]
    %v727 = vrot.slane %v725, 4
    %728 = vrot.lane.b32.xlu0 %v727, 32
    %v729 = vpop.permute.xlu0 %728
    %731 = vst.msk [vmem:[#allocation7 + $0x8] sm:$0x30] %vm623, %v729
    %v732 = vld [vmem:[%s579 + $0x2] sm:$0x3]
    %v734 = vrot.slane %v732, 2
    %735 = vrot.lane.b32.xlu0 %v734, 32
    %v736 = vpop.permute.xlu0 %735
    %738 = vst.msk [vmem:[#allocation7 + $0x8] sm:$0xc0] %vm631, %v736
    %v739 = vld [vmem:[%s573] sm:$0x3]
    %741 = vrot.lane.b32.xlu0 %v739, 64
    %v742 = vpop.permute.xlu0 %741
    %744 = vst.msk [vmem:[#allocation7 + $0x8] sm:$0x3] %vm638, %v742
    %s745 = scalar_lea.vmem [#allocation6], 12
    %v746 = vld [vmem:[%s745] sm:$0x3]
    %v748 = vrot.slane %v746, 6
    %749 = vrot.lane.b32.xlu0 %v748, 64
    %v750 = vpop.permute.xlu0 %749
    %752 = vst.msk [vmem:[#allocation7 + $0x8] sm:$0xc] %vm646, %v750
    %v753 = vld [vmem:[%s579] sm:$0x3]
    %v755 = vrot.slane %v753, 4
    %756 = vrot.lane.b32.xlu0 %v755, 64
    %v757 = vpop.permute.xlu0 %756
    %759 = vst.msk [vmem:[#allocation7 + $0x8] sm:$0x30] %vm654, %v757
    %s760 = scalar_lea.vmem [#allocation6], 28
    %v761 = vld [vmem:[%s760] sm:$0x3]
    %v763 = vrot.slane %v761, 2
    %764 = vrot.lane.b32.xlu0 %v763, 64
    %v765 = vpop.permute.xlu0 %764
    %767 = vst.msk [vmem:[#allocation7 + $0x8] sm:$0xc0] %vm662, %v765
    %v768 = vld [vmem:[%s573 + $0x1] sm:$0x3]
    %770 = vrot.lane.b32.xlu0 %v768, 96
    %v771 = vpop.permute.xlu0 %770
    %773 = vst.msk [vmem:[#allocation7 + $0x8] sm:$0x3] %vm669, %v771
    %v774 = vld [vmem:[%s745 + $0x1] sm:$0x3]
    %v776 = vrot.slane %v774, 6
    %777 = vrot.lane.b32.xlu0 %v776, 96
    %v778 = vpop.permute.xlu0 %777
    %780 = vst.msk [vmem:[#allocation7 + $0x8] sm:$0xc] %vm677, %v778
    %v781 = vld [vmem:[%s579 + $0x1] sm:$0x3]
    %v783 = vrot.slane %v781, 4
    %784 = vrot.lane.b32.xlu0 %v783, 96
    %v785 = vpop.permute.xlu0 %784
    %787 = vst.msk [vmem:[#allocation7 + $0x8] sm:$0x30] %vm685, %v785
    %v788 = vld [vmem:[%s760 + $0x1] sm:$0x3]
    %v790 = vrot.slane %v788, 2
    %791 = vrot.lane.b32.xlu0 %v790, 96
    %v792 = vpop.permute.xlu0 %791
    %794 = vst.msk [vmem:[#allocation7 + $0x8] sm:$0xc0] %vm693, %v792
    %v795 = vld [vmem:[%s573 + $0x2] sm:$0x3]
    %796 = vst.msk [vmem:[#allocation7 + $0x10] sm:$0x3] %vm570, %v795
    %v797 = vld [vmem:[%s745 + $0x2] sm:$0x3]
    %v799 = vrot.slane %v797, 6
    %801 = vst.msk [vmem:[#allocation7 + $0x10] sm:$0xc] %vm587, %v799
    %v802 = vld [vmem:[%s579 + $0x2] sm:$0x3]
    %v804 = vrot.slane %v802, 4
    %806 = vst.msk [vmem:[#allocation7 + $0x10] sm:$0x30] %vm594, %v804
    %v807 = vld [vmem:[%s760 + $0x2] sm:$0x3]
    %v809 = vrot.slane %v807, 2
    %811 = vst.msk [vmem:[#allocation7 + $0x10] sm:$0xc0] %vm600, %v809
    %v812 = vld [vmem:[#allocation7] sm:$0xff]
    %v813 = vld [vmem:[#allocation7 + $0x8] sm:$0xff]
    %v814 = vld [vmem:[#allocation7 + $0x10] sm:$0xff]
    %v815 = vld [vmem:[%s12] sm:$0xff]
    %v816 = vld [vmem:[%s12 + $0x8] sm:$0xff]
    %v817 = vld [vmem:[%s12 + $0x10] sm:$0xff]
    %v818 = vld [vmem:[%s12 + $0x18] sm:$0xff]
    %v819 = vld [vmem:[%s12 + $0x20] sm:$0xff]
    %v820 = vld [vmem:[%s12 + $0x28] sm:$0xff]
    %v821 = vld [vmem:[%s12 + $0x30] sm:$0xff]
    %v822 = vld [vmem:[%s12 + $0x38] sm:$0xff]
    %v823 = vld [vmem:[%s12 + $0x40] sm:$0xff]
    %v824 = vld [vmem:[%s12 + $0x48] sm:$0xff]
    %v825 = vld [vmem:[%s12 + $0x50] sm:$0xff]
    %v826 = vld [vmem:[%s12 + $0x58] sm:$0xff]
    %v827 = vld [vmem:[%s12 + $0x60] sm:$0xff]
    %v828 = vld [vmem:[%s12 + $0x68] sm:$0xff]
    %v829 = vld [vmem:[%s12 + $0x70] sm:$0xff]
    %v830 = vld [vmem:[%s12 + $0x78] sm:$0xff]
    %v831 = vld [vmem:[%s12 + $0x80] sm:$0xff]
    %v832 = vld [vmem:[%s12 + $0x88] sm:$0xff]
    %v833 = vld [vmem:[%s12 + $0x90] sm:$0xff]
    %v834 = vld [vmem:[%s12 + $0x98] sm:$0xff]
    %v835 = vld [vmem:[%s12 + $0xa0] sm:$0xff]
    %v836 = vld [vmem:[%s12 + $0xa8] sm:$0xff]
    %v837 = vld [vmem:[%s12 + $0xb0] sm:$0xff]
    %v838 = vld [vmem:[%s12 + $0xb8] sm:$0xff]
    %v839 = vld [vmem:[%s12 + $0xc0] sm:$0xff]
    %v840 = vld [vmem:[%s12 + $0xc8] sm:$0xff]
    %v841 = vld [vmem:[%s12 + $0xd0] sm:$0xff]
    %v842 = vld [vmem:[%s12 + $0xd8] sm:$0xff]
    %v843 = vld [vmem:[%s12 + $0xe0] sm:$0xff]
    %v844 = vld [vmem:[%s12 + $0xe8] sm:$0xff]
    %v845 = vld [vmem:[%s12 + $0xf0] sm:$0xff]
    %v846 = vld [vmem:[%s12 + $0xf8] sm:$0xff]
    %v847 = vld [vmem:[%s12 + $0x100] sm:$0xff]
    %v848 = vld [vmem:[%s12 + $0x108] sm:$0xff]
    %v849 = vld [vmem:[%s12 + $0x110] sm:$0xff]
    %v850 = vld [vmem:[%s12 + $0x118] sm:$0xff]
    %v851 = vld [vmem:[%s13] sm:$0x1]
    %v853 = vperm.slane %v851, 0
    %vm855 = vcmask 261120
    %v857 = vsel %vm855, %v814, 0
    %859 = vmatpush.msra.mxu0 %v830
    %860 = vmatpush.msra.mxu0 %v829
    %861 = vmatpush.msra.mxu0 %v828
    %862 = vmatpush.msra.mxu0 %v827
    %863 = vmatpush.msra.mxu0 %v826
    %864 = vmatpush.msra.mxu0 %v825
    %865 = vmatpush.msra.mxu0 %v824
    %866 = vmatpush.msra.mxu0 %v823
    %867 = vmatpush.msra.mxu0 %v822
    %868 = vmatpush.msra.mxu0 %v821
    %869 = vmatpush.msra.mxu0 %v820
    %870 = vmatpush.msra.mxu0 %v819
    %871 = vmatpush.msra.mxu0 %v818
    %872 = vmatpush.msra.mxu0 %v817
    %873 = vmatpush.msra.mxu0 %v816
    %874 = vmatpush.msra.mxu0 %v815
    %875 = vmatmul.f32.gmra.mxu0 %v812
    %v876 = vpop.f32.mrf.mxu0
    %v877 = vadd.f32 %v853, %v876
    %878 = vdwg.mxu0
    %879 = vmatpush.msra.mxu0 %v846
    %880 = vmatpush.msra.mxu0 %v845
    %881 = vmatpush.msra.mxu0 %v844
    %882 = vmatpush.msra.mxu0 %v843
    %883 = vmatpush.msra.mxu0 %v842
    %884 = vmatpush.msra.mxu0 %v841
    %885 = vmatpush.msra.mxu0 %v840
    %886 = vmatpush.msra.mxu0 %v839
    %887 = vmatpush.msra.mxu0 %v838
    %888 = vmatpush.msra.mxu0 %v837
    %889 = vmatpush.msra.mxu0 %v836
    %890 = vmatpush.msra.mxu0 %v835
    %891 = vmatpush.msra.mxu0 %v834
    %892 = vmatpush.msra.mxu0 %v833
    %893 = vmatpush.msra.mxu0 %v832
    %894 = vmatpush.msra.mxu0 %v831
    %895 = vmatmul.f32.gmra.mxu0 %v813
    %v896 = vpop.f32.mrf.mxu0
    %v897 = vadd.f32 %v877, %v896
    %898 = vdwg.mxu0
    %899 = vmatpush.msra.mxu0 0.0
    %900 = vmatpush.msra.mxu0 0.0
    %901 = vmatpush.msra.mxu0 0.0
    %902 = vmatpush.msra.mxu0 0.0
    %903 = vmatpush.msra.mxu0 0.0
    %904 = vmatpush.msra.mxu0 0.0
    %905 = vmatpush.msra.mxu0 0.0
    %906 = vmatpush.msra.mxu0 0.0
    %907 = vmatpush.msra.mxu0 0.0
    %908 = vmatpush.msra.mxu0 0.0
    %909 = vmatpush.msra.mxu0 0.0
    %910 = vmatpush.msra.mxu0 0.0
    %911 = vmatpush.msra.mxu0 %v850
    %912 = vmatpush.msra.mxu0 %v849
    %913 = vmatpush.msra.mxu0 %v848
    %914 = vmatpush.msra.mxu0 %v847
    %915 = vmatmul.f32.gmra.mxu0 %v857
    %v916 = vpop.f32.mrf.mxu0
    %v917 = vadd.f32 %v897, %v916
    %918 = vdwg.mxu0
    %v919 = vld [vmem:[%s14] sm:$0xff]
    %v920 = vld [vmem:[%s15] sm:$0x1]
    %v922 = vperm.slane %v920, 0
    %924 = vmatpush.msra.mxu0 0.0
    %925 = vmatpush.msra.mxu0 0.0
    %926 = vmatpush.msra.mxu0 0.0
    %927 = vmatpush.msra.mxu0 0.0
    %928 = vmatpush.msra.mxu0 0.0
    %929 = vmatpush.msra.mxu0 0.0
    %930 = vmatpush.msra.mxu0 0.0
    %931 = vmatpush.msra.mxu0 0.0
    %932 = vmatpush.msra.mxu0 0.0
    %933 = vmatpush.msra.mxu0 0.0
    %934 = vmatpush.msra.mxu0 0.0
    %935 = vmatpush.msra.mxu0 0.0
    %936 = vmatpush.msra.mxu0 0.0
    %937 = vmatpush.msra.mxu0 0.0
    %938 = vmatpush.msra.mxu0 0.0
    %939 = vmatpush.msra.mxu0 %v919
    %940 = vmatmul.f32.gmra.mxu0 %v439
    %v941 = vpop.f32.mrf.mxu0
    %v942 = vadd.f32 %v922, %v941
    %943 = vdwg.mxu0
    %v944 = vadd.f32 %v917, %v942
    %v945 = vmax.f32 %v944, 0.0
    %946 = vst.msk [vmem:[#allocation8] sm:$0xff] %vm431, %v945
    // Predicated region
    $region66: #{feature_enhancement_dilated_block_apply.7} parent=1 // pred_check
      _
    $region67: #{feature_enhancement_dilated_block_apply.7} parent=1 // pred_check_branch
      %948 = sbr.rel (0) target = $region69
    $region68: #{feature_enhancement_dilated_block_apply.7} parent=1 // pred_region
      %950 = vsyncadd [#allocation9], 0
      %s952 = sshll.u32 [#allocation8], 4
      %s953 = int_to_ptr.vmem [resolvable:$true] %s952
      %s954 = sshll.u32 %s16, 4
      %s955 = int_to_ptr.hbm [resolvable:$true] %s954
      %957 = dma.vmem_to_hbm [thread:$0]  %s953, 128, %s955, [#allocation9]
    $region69: #{feature_enhancement_dilated_block_apply.7} parent=1 // pred_fallthru
      _
    // Predicated region
    $region70: #{feature_enhancement_dilated_block_apply.7} parent=1 // pred_check
      _
    $region71: #{feature_enhancement_dilated_block_apply.7} parent=1 // pred_check_branch
      %959 = sbr.rel (0) target = $region73
    $region72: #{feature_enhancement_dilated_block_apply.7} parent=1 // pred_region
      %961 = dma.done [#allocation9], 128
    $region73: #{feature_enhancement_dilated_block_apply.7} parent=1 // pred_fallthru
      _
    %962 = vsyncpa [#allocation9], 1

</llo_original>
